<compile_context>
chip_gen: v5e
topology: v5e:2x2
jax: 0.10.0
libtpu: 0.0.40
codegen_flags: <defaults>
</compile_context>

<pallas_src>
import functools

import jax
import jax.numpy as jnp
import numpy as np
from jax.experimental import pallas as pl
from jax.experimental.pallas import tpu as pltpu

EPS = 1e-12      # matches torch.nn.functional.normalize default eps
LANE = 128
SUBLANE = 8


def routing_kernel(x_ref, z_ref, o_ref, *, max_iter, k, m, dd, sub, n_sub):
    """One tile of nodes; node axis lives on (sublane, lane).

    x_ref : (dd, k, ts, 128)     pre-normalized node features
    z_ref : (m, dd, k, ts, 128)  pre-normalized gathered neighbor features
                                 (zero rows for "missing" neighbors)
    o_ref : (dd, k, ts, 128)     routed output capsules
    """
    f32 = jnp.float32

    def l2n(chans):
        # chans: list of dd arrays, each (k, sub, 128).
        # v * rsqrt(max(ssq, eps^2)) == v / max(||v||, eps) up to rounding.
        ssq = chans[0] * chans[0]
        for e in range(1, dd):
            ssq = ssq + chans[e] * chans[e]
        inv = jax.lax.rsqrt(jnp.maximum(ssq, f32(EPS * EPS)))
        return [c * inv for c in chans]

    # Static unroll over 1024-node sub-chunks keeps per-chunk vreg live ranges
    # bounded (u/acc/p fit in the 64-vreg file for small k*dd).
    # TODO(synk): switch the m / max_iter / sub-chunk loops to lax.fori_loop
    # with small unroll if m or max_iter grow well beyond 4/3.
    for s in range(n_sub):
        sl = pl.ds(s * sub, sub)

        def xload(e):
            return x_ref[e, :, sl, :].astype(f32)          # (k, sub, 128)

        def zload(j, e):
            return z_ref[j, e, :, sl, :].astype(f32)       # (k, sub, 128)

        # --- routing iteration 0: softmax(0) over k is uniform 1/k ----------
        u = []
        for e in range(dd):
            acc = zload(0, e)
            for j in range(1, m):
                acc = acc + zload(j, e)
            u.append(acc * f32(1.0 / k) + xload(e))
        if max_iter > 1:
            u = l2n(u)

        # --- routing iterations 1 .. max_iter-1 ------------------------------
        for it in range(1, max_iter):
            # Pass 1: agreements + stable softmax over the capsule axis k,
            # streaming z in delta_d chunks against the register-resident u.
            ps = []
            for j in range(m):
                pj = zload(j, 0) * u[0]
                for e in range(1, dd):
                    pj = pj + zload(j, e) * u[e]           # (k, sub, 128)
                pj = pj - jnp.max(pj, axis=0, keepdims=True)
                ej = jnp.exp(pj)
                ps.append(ej * pl.reciprocal(
                    jnp.sum(ej, axis=0, keepdims=True), approx=False))
            # Pass 2: weighted aggregation; one register accumulator per
            # delta_d channel, no VMEM round-trips of the accumulator.
            u_new = []
            for e in range(dd):
                acc = xload(e)                              # the "+ x" self term
                for j in range(m):
                    acc = acc + zload(j, e) * ps[j]
                u_new.append(acc)
            u = l2n(u_new) if it < max_iter - 1 else u_new

        # Single lane-dense store per (channel, capsule) slab.
        for e in range(dd):
            o_ref[e, :, sl, :] = u[e].astype(o_ref.dtype)


def routing_layer(x, neighbors, max_iter, num_caps, *, node_tile=4096):
    """Pallas implementation of RoutingLayer.forward.

    x:         (n, d) float32
    neighbors: (n*m,) int32, values in [0, n]; value n selects the zero row.
    returns:   (n, d) float32
    """
    n, d = x.shape
    k = num_caps
    assert d % k == 0
    dd = d // k
    assert neighbors.shape[0] % n == 0
    m = neighbors.shape[0] // n
    assert max_iter >= 1

    # Big tiles amortize the ~0.35 us per-grid-step overhead, but keep >= 2
    # grid steps whenever n allows so v7x's two TensorCores both get work.
    min_tile = SUBLANE * LANE                                   # 1024 nodes
    node_tile = max(min_tile,
                    min(node_tile, min_tile * pl.cdiv(n, 2 * min_tile)))
    assert node_tile % min_tile == 0

    n_pad = pl.cdiv(n, node_tile) * node_tile
    num_tiles = n_pad // node_tile
    ts_tile = node_tile // LANE
    sub = SUBLANE
    n_sub = ts_tile // sub

    # --- wrapper-side normalization (identical to the reference) ------------
    xr = x.reshape(n, k, dd)
    nrm = jnp.sqrt(jnp.sum(xr * xr, axis=2, keepdims=True))
    xn = (xr / jnp.maximum(nrm, EPS)).reshape(n, d)

    # --- neighbor gather, directly in node-minor layout ----------------------
    # z_all_t: (dd, k, n+1); column n is the "missing neighbor" zero row.
    # Taking along the node (last) axis with neighbor-major indices yields
    # (m, dd, k, n_pad) whose trailing axis reshapes for free into
    # (num_tiles, ts_tile, 128) -- no transpose of the m-fold expanded tensor.
    # TODO(synk): fold this gather into the kernel (scalar-prefetched neighbor
    # ids + manual row DMAs) to avoid materializing z in HBM at all.
    z_all = jnp.concatenate([xn, jnp.zeros((1, d), xn.dtype)], axis=0)
    z_all_t = z_all.T.reshape(k, dd, n + 1).transpose(1, 0, 2)   # (dd, k, n+1)
    nb = neighbors.reshape(n, m).T.astype(jnp.int32)             # (m, n)
    if n_pad != n:
        nb = jnp.pad(nb, ((0, 0), (0, n_pad - n)), constant_values=n)
    zt = jnp.stack([jnp.take(z_all_t, nb[j], axis=2) for j in range(m)], axis=0)
    zt = zt.reshape(m, dd, k, num_tiles, ts_tile, LANE)

    xn_pad = jnp.pad(xn, ((0, n_pad - n), (0, 0))) if n_pad != n else xn
    # (num_tiles, dd, k, ts_tile, 128); only the small (n, d) array is transposed.
    xt = xn_pad.T.reshape(k, dd, num_tiles, ts_tile, LANE).transpose(2, 1, 0, 3, 4)

    kernel = functools.partial(routing_kernel, max_iter=max_iter, k=k, m=m,
                               dd=dd, sub=sub, n_sub=n_sub)

    # Double-buffered x + z + out blocks, no scratch; add fixed headroom.
    vmem_bytes = 2 * 4 * d * (m + 2) * node_tile + (8 << 20)

    ut = pl.pallas_call(
        kernel,
        out_shape=jax.ShapeDtypeStruct((num_tiles, dd, k, ts_tile, LANE),
                                       x.dtype),
        grid_spec=pltpu.PrefetchScalarGridSpec(
            num_scalar_prefetch=0,
            grid=(num_tiles,),
            in_specs=[
                pl.BlockSpec((None, dd, k, ts_tile, LANE),
                             lambda i: (i, 0, 0, 0, 0)),
                pl.BlockSpec((m, dd, k, None, ts_tile, LANE),
                             lambda i: (0, 0, 0, i, 0, 0)),
            ],
            out_specs=pl.BlockSpec((None, dd, k, ts_tile, LANE),
                                   lambda i: (i, 0, 0, 0, 0)),
        ),
        compiler_params=pltpu.CompilerParams(
            dimension_semantics=("parallel",),
            vmem_limit_bytes=int(vmem_bytes),
        ),
    )(xt, zt)

    # Back to (n, d): only the small (n_pad, d) result is transposed.
    u = ut.transpose(0, 3, 4, 2, 1).reshape(n_pad, d)
    return u[:n]


def routing_layer_ref(x, neighbors, max_iter, num_caps):
    """Pure-JAX reference mirroring the PyTorch forward exactly."""
    n, d = x.shape
    k = num_caps
    dd = d // k
    m = neighbors.shape[0] // n

    def l2n(v, axis):
        nrm = jnp.sqrt(jnp.sum(v * v, axis=axis, keepdims=True))
        return v / jnp.maximum(nrm, EPS)

    xn = l2n(x.reshape(n, k, dd), axis=2).reshape(n, d)
    z_all = jnp.concatenate([xn, jnp.zeros((1, d), x.dtype)], axis=0)
    z = jnp.take(z_all, neighbors, axis=0).reshape(n, m, k, dd)
    u = None
    for clus_iter in range(max_iter):
        if u is None:
            p = jnp.zeros((n, m, k), x.dtype)
        else:
            p = jnp.sum(z * u.reshape(n, 1, k, dd), axis=3)
        p = jax.nn.softmax(p, axis=2)
        u = jnp.sum(z * p.reshape(n, m, k, 1), axis=1) + xn.reshape(n, k, dd)
        if clus_iter < max_iter - 1:
            u = l2n(u, axis=2)
    return u.reshape(n, d)


if __name__ == "__main__":
    # Small shapes: n=2048 nodes (2 grid steps), dim=32, num_caps=4 (delta_d=8),
    # m=4 neighbors per node, 3 routing iterations.
    n, d, k, m, max_iter = 2048, 32, 4, 4, 3

    key = jax.random.PRNGKey(0)
    kx, kn = jax.random.split(key)
    x = jax.random.normal(kx, (n, d), dtype=jnp.float32)
    # neighbor indices in [0, n]; index n == "missing neighbor" -> zero row
    neighbors = jax.random.randint(kn, (n * m,), 0, n + 1, dtype=jnp.int32)

    out = routing_layer(x, neighbors, max_iter, k)
    out = jax.block_until_ready(out)

    ref = routing_layer_ref(x, neighbors, max_iter, k)
    np.testing.assert_allclose(np.asarray(out), np.asarray(ref),
                               rtol=1e-4, atol=1e-5)

    print("KERNEL_OK")
</pallas_src>

<mosaic_0001>
module attributes {stable_mosaic.version = 11 : i64} {
  func.func @routing_kernel(%arg0: i32, %arg1: memref<1x8x4x8x128xf32, #tpu.memory_space<vmem>>, %arg2: memref<4x8x4x1x8x128xf32, #tpu.memory_space<vmem>>, %arg3: memref<1x8x4x8x128xf32, #tpu.memory_space<vmem>>) attributes {dimension_semantics = [#tpu.dimension_semantics<parallel>], iteration_bounds = array<i64: 2>, scalar_prefetch = 0 : i64, scratch_operands = 0 : i64, tpu.core_type = #tpu.core_type<tc>, window_params = [{transform_indices = @transform_0, window_bounds = array<i64: 1, 8, 4, 8, 128>}, {transform_indices = @transform_1, window_bounds = array<i64: 4, 8, 4, 1, 8, 128>}, {transform_indices = @transform_2, window_bounds = array<i64: 1, 8, 4, 8, 128>}]} {
    %c0 = arith.constant 0 : index
    %c0_0 = arith.constant 0 : index
    %c0_1 = arith.constant 0 : index
    %c0_2 = arith.constant 0 : index
    %c0_3 = arith.constant 0 : index
    %c0_4 = arith.constant 0 : index
    %0 = vector.load %arg2[%c0, %c0_0, %c0_1, %c0_2, %c0_3, %c0_4] : memref<4x8x4x1x8x128xf32, #tpu.memory_space<vmem>>, vector<1x1x4x1x8x128xf32>
    %1 = vector.shape_cast %0 : vector<1x1x4x1x8x128xf32> to vector<4x8x128xf32>
    %c1 = arith.constant 1 : index
    %c0_5 = arith.constant 0 : index
    %c0_6 = arith.constant 0 : index
    %c0_7 = arith.constant 0 : index
    %c0_8 = arith.constant 0 : index
    %c0_9 = arith.constant 0 : index
    %2 = vector.load %arg2[%c1, %c0_5, %c0_6, %c0_7, %c0_8, %c0_9] : memref<4x8x4x1x8x128xf32, #tpu.memory_space<vmem>>, vector<1x1x4x1x8x128xf32>
    %3 = vector.shape_cast %2 : vector<1x1x4x1x8x128xf32> to vector<4x8x128xf32>
    %4 = arith.addf %1, %3 : vector<4x8x128xf32>
    %c2 = arith.constant 2 : index
    %c0_10 = arith.constant 0 : index
    %c0_11 = arith.constant 0 : index
    %c0_12 = arith.constant 0 : index
    %c0_13 = arith.constant 0 : index
    %c0_14 = arith.constant 0 : index
    %5 = vector.load %arg2[%c2, %c0_10, %c0_11, %c0_12, %c0_13, %c0_14] : memref<4x8x4x1x8x128xf32, #tpu.memory_space<vmem>>, vector<1x1x4x1x8x128xf32>
    %6 = vector.shape_cast %5 : vector<1x1x4x1x8x128xf32> to vector<4x8x128xf32>
    %7 = arith.addf %4, %6 : vector<4x8x128xf32>
    %c3 = arith.constant 3 : index
    %c0_15 = arith.constant 0 : index
    %c0_16 = arith.constant 0 : index
    %c0_17 = arith.constant 0 : index
    %c0_18 = arith.constant 0 : index
    %c0_19 = arith.constant 0 : index
    %8 = vector.load %arg2[%c3, %c0_15, %c0_16, %c0_17, %c0_18, %c0_19] : memref<4x8x4x1x8x128xf32, #tpu.memory_space<vmem>>, vector<1x1x4x1x8x128xf32>
    %9 = vector.shape_cast %8 : vector<1x1x4x1x8x128xf32> to vector<4x8x128xf32>
    %10 = arith.addf %7, %9 : vector<4x8x128xf32>
    %cst = arith.constant 2.500000e-01 : f32
    %11 = vector.broadcast %cst : f32 to vector<4x8x128xf32>
    %12 = arith.mulf %10, %11 : vector<4x8x128xf32>
    %c0_20 = arith.constant 0 : index
    %c0_21 = arith.constant 0 : index
    %c0_22 = arith.constant 0 : index
    %c0_23 = arith.constant 0 : index
    %c0_24 = arith.constant 0 : index
    %13 = vector.load %arg1[%c0_20, %c0_21, %c0_22, %c0_23, %c0_24] : memref<1x8x4x8x128xf32, #tpu.memory_space<vmem>>, vector<1x1x4x8x128xf32>
    %14 = vector.shape_cast %13 : vector<1x1x4x8x128xf32> to vector<4x8x128xf32>
    %15 = arith.addf %12, %14 : vector<4x8x128xf32>
    %c0_25 = arith.constant 0 : index
    %c1_26 = arith.constant 1 : index
    %c0_27 = arith.constant 0 : index
    %c0_28 = arith.constant 0 : index
    %c0_29 = arith.constant 0 : index
    %c0_30 = arith.constant 0 : index
    %16 = vector.load %arg2[%c0_25, %c1_26, %c0_27, %c0_28, %c0_29, %c0_30] : memref<4x8x4x1x8x128xf32, #tpu.memory_space<vmem>>, vector<1x1x4x1x8x128xf32>
    %17 = vector.shape_cast %16 : vector<1x1x4x1x8x128xf32> to vector<4x8x128xf32>
    %c1_31 = arith.constant 1 : index
    %c1_32 = arith.constant 1 : index
    %c0_33 = arith.constant 0 : index
    %c0_34 = arith.constant 0 : index
    %c0_35 = arith.constant 0 : index
    %c0_36 = arith.constant 0 : index
    %18 = vector.load %arg2[%c1_31, %c1_32, %c0_33, %c0_34, %c0_35, %c0_36] : memref<4x8x4x1x8x128xf32, #tpu.memory_space<vmem>>, vector<1x1x4x1x8x128xf32>
    %19 = vector.shape_cast %18 : vector<1x1x4x1x8x128xf32> to vector<4x8x128xf32>
    %20 = arith.addf %17, %19 : vector<4x8x128xf32>
    %c2_37 = arith.constant 2 : index
    %c1_38 = arith.constant 1 : index
    %c0_39 = arith.constant 0 : index
    %c0_40 = arith.constant 0 : index
    %c0_41 = arith.constant 0 : index
    %c0_42 = arith.constant 0 : index
    %21 = vector.load %arg2[%c2_37, %c1_38, %c0_39, %c0_40, %c0_41, %c0_42] : memref<4x8x4x1x8x128xf32, #tpu.memory_space<vmem>>, vector<1x1x4x1x8x128xf32>
    %22 = vector.shape_cast %21 : vector<1x1x4x1x8x128xf32> to vector<4x8x128xf32>
    %23 = arith.addf %20, %22 : vector<4x8x128xf32>
    %c3_43 = arith.constant 3 : index
    %c1_44 = arith.constant 1 : index
    %c0_45 = arith.constant 0 : index
    %c0_46 = arith.constant 0 : index
    %c0_47 = arith.constant 0 : index
    %c0_48 = arith.constant 0 : index
    %24 = vector.load %arg2[%c3_43, %c1_44, %c0_45, %c0_46, %c0_47, %c0_48] : memref<4x8x4x1x8x128xf32, #tpu.memory_space<vmem>>, vector<1x1x4x1x8x128xf32>
    %25 = vector.shape_cast %24 : vector<1x1x4x1x8x128xf32> to vector<4x8x128xf32>
    %26 = arith.addf %23, %25 : vector<4x8x128xf32>
    %cst_49 = arith.constant 2.500000e-01 : f32
    %27 = vector.broadcast %cst_49 : f32 to vector<4x8x128xf32>
    %28 = arith.mulf %26, %27 : vector<4x8x128xf32>
    %c0_50 = arith.constant 0 : index
    %c1_51 = arith.constant 1 : index
    %c0_52 = arith.constant 0 : index
    %c0_53 = arith.constant 0 : index
    %c0_54 = arith.constant 0 : index
    %29 = vector.load %arg1[%c0_50, %c1_51, %c0_52, %c0_53, %c0_54] : memref<1x8x4x8x128xf32, #tpu.memory_space<vmem>>, vector<1x1x4x8x128xf32>
    %30 = vector.shape_cast %29 : vector<1x1x4x8x128xf32> to vector<4x8x128xf32>
    %31 = arith.addf %28, %30 : vector<4x8x128xf32>
    %c0_55 = arith.constant 0 : index
    %c2_56 = arith.constant 2 : index
    %c0_57 = arith.constant 0 : index
    %c0_58 = arith.constant 0 : index
    %c0_59 = arith.constant 0 : index
    %c0_60 = arith.constant 0 : index
    %32 = vector.load %arg2[%c0_55, %c2_56, %c0_57, %c0_58, %c0_59, %c0_60] : memref<4x8x4x1x8x128xf32, #tpu.memory_space<vmem>>, vector<1x1x4x1x8x128xf32>
    %33 = vector.shape_cast %32 : vector<1x1x4x1x8x128xf32> to vector<4x8x128xf32>
    %c1_61 = arith.constant 1 : index
    %c2_62 = arith.constant 2 : index
    %c0_63 = arith.constant 0 : index
    %c0_64 = arith.constant 0 : index
    %c0_65 = arith.constant 0 : index
    %c0_66 = arith.constant 0 : index
    %34 = vector.load %arg2[%c1_61, %c2_62, %c0_63, %c0_64, %c0_65, %c0_66] : memref<4x8x4x1x8x128xf32, #tpu.memory_space<vmem>>, vector<1x1x4x1x8x128xf32>
    %35 = vector.shape_cast %34 : vector<1x1x4x1x8x128xf32> to vector<4x8x128xf32>
    %36 = arith.addf %33, %35 : vector<4x8x128xf32>
    %c2_67 = arith.constant 2 : index
    %c2_68 = arith.constant 2 : index
    %c0_69 = arith.constant 0 : index
    %c0_70 = arith.constant 0 : index
    %c0_71 = arith.constant 0 : index
    %c0_72 = arith.constant 0 : index
    %37 = vector.load %arg2[%c2_67, %c2_68, %c0_69, %c0_70, %c0_71, %c0_72] : memref<4x8x4x1x8x128xf32, #tpu.memory_space<vmem>>, vector<1x1x4x1x8x128xf32>
    %38 = vector.shape_cast %37 : vector<1x1x4x1x8x128xf32> to vector<4x8x128xf32>
    %39 = arith.addf %36, %38 : vector<4x8x128xf32>
    %c3_73 = arith.constant 3 : index
    %c2_74 = arith.constant 2 : index
    %c0_75 = arith.constant 0 : index
    %c0_76 = arith.constant 0 : index
    %c0_77 = arith.constant 0 : index
    %c0_78 = arith.constant 0 : index
    %40 = vector.load %arg2[%c3_73, %c2_74, %c0_75, %c0_76, %c0_77, %c0_78] : memref<4x8x4x1x8x128xf32, #tpu.memory_space<vmem>>, vector<1x1x4x1x8x128xf32>
    %41 = vector.shape_cast %40 : vector<1x1x4x1x8x128xf32> to vector<4x8x128xf32>
    %42 = arith.addf %39, %41 : vector<4x8x128xf32>
    %cst_79 = arith.constant 2.500000e-01 : f32
    %43 = vector.broadcast %cst_79 : f32 to vector<4x8x128xf32>
    %44 = arith.mulf %42, %43 : vector<4x8x128xf32>
    %c0_80 = arith.constant 0 : index
    %c2_81 = arith.constant 2 : index
    %c0_82 = arith.constant 0 : index
    %c0_83 = arith.constant 0 : index
    %c0_84 = arith.constant 0 : index
    %45 = vector.load %arg1[%c0_80, %c2_81, %c0_82, %c0_83, %c0_84] : memref<1x8x4x8x128xf32, #tpu.memory_space<vmem>>, vector<1x1x4x8x128xf32>
    %46 = vector.shape_cast %45 : vector<1x1x4x8x128xf32> to vector<4x8x128xf32>
    %47 = arith.addf %44, %46 : vector<4x8x128xf32>
    %c0_85 = arith.constant 0 : index
    %c3_86 = arith.constant 3 : index
    %c0_87 = arith.constant 0 : index
    %c0_88 = arith.constant 0 : index
    %c0_89 = arith.constant 0 : index
    %c0_90 = arith.constant 0 : index
    %48 = vector.load %arg2[%c0_85, %c3_86, %c0_87, %c0_88, %c0_89, %c0_90] : memref<4x8x4x1x8x128xf32, #tpu.memory_space<vmem>>, vector<1x1x4x1x8x128xf32>
    %49 = vector.shape_cast %48 : vector<1x1x4x1x8x128xf32> to vector<4x8x128xf32>
    %c1_91 = arith.constant 1 : index
    %c3_92 = arith.constant 3 : index
    %c0_93 = arith.constant 0 : index
    %c0_94 = arith.constant 0 : index
    %c0_95 = arith.constant 0 : index
    %c0_96 = arith.constant 0 : index
    %50 = vector.load %arg2[%c1_91, %c3_92, %c0_93, %c0_94, %c0_95, %c0_96] : memref<4x8x4x1x8x128xf32, #tpu.memory_space<vmem>>, vector<1x1x4x1x8x128xf32>
    %51 = vector.shape_cast %50 : vector<1x1x4x1x8x128xf32> to vector<4x8x128xf32>
    %52 = arith.addf %49, %51 : vector<4x8x128xf32>
    %c2_97 = arith.constant 2 : index
    %c3_98 = arith.constant 3 : index
    %c0_99 = arith.constant 0 : index
    %c0_100 = arith.constant 0 : index
    %c0_101 = arith.constant 0 : index
    %c0_102 = arith.constant 0 : index
    %53 = vector.load %arg2[%c2_97, %c3_98, %c0_99, %c0_100, %c0_101, %c0_102] : memref<4x8x4x1x8x128xf32, #tpu.memory_space<vmem>>, vector<1x1x4x1x8x128xf32>
    %54 = vector.shape_cast %53 : vector<1x1x4x1x8x128xf32> to vector<4x8x128xf32>
    %55 = arith.addf %52, %54 : vector<4x8x128xf32>
    %c3_103 = arith.constant 3 : index
    %c3_104 = arith.constant 3 : index
    %c0_105 = arith.constant 0 : index
    %c0_106 = arith.constant 0 : index
    %c0_107 = arith.constant 0 : index
    %c0_108 = arith.constant 0 : index
    %56 = vector.load %arg2[%c3_103, %c3_104, %c0_105, %c0_106, %c0_107, %c0_108] : memref<4x8x4x1x8x128xf32, #tpu.memory_space<vmem>>, vector<1x1x4x1x8x128xf32>
    %57 = vector.shape_cast %56 : vector<1x1x4x1x8x128xf32> to vector<4x8x128xf32>
    %58 = arith.addf %55, %57 : vector<4x8x128xf32>
    %cst_109 = arith.constant 2.500000e-01 : f32
    %59 = vector.broadcast %cst_109 : f32 to vector<4x8x128xf32>
    %60 = arith.mulf %58, %59 : vector<4x8x128xf32>
    %c0_110 = arith.constant 0 : index
    %c3_111 = arith.constant 3 : index
    %c0_112 = arith.constant 0 : index
    %c0_113 = arith.constant 0 : index
    %c0_114 = arith.constant 0 : index
    %61 = vector.load %arg1[%c0_110, %c3_111, %c0_112, %c0_113, %c0_114] : memref<1x8x4x8x128xf32, #tpu.memory_space<vmem>>, vector<1x1x4x8x128xf32>
    %62 = vector.shape_cast %61 : vector<1x1x4x8x128xf32> to vector<4x8x128xf32>
    %63 = arith.addf %60, %62 : vector<4x8x128xf32>
    %c0_115 = arith.constant 0 : index
    %c4 = arith.constant 4 : index
    %c0_116 = arith.constant 0 : index
    %c0_117 = arith.constant 0 : index
    %c0_118 = arith.constant 0 : index
    %c0_119 = arith.constant 0 : index
    %64 = vector.load %arg2[%c0_115, %c4, %c0_116, %c0_117, %c0_118, %c0_119] : memref<4x8x4x1x8x128xf32, #tpu.memory_space<vmem>>, vector<1x1x4x1x8x128xf32>
    %65 = vector.shape_cast %64 : vector<1x1x4x1x8x128xf32> to vector<4x8x128xf32>
    %c1_120 = arith.constant 1 : index
    %c4_121 = arith.constant 4 : index
    %c0_122 = arith.constant 0 : index
    %c0_123 = arith.constant 0 : index
    %c0_124 = arith.constant 0 : index
    %c0_125 = arith.constant 0 : index
    %66 = vector.load %arg2[%c1_120, %c4_121, %c0_122, %c0_123, %c0_124, %c0_125] : memref<4x8x4x1x8x128xf32, #tpu.memory_space<vmem>>, vector<1x1x4x1x8x128xf32>
    %67 = vector.shape_cast %66 : vector<1x1x4x1x8x128xf32> to vector<4x8x128xf32>
    %68 = arith.addf %65, %67 : vector<4x8x128xf32>
    %c2_126 = arith.constant 2 : index
    %c4_127 = arith.constant 4 : index
    %c0_128 = arith.constant 0 : index
    %c0_129 = arith.constant 0 : index
    %c0_130 = arith.constant 0 : index
    %c0_131 = arith.constant 0 : index
    %69 = vector.load %arg2[%c2_126, %c4_127, %c0_128, %c0_129, %c0_130, %c0_131] : memref<4x8x4x1x8x128xf32, #tpu.memory_space<vmem>>, vector<1x1x4x1x8x128xf32>
    %70 = vector.shape_cast %69 : vector<1x1x4x1x8x128xf32> to vector<4x8x128xf32>
    %71 = arith.addf %68, %70 : vector<4x8x128xf32>
    %c3_132 = arith.constant 3 : index
    %c4_133 = arith.constant 4 : index
    %c0_134 = arith.constant 0 : index
    %c0_135 = arith.constant 0 : index
    %c0_136 = arith.constant 0 : index
    %c0_137 = arith.constant 0 : index
    %72 = vector.load %arg2[%c3_132, %c4_133, %c0_134, %c0_135, %c0_136, %c0_137] : memref<4x8x4x1x8x128xf32, #tpu.memory_space<vmem>>, vector<1x1x4x1x8x128xf32>
    %73 = vector.shape_cast %72 : vector<1x1x4x1x8x128xf32> to vector<4x8x128xf32>
    %74 = arith.addf %71, %73 : vector<4x8x128xf32>
    %cst_138 = arith.constant 2.500000e-01 : f32
    %75 = vector.broadcast %cst_138 : f32 to vector<4x8x128xf32>
    %76 = arith.mulf %74, %75 : vector<4x8x128xf32>
    %c0_139 = arith.constant 0 : index
    %c4_140 = arith.constant 4 : index
    %c0_141 = arith.constant 0 : index
    %c0_142 = arith.constant 0 : index
    %c0_143 = arith.constant 0 : index
    %77 = vector.load %arg1[%c0_139, %c4_140, %c0_141, %c0_142, %c0_143] : memref<1x8x4x8x128xf32, #tpu.memory_space<vmem>>, vector<1x1x4x8x128xf32>
    %78 = vector.shape_cast %77 : vector<1x1x4x8x128xf32> to vector<4x8x128xf32>
    %79 = arith.addf %76, %78 : vector<4x8x128xf32>
    %c0_144 = arith.constant 0 : index
    %c5 = arith.constant 5 : index
    %c0_145 = arith.constant 0 : index
    %c0_146 = arith.constant 0 : index
    %c0_147 = arith.constant 0 : index
    %c0_148 = arith.constant 0 : index
    %80 = vector.load %arg2[%c0_144, %c5, %c0_145, %c0_146, %c0_147, %c0_148] : memref<4x8x4x1x8x128xf32, #tpu.memory_space<vmem>>, vector<1x1x4x1x8x128xf32>
    %81 = vector.shape_cast %80 : vector<1x1x4x1x8x128xf32> to vector<4x8x128xf32>
    %c1_149 = arith.constant 1 : index
    %c5_150 = arith.constant 5 : index
    %c0_151 = arith.constant 0 : index
    %c0_152 = arith.constant 0 : index
    %c0_153 = arith.constant 0 : index
    %c0_154 = arith.constant 0 : index
    %82 = vector.load %arg2[%c1_149, %c5_150, %c0_151, %c0_152, %c0_153, %c0_154] : memref<4x8x4x1x8x128xf32, #tpu.memory_space<vmem>>, vector<1x1x4x1x8x128xf32>
    %83 = vector.shape_cast %82 : vector<1x1x4x1x8x128xf32> to vector<4x8x128xf32>
    %84 = arith.addf %81, %83 : vector<4x8x128xf32>
    %c2_155 = arith.constant 2 : index
    %c5_156 = arith.constant 5 : index
    %c0_157 = arith.constant 0 : index
    %c0_158 = arith.constant 0 : index
    %c0_159 = arith.constant 0 : index
    %c0_160 = arith.constant 0 : index
    %85 = vector.load %arg2[%c2_155, %c5_156, %c0_157, %c0_158, %c0_159, %c0_160] : memref<4x8x4x1x8x128xf32, #tpu.memory_space<vmem>>, vector<1x1x4x1x8x128xf32>
    %86 = vector.shape_cast %85 : vector<1x1x4x1x8x128xf32> to vector<4x8x128xf32>
    %87 = arith.addf %84, %86 : vector<4x8x128xf32>
    %c3_161 = arith.constant 3 : index
    %c5_162 = arith.constant 5 : index
    %c0_163 = arith.constant 0 : index
    %c0_164 = arith.constant 0 : index
    %c0_165 = arith.constant 0 : index
    %c0_166 = arith.constant 0 : index
    %88 = vector.load %arg2[%c3_161, %c5_162, %c0_163, %c0_164, %c0_165, %c0_166] : memref<4x8x4x1x8x128xf32, #tpu.memory_space<vmem>>, vector<1x1x4x1x8x128xf32>
    %89 = vector.shape_cast %88 : vector<1x1x4x1x8x128xf32> to vector<4x8x128xf32>
    %90 = arith.addf %87, %89 : vector<4x8x128xf32>
    %cst_167 = arith.constant 2.500000e-01 : f32
    %91 = vector.broadcast %cst_167 : f32 to vector<4x8x128xf32>
    %92 = arith.mulf %90, %91 : vector<4x8x128xf32>
    %c0_168 = arith.constant 0 : index
    %c5_169 = arith.constant 5 : index
    %c0_170 = arith.constant 0 : index
    %c0_171 = arith.constant 0 : index
    %c0_172 = arith.constant 0 : index
    %93 = vector.load %arg1[%c0_168, %c5_169, %c0_170, %c0_171, %c0_172] : memref<1x8x4x8x128xf32, #tpu.memory_space<vmem>>, vector<1x1x4x8x128xf32>
    %94 = vector.shape_cast %93 : vector<1x1x4x8x128xf32> to vector<4x8x128xf32>
    %95 = arith.addf %92, %94 : vector<4x8x128xf32>
    %c0_173 = arith.constant 0 : index
    %c6 = arith.constant 6 : index
    %c0_174 = arith.constant 0 : index
    %c0_175 = arith.constant 0 : index
    %c0_176 = arith.constant 0 : index
    %c0_177 = arith.constant 0 : index
    %96 = vector.load %arg2[%c0_173, %c6, %c0_174, %c0_175, %c0_176, %c0_177] : memref<4x8x4x1x8x128xf32, #tpu.memory_space<vmem>>, vector<1x1x4x1x8x128xf32>
    %97 = vector.shape_cast %96 : vector<1x1x4x1x8x128xf32> to vector<4x8x128xf32>
    %c1_178 = arith.constant 1 : index
    %c6_179 = arith.constant 6 : index
    %c0_180 = arith.constant 0 : index
    %c0_181 = arith.constant 0 : index
    %c0_182 = arith.constant 0 : index
    %c0_183 = arith.constant 0 : index
    %98 = vector.load %arg2[%c1_178, %c6_179, %c0_180, %c0_181, %c0_182, %c0_183] : memref<4x8x4x1x8x128xf32, #tpu.memory_space<vmem>>, vector<1x1x4x1x8x128xf32>
    %99 = vector.shape_cast %98 : vector<1x1x4x1x8x128xf32> to vector<4x8x128xf32>
    %100 = arith.addf %97, %99 : vector<4x8x128xf32>
    %c2_184 = arith.constant 2 : index
    %c6_185 = arith.constant 6 : index
    %c0_186 = arith.constant 0 : index
    %c0_187 = arith.constant 0 : index
    %c0_188 = arith.constant 0 : index
    %c0_189 = arith.constant 0 : index
    %101 = vector.load %arg2[%c2_184, %c6_185, %c0_186, %c0_187, %c0_188, %c0_189] : memref<4x8x4x1x8x128xf32, #tpu.memory_space<vmem>>, vector<1x1x4x1x8x128xf32>
    %102 = vector.shape_cast %101 : vector<1x1x4x1x8x128xf32> to vector<4x8x128xf32>
    %103 = arith.addf %100, %102 : vector<4x8x128xf32>
    %c3_190 = arith.constant 3 : index
    %c6_191 = arith.constant 6 : index
    %c0_192 = arith.constant 0 : index
    %c0_193 = arith.constant 0 : index
    %c0_194 = arith.constant 0 : index
    %c0_195 = arith.constant 0 : index
    %104 = vector.load %arg2[%c3_190, %c6_191, %c0_192, %c0_193, %c0_194, %c0_195] : memref<4x8x4x1x8x128xf32, #tpu.memory_space<vmem>>, vector<1x1x4x1x8x128xf32>
    %105 = vector.shape_cast %104 : vector<1x1x4x1x8x128xf32> to vector<4x8x128xf32>
    %106 = arith.addf %103, %105 : vector<4x8x128xf32>
    %cst_196 = arith.constant 2.500000e-01 : f32
    %107 = vector.broadcast %cst_196 : f32 to vector<4x8x128xf32>
    %108 = arith.mulf %106, %107 : vector<4x8x128xf32>
    %c0_197 = arith.constant 0 : index
    %c6_198 = arith.constant 6 : index
    %c0_199 = arith.constant 0 : index
    %c0_200 = arith.constant 0 : index
    %c0_201 = arith.constant 0 : index
    %109 = vector.load %arg1[%c0_197, %c6_198, %c0_199, %c0_200, %c0_201] : memref<1x8x4x8x128xf32, #tpu.memory_space<vmem>>, vector<1x1x4x8x128xf32>
    %110 = vector.shape_cast %109 : vector<1x1x4x8x128xf32> to vector<4x8x128xf32>
    %111 = arith.addf %108, %110 : vector<4x8x128xf32>
    %c0_202 = arith.constant 0 : index
    %c7 = arith.constant 7 : index
    %c0_203 = arith.constant 0 : index
    %c0_204 = arith.constant 0 : index
    %c0_205 = arith.constant 0 : index
    %c0_206 = arith.constant 0 : index
    %112 = vector.load %arg2[%c0_202, %c7, %c0_203, %c0_204, %c0_205, %c0_206] : memref<4x8x4x1x8x128xf32, #tpu.memory_space<vmem>>, vector<1x1x4x1x8x128xf32>
    %113 = vector.shape_cast %112 : vector<1x1x4x1x8x128xf32> to vector<4x8x128xf32>
    %c1_207 = arith.constant 1 : index
    %c7_208 = arith.constant 7 : index
    %c0_209 = arith.constant 0 : index
    %c0_210 = arith.constant 0 : index
    %c0_211 = arith.constant 0 : index
    %c0_212 = arith.constant 0 : index
    %114 = vector.load %arg2[%c1_207, %c7_208, %c0_209, %c0_210, %c0_211, %c0_212] : memref<4x8x4x1x8x128xf32, #tpu.memory_space<vmem>>, vector<1x1x4x1x8x128xf32>
    %115 = vector.shape_cast %114 : vector<1x1x4x1x8x128xf32> to vector<4x8x128xf32>
    %116 = arith.addf %113, %115 : vector<4x8x128xf32>
    %c2_213 = arith.constant 2 : index
    %c7_214 = arith.constant 7 : index
    %c0_215 = arith.constant 0 : index
    %c0_216 = arith.constant 0 : index
    %c0_217 = arith.constant 0 : index
    %c0_218 = arith.constant 0 : index
    %117 = vector.load %arg2[%c2_213, %c7_214, %c0_215, %c0_216, %c0_217, %c0_218] : memref<4x8x4x1x8x128xf32, #tpu.memory_space<vmem>>, vector<1x1x4x1x8x128xf32>
    %118 = vector.shape_cast %117 : vector<1x1x4x1x8x128xf32> to vector<4x8x128xf32>
    %119 = arith.addf %116, %118 : vector<4x8x128xf32>
    %c3_219 = arith.constant 3 : index
    %c7_220 = arith.constant 7 : index
    %c0_221 = arith.constant 0 : index
    %c0_222 = arith.constant 0 : index
    %c0_223 = arith.constant 0 : index
    %c0_224 = arith.constant 0 : index
    %120 = vector.load %arg2[%c3_219, %c7_220, %c0_221, %c0_222, %c0_223, %c0_224] : memref<4x8x4x1x8x128xf32, #tpu.memory_space<vmem>>, vector<1x1x4x1x8x128xf32>
    %121 = vector.shape_cast %120 : vector<1x1x4x1x8x128xf32> to vector<4x8x128xf32>
    %122 = arith.addf %119, %121 : vector<4x8x128xf32>
    %cst_225 = arith.constant 2.500000e-01 : f32
    %123 = vector.broadcast %cst_225 : f32 to vector<4x8x128xf32>
    %124 = arith.mulf %122, %123 : vector<4x8x128xf32>
    %c0_226 = arith.constant 0 : index
    %c7_227 = arith.constant 7 : index
    %c0_228 = arith.constant 0 : index
    %c0_229 = arith.constant 0 : index
    %c0_230 = arith.constant 0 : index
    %125 = vector.load %arg1[%c0_226, %c7_227, %c0_228, %c0_229, %c0_230] : memref<1x8x4x8x128xf32, #tpu.memory_space<vmem>>, vector<1x1x4x8x128xf32>
    %126 = vector.shape_cast %125 : vector<1x1x4x8x128xf32> to vector<4x8x128xf32>
    %127 = arith.addf %124, %126 : vector<4x8x128xf32>
    %128 = arith.mulf %15, %15 : vector<4x8x128xf32>
    %129 = arith.mulf %31, %31 : vector<4x8x128xf32>
    %130 = arith.addf %128, %129 : vector<4x8x128xf32>
    %131 = arith.mulf %47, %47 : vector<4x8x128xf32>
    %132 = arith.addf %130, %131 : vector<4x8x128xf32>
    %133 = arith.mulf %63, %63 : vector<4x8x128xf32>
    %134 = arith.addf %132, %133 : vector<4x8x128xf32>
    %135 = arith.mulf %79, %79 : vector<4x8x128xf32>
    %136 = arith.addf %134, %135 : vector<4x8x128xf32>
    %137 = arith.mulf %95, %95 : vector<4x8x128xf32>
    %138 = arith.addf %136, %137 : vector<4x8x128xf32>
    %139 = arith.mulf %111, %111 : vector<4x8x128xf32>
    %140 = arith.addf %138, %139 : vector<4x8x128xf32>
    %141 = arith.mulf %127, %127 : vector<4x8x128xf32>
    %142 = arith.addf %140, %141 : vector<4x8x128xf32>
    %cst_231 = arith.constant 1.000000e-24 : f32
    %143 = vector.broadcast %cst_231 : f32 to vector<4x8x128xf32>
    %144 = arith.maximumf %142, %143 : vector<4x8x128xf32>
    %145 = math.rsqrt %144 : vector<4x8x128xf32>
    %146 = arith.mulf %15, %145 : vector<4x8x128xf32>
    %147 = arith.mulf %31, %145 : vector<4x8x128xf32>
    %148 = arith.mulf %47, %145 : vector<4x8x128xf32>
    %149 = arith.mulf %63, %145 : vector<4x8x128xf32>
    %150 = arith.mulf %79, %145 : vector<4x8x128xf32>
    %151 = arith.mulf %95, %145 : vector<4x8x128xf32>
    %152 = arith.mulf %111, %145 : vector<4x8x128xf32>
    %153 = arith.mulf %127, %145 : vector<4x8x128xf32>
    %c0_232 = arith.constant 0 : index
    %c0_233 = arith.constant 0 : index
    %c0_234 = arith.constant 0 : index
    %c0_235 = arith.constant 0 : index
    %c0_236 = arith.constant 0 : index
    %c0_237 = arith.constant 0 : index
    %154 = vector.load %arg2[%c0_232, %c0_233, %c0_234, %c0_235, %c0_236, %c0_237] : memref<4x8x4x1x8x128xf32, #tpu.memory_space<vmem>>, vector<1x1x4x1x8x128xf32>
    %155 = vector.shape_cast %154 : vector<1x1x4x1x8x128xf32> to vector<4x8x128xf32>
    %156 = arith.mulf %155, %146 : vector<4x8x128xf32>
    %c0_238 = arith.constant 0 : index
    %c1_239 = arith.constant 1 : index
    %c0_240 = arith.constant 0 : index
    %c0_241 = arith.constant 0 : index
    %c0_242 = arith.constant 0 : index
    %c0_243 = arith.constant 0 : index
    %157 = vector.load %arg2[%c0_238, %c1_239, %c0_240, %c0_241, %c0_242, %c0_243] : memref<4x8x4x1x8x128xf32, #tpu.memory_space<vmem>>, vector<1x1x4x1x8x128xf32>
    %158 = vector.shape_cast %157 : vector<1x1x4x1x8x128xf32> to vector<4x8x128xf32>
    %159 = arith.mulf %158, %147 : vector<4x8x128xf32>
    %160 = arith.addf %156, %159 : vector<4x8x128xf32>
    %c0_244 = arith.constant 0 : index
    %c2_245 = arith.constant 2 : index
    %c0_246 = arith.constant 0 : index
    %c0_247 = arith.constant 0 : index
    %c0_248 = arith.constant 0 : index
    %c0_249 = arith.constant 0 : index
    %161 = vector.load %arg2[%c0_244, %c2_245, %c0_246, %c0_247, %c0_248, %c0_249] : memref<4x8x4x1x8x128xf32, #tpu.memory_space<vmem>>, vector<1x1x4x1x8x128xf32>
    %162 = vector.shape_cast %161 : vector<1x1x4x1x8x128xf32> to vector<4x8x128xf32>
    %163 = arith.mulf %162, %148 : vector<4x8x128xf32>
    %164 = arith.addf %160, %163 : vector<4x8x128xf32>
    %c0_250 = arith.constant 0 : index
    %c3_251 = arith.constant 3 : index
    %c0_252 = arith.constant 0 : index
    %c0_253 = arith.constant 0 : index
    %c0_254 = arith.constant 0 : index
    %c0_255 = arith.constant 0 : index
    %165 = vector.load %arg2[%c0_250, %c3_251, %c0_252, %c0_253, %c0_254, %c0_255] : memref<4x8x4x1x8x128xf32, #tpu.memory_space<vmem>>, vector<1x1x4x1x8x128xf32>
    %166 = vector.shape_cast %165 : vector<1x1x4x1x8x128xf32> to vector<4x8x128xf32>
    %167 = arith.mulf %166, %149 : vector<4x8x128xf32>
    %168 = arith.addf %164, %167 : vector<4x8x128xf32>
    %c0_256 = arith.constant 0 : index
    %c4_257 = arith.constant 4 : index
    %c0_258 = arith.constant 0 : index
    %c0_259 = arith.constant 0 : index
    %c0_260 = arith.constant 0 : index
    %c0_261 = arith.constant 0 : index
    %169 = vector.load %arg2[%c0_256, %c4_257, %c0_258, %c0_259, %c0_260, %c0_261] : memref<4x8x4x1x8x128xf32, #tpu.memory_space<vmem>>, vector<1x1x4x1x8x128xf32>
    %170 = vector.shape_cast %169 : vector<1x1x4x1x8x128xf32> to vector<4x8x128xf32>
    %171 = arith.mulf %170, %150 : vector<4x8x128xf32>
    %172 = arith.addf %168, %171 : vector<4x8x128xf32>
    %c0_262 = arith.constant 0 : index
    %c5_263 = arith.constant 5 : index
    %c0_264 = arith.constant 0 : index
    %c0_265 = arith.constant 0 : index
    %c0_266 = arith.constant 0 : index
    %c0_267 = arith.constant 0 : index
    %173 = vector.load %arg2[%c0_262, %c5_263, %c0_264, %c0_265, %c0_266, %c0_267] : memref<4x8x4x1x8x128xf32, #tpu.memory_space<vmem>>, vector<1x1x4x1x8x128xf32>
    %174 = vector.shape_cast %173 : vector<1x1x4x1x8x128xf32> to vector<4x8x128xf32>
    %175 = arith.mulf %174, %151 : vector<4x8x128xf32>
    %176 = arith.addf %172, %175 : vector<4x8x128xf32>
    %c0_268 = arith.constant 0 : index
    %c6_269 = arith.constant 6 : index
    %c0_270 = arith.constant 0 : index
    %c0_271 = arith.constant 0 : index
    %c0_272 = arith.constant 0 : index
    %c0_273 = arith.constant 0 : index
    %177 = vector.load %arg2[%c0_268, %c6_269, %c0_270, %c0_271, %c0_272, %c0_273] : memref<4x8x4x1x8x128xf32, #tpu.memory_space<vmem>>, vector<1x1x4x1x8x128xf32>
    %178 = vector.shape_cast %177 : vector<1x1x4x1x8x128xf32> to vector<4x8x128xf32>
    %179 = arith.mulf %178, %152 : vector<4x8x128xf32>
    %180 = arith.addf %176, %179 : vector<4x8x128xf32>
    %c0_274 = arith.constant 0 : index
    %c7_275 = arith.constant 7 : index
    %c0_276 = arith.constant 0 : index
    %c0_277 = arith.constant 0 : index
    %c0_278 = arith.constant 0 : index
    %c0_279 = arith.constant 0 : index
    %181 = vector.load %arg2[%c0_274, %c7_275, %c0_276, %c0_277, %c0_278, %c0_279] : memref<4x8x4x1x8x128xf32, #tpu.memory_space<vmem>>, vector<1x1x4x1x8x128xf32>
    %182 = vector.shape_cast %181 : vector<1x1x4x1x8x128xf32> to vector<4x8x128xf32>
    %183 = arith.mulf %182, %153 : vector<4x8x128xf32>
    %184 = arith.addf %180, %183 : vector<4x8x128xf32>
    %cst_280 = arith.constant dense<0xFF800000> : vector<8x128xf32>
    %185 = vector.multi_reduction <maximumf>, %184, %cst_280 [0] : vector<4x8x128xf32> to vector<8x128xf32>
    %186 = vector.shape_cast %185 : vector<8x128xf32> to vector<1x8x128xf32>
    %187 = vector.broadcast %186 : vector<1x8x128xf32> to vector<4x8x128xf32>
    %188 = arith.subf %184, %187 : vector<4x8x128xf32>
    %189 = math.exp %188 : vector<4x8x128xf32>
    %cst_281 = arith.constant dense<0.000000e+00> : vector<8x128xf32>
    %190 = vector.multi_reduction <add>, %189, %cst_281 [0] : vector<4x8x128xf32> to vector<8x128xf32>
    %191 = vector.shape_cast %190 : vector<8x128xf32> to vector<1x8x128xf32>
    %192 = tpu.reciprocal %191 : vector<1x8x128xf32> -> vector<1x8x128xf32>
    %193 = vector.broadcast %192 : vector<1x8x128xf32> to vector<4x8x128xf32>
    %194 = arith.mulf %189, %193 : vector<4x8x128xf32>
    %c1_282 = arith.constant 1 : index
    %c0_283 = arith.constant 0 : index
    %c0_284 = arith.constant 0 : index
    %c0_285 = arith.constant 0 : index
    %c0_286 = arith.constant 0 : index
    %c0_287 = arith.constant 0 : index
    %195 = vector.load %arg2[%c1_282, %c0_283, %c0_284, %c0_285, %c0_286, %c0_287] : memref<4x8x4x1x8x128xf32, #tpu.memory_space<vmem>>, vector<1x1x4x1x8x128xf32>
    %196 = vector.shape_cast %195 : vector<1x1x4x1x8x128xf32> to vector<4x8x128xf32>
    %197 = arith.mulf %196, %146 : vector<4x8x128xf32>
    %c1_288 = arith.constant 1 : index
    %c1_289 = arith.constant 1 : index
    %c0_290 = arith.constant 0 : index
    %c0_291 = arith.constant 0 : index
    %c0_292 = arith.constant 0 : index
    %c0_293 = arith.constant 0 : index
    %198 = vector.load %arg2[%c1_288, %c1_289, %c0_290, %c0_291, %c0_292, %c0_293] : memref<4x8x4x1x8x128xf32, #tpu.memory_space<vmem>>, vector<1x1x4x1x8x128xf32>
    %199 = vector.shape_cast %198 : vector<1x1x4x1x8x128xf32> to vector<4x8x128xf32>
    %200 = arith.mulf %199, %147 : vector<4x8x128xf32>
    %201 = arith.addf %197, %200 : vector<4x8x128xf32>
    %c1_294 = arith.constant 1 : index
    %c2_295 = arith.constant 2 : index
    %c0_296 = arith.constant 0 : index
    %c0_297 = arith.constant 0 : index
    %c0_298 = arith.constant 0 : index
    %c0_299 = arith.constant 0 : index
    %202 = vector.load %arg2[%c1_294, %c2_295, %c0_296, %c0_297, %c0_298, %c0_299] : memref<4x8x4x1x8x128xf32, #tpu.memory_space<vmem>>, vector<1x1x4x1x8x128xf32>
    %203 = vector.shape_cast %202 : vector<1x1x4x1x8x128xf32> to vector<4x8x128xf32>
    %204 = arith.mulf %203, %148 : vector<4x8x128xf32>
    %205 = arith.addf %201, %204 : vector<4x8x128xf32>
    %c1_300 = arith.constant 1 : index
    %c3_301 = arith.constant 3 : index
    %c0_302 = arith.constant 0 : index
    %c0_303 = arith.constant 0 : index
    %c0_304 = arith.constant 0 : index
    %c0_305 = arith.constant 0 : index
    %206 = vector.load %arg2[%c1_300, %c3_301, %c0_302, %c0_303, %c0_304, %c0_305] : memref<4x8x4x1x8x128xf32, #tpu.memory_space<vmem>>, vector<1x1x4x1x8x128xf32>
    %207 = vector.shape_cast %206 : vector<1x1x4x1x8x128xf32> to vector<4x8x128xf32>
    %208 = arith.mulf %207, %149 : vector<4x8x128xf32>
    %209 = arith.addf %205, %208 : vector<4x8x128xf32>
    %c1_306 = arith.constant 1 : index
    %c4_307 = arith.constant 4 : index
    %c0_308 = arith.constant 0 : index
    %c0_309 = arith.constant 0 : index
    %c0_310 = arith.constant 0 : index
    %c0_311 = arith.constant 0 : index
    %210 = vector.load %arg2[%c1_306, %c4_307, %c0_308, %c0_309, %c0_310, %c0_311] : memref<4x8x4x1x8x128xf32, #tpu.memory_space<vmem>>, vector<1x1x4x1x8x128xf32>
    %211 = vector.shape_cast %210 : vector<1x1x4x1x8x128xf32> to vector<4x8x128xf32>
    %212 = arith.mulf %211, %150 : vector<4x8x128xf32>
    %213 = arith.addf %209, %212 : vector<4x8x128xf32>
    %c1_312 = arith.constant 1 : index
    %c5_313 = arith.constant 5 : index
    %c0_314 = arith.constant 0 : index
    %c0_315 = arith.constant 0 : index
    %c0_316 = arith.constant 0 : index
    %c0_317 = arith.constant 0 : index
    %214 = vector.load %arg2[%c1_312, %c5_313, %c0_314, %c0_315, %c0_316, %c0_317] : memref<4x8x4x1x8x128xf32, #tpu.memory_space<vmem>>, vector<1x1x4x1x8x128xf32>
    %215 = vector.shape_cast %214 : vector<1x1x4x1x8x128xf32> to vector<4x8x128xf32>
    %216 = arith.mulf %215, %151 : vector<4x8x128xf32>
    %217 = arith.addf %213, %216 : vector<4x8x128xf32>
    %c1_318 = arith.constant 1 : index
    %c6_319 = arith.constant 6 : index
    %c0_320 = arith.constant 0 : index
    %c0_321 = arith.constant 0 : index
    %c0_322 = arith.constant 0 : index
    %c0_323 = arith.constant 0 : index
    %218 = vector.load %arg2[%c1_318, %c6_319, %c0_320, %c0_321, %c0_322, %c0_323] : memref<4x8x4x1x8x128xf32, #tpu.memory_space<vmem>>, vector<1x1x4x1x8x128xf32>
    %219 = vector.shape_cast %218 : vector<1x1x4x1x8x128xf32> to vector<4x8x128xf32>
    %220 = arith.mulf %219, %152 : vector<4x8x128xf32>
    %221 = arith.addf %217, %220 : vector<4x8x128xf32>
    %c1_324 = arith.constant 1 : index
    %c7_325 = arith.constant 7 : index
    %c0_326 = arith.constant 0 : index
    %c0_327 = arith.constant 0 : index
    %c0_328 = arith.constant 0 : index
    %c0_329 = arith.constant 0 : index
    %222 = vector.load %arg2[%c1_324, %c7_325, %c0_326, %c0_327, %c0_328, %c0_329] : memref<4x8x4x1x8x128xf32, #tpu.memory_space<vmem>>, vector<1x1x4x1x8x128xf32>
    %223 = vector.shape_cast %222 : vector<1x1x4x1x8x128xf32> to vector<4x8x128xf32>
    %224 = arith.mulf %223, %153 : vector<4x8x128xf32>
    %225 = arith.addf %221, %224 : vector<4x8x128xf32>
    %cst_330 = arith.constant dense<0xFF800000> : vector<8x128xf32>
    %226 = vector.multi_reduction <maximumf>, %225, %cst_330 [0] : vector<4x8x128xf32> to vector<8x128xf32>
    %227 = vector.shape_cast %226 : vector<8x128xf32> to vector<1x8x128xf32>
    %228 = vector.broadcast %227 : vector<1x8x128xf32> to vector<4x8x128xf32>
    %229 = arith.subf %225, %228 : vector<4x8x128xf32>
    %230 = math.exp %229 : vector<4x8x128xf32>
    %cst_331 = arith.constant dense<0.000000e+00> : vector<8x128xf32>
    %231 = vector.multi_reduction <add>, %230, %cst_331 [0] : vector<4x8x128xf32> to vector<8x128xf32>
    %232 = vector.shape_cast %231 : vector<8x128xf32> to vector<1x8x128xf32>
    %233 = tpu.reciprocal %232 : vector<1x8x128xf32> -> vector<1x8x128xf32>
    %234 = vector.broadcast %233 : vector<1x8x128xf32> to vector<4x8x128xf32>
    %235 = arith.mulf %230, %234 : vector<4x8x128xf32>
    %c2_332 = arith.constant 2 : index
    %c0_333 = arith.constant 0 : index
    %c0_334 = arith.constant 0 : index
    %c0_335 = arith.constant 0 : index
    %c0_336 = arith.constant 0 : index
    %c0_337 = arith.constant 0 : index
    %236 = vector.load %arg2[%c2_332, %c0_333, %c0_334, %c0_335, %c0_336, %c0_337] : memref<4x8x4x1x8x128xf32, #tpu.memory_space<vmem>>, vector<1x1x4x1x8x128xf32>
    %237 = vector.shape_cast %236 : vector<1x1x4x1x8x128xf32> to vector<4x8x128xf32>
    %238 = arith.mulf %237, %146 : vector<4x8x128xf32>
    %c2_338 = arith.constant 2 : index
    %c1_339 = arith.constant 1 : index
    %c0_340 = arith.constant 0 : index
    %c0_341 = arith.constant 0 : index
    %c0_342 = arith.constant 0 : index
    %c0_343 = arith.constant 0 : index
    %239 = vector.load %arg2[%c2_338, %c1_339, %c0_340, %c0_341, %c0_342, %c0_343] : memref<4x8x4x1x8x128xf32, #tpu.memory_space<vmem>>, vector<1x1x4x1x8x128xf32>
    %240 = vector.shape_cast %239 : vector<1x1x4x1x8x128xf32> to vector<4x8x128xf32>
    %241 = arith.mulf %240, %147 : vector<4x8x128xf32>
    %242 = arith.addf %238, %241 : vector<4x8x128xf32>
    %c2_344 = arith.constant 2 : index
    %c2_345 = arith.constant 2 : index
    %c0_346 = arith.constant 0 : index
    %c0_347 = arith.constant 0 : index
    %c0_348 = arith.constant 0 : index
    %c0_349 = arith.constant 0 : index
    %243 = vector.load %arg2[%c2_344, %c2_345, %c0_346, %c0_347, %c0_348, %c0_349] : memref<4x8x4x1x8x128xf32, #tpu.memory_space<vmem>>, vector<1x1x4x1x8x128xf32>
    %244 = vector.shape_cast %243 : vector<1x1x4x1x8x128xf32> to vector<4x8x128xf32>
    %245 = arith.mulf %244, %148 : vector<4x8x128xf32>
    %246 = arith.addf %242, %245 : vector<4x8x128xf32>
    %c2_350 = arith.constant 2 : index
    %c3_351 = arith.constant 3 : index
    %c0_352 = arith.constant 0 : index
    %c0_353 = arith.constant 0 : index
    %c0_354 = arith.constant 0 : index
    %c0_355 = arith.constant 0 : index
    %247 = vector.load %arg2[%c2_350, %c3_351, %c0_352, %c0_353, %c0_354, %c0_355] : memref<4x8x4x1x8x128xf32, #tpu.memory_space<vmem>>, vector<1x1x4x1x8x128xf32>
    %248 = vector.shape_cast %247 : vector<1x1x4x1x8x128xf32> to vector<4x8x128xf32>
    %249 = arith.mulf %248, %149 : vector<4x8x128xf32>
    %250 = arith.addf %246, %249 : vector<4x8x128xf32>
    %c2_356 = arith.constant 2 : index
    %c4_357 = arith.constant 4 : index
    %c0_358 = arith.constant 0 : index
    %c0_359 = arith.constant 0 : index
    %c0_360 = arith.constant 0 : index
    %c0_361 = arith.constant 0 : index
    %251 = vector.load %arg2[%c2_356, %c4_357, %c0_358, %c0_359, %c0_360, %c0_361] : memref<4x8x4x1x8x128xf32, #tpu.memory_space<vmem>>, vector<1x1x4x1x8x128xf32>
    %252 = vector.shape_cast %251 : vector<1x1x4x1x8x128xf32> to vector<4x8x128xf32>
    %253 = arith.mulf %252, %150 : vector<4x8x128xf32>
    %254 = arith.addf %250, %253 : vector<4x8x128xf32>
    %c2_362 = arith.constant 2 : index
    %c5_363 = arith.constant 5 : index
    %c0_364 = arith.constant 0 : index
    %c0_365 = arith.constant 0 : index
    %c0_366 = arith.constant 0 : index
    %c0_367 = arith.constant 0 : index
    %255 = vector.load %arg2[%c2_362, %c5_363, %c0_364, %c0_365, %c0_366, %c0_367] : memref<4x8x4x1x8x128xf32, #tpu.memory_space<vmem>>, vector<1x1x4x1x8x128xf32>
    %256 = vector.shape_cast %255 : vector<1x1x4x1x8x128xf32> to vector<4x8x128xf32>
    %257 = arith.mulf %256, %151 : vector<4x8x128xf32>
    %258 = arith.addf %254, %257 : vector<4x8x128xf32>
    %c2_368 = arith.constant 2 : index
    %c6_369 = arith.constant 6 : index
    %c0_370 = arith.constant 0 : index
    %c0_371 = arith.constant 0 : index
    %c0_372 = arith.constant 0 : index
    %c0_373 = arith.constant 0 : index
    %259 = vector.load %arg2[%c2_368, %c6_369, %c0_370, %c0_371, %c0_372, %c0_373] : memref<4x8x4x1x8x128xf32, #tpu.memory_space<vmem>>, vector<1x1x4x1x8x128xf32>
    %260 = vector.shape_cast %259 : vector<1x1x4x1x8x128xf32> to vector<4x8x128xf32>
    %261 = arith.mulf %260, %152 : vector<4x8x128xf32>
    %262 = arith.addf %258, %261 : vector<4x8x128xf32>
    %c2_374 = arith.constant 2 : index
    %c7_375 = arith.constant 7 : index
    %c0_376 = arith.constant 0 : index
    %c0_377 = arith.constant 0 : index
    %c0_378 = arith.constant 0 : index
    %c0_379 = arith.constant 0 : index
    %263 = vector.load %arg2[%c2_374, %c7_375, %c0_376, %c0_377, %c0_378, %c0_379] : memref<4x8x4x1x8x128xf32, #tpu.memory_space<vmem>>, vector<1x1x4x1x8x128xf32>
    %264 = vector.shape_cast %263 : vector<1x1x4x1x8x128xf32> to vector<4x8x128xf32>
    %265 = arith.mulf %264, %153 : vector<4x8x128xf32>
    %266 = arith.addf %262, %265 : vector<4x8x128xf32>
    %cst_380 = arith.constant dense<0xFF800000> : vector<8x128xf32>
    %267 = vector.multi_reduction <maximumf>, %266, %cst_380 [0] : vector<4x8x128xf32> to vector<8x128xf32>
    %268 = vector.shape_cast %267 : vector<8x128xf32> to vector<1x8x128xf32>
    %269 = vector.broadcast %268 : vector<1x8x128xf32> to vector<4x8x128xf32>
    %270 = arith.subf %266, %269 : vector<4x8x128xf32>
    %271 = math.exp %270 : vector<4x8x128xf32>
    %cst_381 = arith.constant dense<0.000000e+00> : vector<8x128xf32>
    %272 = vector.multi_reduction <add>, %271, %cst_381 [0] : vector<4x8x128xf32> to vector<8x128xf32>
    %273 = vector.shape_cast %272 : vector<8x128xf32> to vector<1x8x128xf32>
    %274 = tpu.reciprocal %273 : vector<1x8x128xf32> -> vector<1x8x128xf32>
    %275 = vector.broadcast %274 : vector<1x8x128xf32> to vector<4x8x128xf32>
    %276 = arith.mulf %271, %275 : vector<4x8x128xf32>
    %c3_382 = arith.constant 3 : index
    %c0_383 = arith.constant 0 : index
    %c0_384 = arith.constant 0 : index
    %c0_385 = arith.constant 0 : index
    %c0_386 = arith.constant 0 : index
    %c0_387 = arith.constant 0 : index
    %277 = vector.load %arg2[%c3_382, %c0_383, %c0_384, %c0_385, %c0_386, %c0_387] : memref<4x8x4x1x8x128xf32, #tpu.memory_space<vmem>>, vector<1x1x4x1x8x128xf32>
    %278 = vector.shape_cast %277 : vector<1x1x4x1x8x128xf32> to vector<4x8x128xf32>
    %279 = arith.mulf %278, %146 : vector<4x8x128xf32>
    %c3_388 = arith.constant 3 : index
    %c1_389 = arith.constant 1 : index
    %c0_390 = arith.constant 0 : index
    %c0_391 = arith.constant 0 : index
    %c0_392 = arith.constant 0 : index
    %c0_393 = arith.constant 0 : index
    %280 = vector.load %arg2[%c3_388, %c1_389, %c0_390, %c0_391, %c0_392, %c0_393] : memref<4x8x4x1x8x128xf32, #tpu.memory_space<vmem>>, vector<1x1x4x1x8x128xf32>
    %281 = vector.shape_cast %280 : vector<1x1x4x1x8x128xf32> to vector<4x8x128xf32>
    %282 = arith.mulf %281, %147 : vector<4x8x128xf32>
    %283 = arith.addf %279, %282 : vector<4x8x128xf32>
    %c3_394 = arith.constant 3 : index
    %c2_395 = arith.constant 2 : index
    %c0_396 = arith.constant 0 : index
    %c0_397 = arith.constant 0 : index
    %c0_398 = arith.constant 0 : index
    %c0_399 = arith.constant 0 : index
    %284 = vector.load %arg2[%c3_394, %c2_395, %c0_396, %c0_397, %c0_398, %c0_399] : memref<4x8x4x1x8x128xf32, #tpu.memory_space<vmem>>, vector<1x1x4x1x8x128xf32>
    %285 = vector.shape_cast %284 : vector<1x1x4x1x8x128xf32> to vector<4x8x128xf32>
    %286 = arith.mulf %285, %148 : vector<4x8x128xf32>
    %287 = arith.addf %283, %286 : vector<4x8x128xf32>
    %c3_400 = arith.constant 3 : index
    %c3_401 = arith.constant 3 : index
    %c0_402 = arith.constant 0 : index
    %c0_403 = arith.constant 0 : index
    %c0_404 = arith.constant 0 : index
    %c0_405 = arith.constant 0 : index
    %288 = vector.load %arg2[%c3_400, %c3_401, %c0_402, %c0_403, %c0_404, %c0_405] : memref<4x8x4x1x8x128xf32, #tpu.memory_space<vmem>>, vector<1x1x4x1x8x128xf32>
    %289 = vector.shape_cast %288 : vector<1x1x4x1x8x128xf32> to vector<4x8x128xf32>
    %290 = arith.mulf %289, %149 : vector<4x8x128xf32>
    %291 = arith.addf %287, %290 : vector<4x8x128xf32>
    %c3_406 = arith.constant 3 : index
    %c4_407 = arith.constant 4 : index
    %c0_408 = arith.constant 0 : index
    %c0_409 = arith.constant 0 : index
    %c0_410 = arith.constant 0 : index
    %c0_411 = arith.constant 0 : index
    %292 = vector.load %arg2[%c3_406, %c4_407, %c0_408, %c0_409, %c0_410, %c0_411] : memref<4x8x4x1x8x128xf32, #tpu.memory_space<vmem>>, vector<1x1x4x1x8x128xf32>
    %293 = vector.shape_cast %292 : vector<1x1x4x1x8x128xf32> to vector<4x8x128xf32>
    %294 = arith.mulf %293, %150 : vector<4x8x128xf32>
    %295 = arith.addf %291, %294 : vector<4x8x128xf32>
    %c3_412 = arith.constant 3 : index
    %c5_413 = arith.constant 5 : index
    %c0_414 = arith.constant 0 : index
    %c0_415 = arith.constant 0 : index
    %c0_416 = arith.constant 0 : index
    %c0_417 = arith.constant 0 : index
    %296 = vector.load %arg2[%c3_412, %c5_413, %c0_414, %c0_415, %c0_416, %c0_417] : memref<4x8x4x1x8x128xf32, #tpu.memory_space<vmem>>, vector<1x1x4x1x8x128xf32>
    %297 = vector.shape_cast %296 : vector<1x1x4x1x8x128xf32> to vector<4x8x128xf32>
    %298 = arith.mulf %297, %151 : vector<4x8x128xf32>
    %299 = arith.addf %295, %298 : vector<4x8x128xf32>
    %c3_418 = arith.constant 3 : index
    %c6_419 = arith.constant 6 : index
    %c0_420 = arith.constant 0 : index
    %c0_421 = arith.constant 0 : index
    %c0_422 = arith.constant 0 : index
    %c0_423 = arith.constant 0 : index
    %300 = vector.load %arg2[%c3_418, %c6_419, %c0_420, %c0_421, %c0_422, %c0_423] : memref<4x8x4x1x8x128xf32, #tpu.memory_space<vmem>>, vector<1x1x4x1x8x128xf32>
    %301 = vector.shape_cast %300 : vector<1x1x4x1x8x128xf32> to vector<4x8x128xf32>
    %302 = arith.mulf %301, %152 : vector<4x8x128xf32>
    %303 = arith.addf %299, %302 : vector<4x8x128xf32>
    %c3_424 = arith.constant 3 : index
    %c7_425 = arith.constant 7 : index
    %c0_426 = arith.constant 0 : index
    %c0_427 = arith.constant 0 : index
    %c0_428 = arith.constant 0 : index
    %c0_429 = arith.constant 0 : index
    %304 = vector.load %arg2[%c3_424, %c7_425, %c0_426, %c0_427, %c0_428, %c0_429] : memref<4x8x4x1x8x128xf32, #tpu.memory_space<vmem>>, vector<1x1x4x1x8x128xf32>
    %305 = vector.shape_cast %304 : vector<1x1x4x1x8x128xf32> to vector<4x8x128xf32>
    %306 = arith.mulf %305, %153 : vector<4x8x128xf32>
    %307 = arith.addf %303, %306 : vector<4x8x128xf32>
    %cst_430 = arith.constant dense<0xFF800000> : vector<8x128xf32>
    %308 = vector.multi_reduction <maximumf>, %307, %cst_430 [0] : vector<4x8x128xf32> to vector<8x128xf32>
    %309 = vector.shape_cast %308 : vector<8x128xf32> to vector<1x8x128xf32>
    %310 = vector.broadcast %309 : vector<1x8x128xf32> to vector<4x8x128xf32>
    %311 = arith.subf %307, %310 : vector<4x8x128xf32>
    %312 = math.exp %311 : vector<4x8x128xf32>
    %cst_431 = arith.constant dense<0.000000e+00> : vector<8x128xf32>
    %313 = vector.multi_reduction <add>, %312, %cst_431 [0] : vector<4x8x128xf32> to vector<8x128xf32>
    %314 = vector.shape_cast %313 : vector<8x128xf32> to vector<1x8x128xf32>
    %315 = tpu.reciprocal %314 : vector<1x8x128xf32> -> vector<1x8x128xf32>
    %316 = vector.broadcast %315 : vector<1x8x128xf32> to vector<4x8x128xf32>
    %317 = arith.mulf %312, %316 : vector<4x8x128xf32>
    %c0_432 = arith.constant 0 : index
    %c0_433 = arith.constant 0 : index
    %c0_434 = arith.constant 0 : index
    %c0_435 = arith.constant 0 : index
    %c0_436 = arith.constant 0 : index
    %318 = vector.load %arg1[%c0_432, %c0_433, %c0_434, %c0_435, %c0_436] : memref<1x8x4x8x128xf32, #tpu.memory_space<vmem>>, vector<1x1x4x8x128xf32>
    %319 = vector.shape_cast %318 : vector<1x1x4x8x128xf32> to vector<4x8x128xf32>
    %c0_437 = arith.constant 0 : index
    %c0_438 = arith.constant 0 : index
    %c0_439 = arith.constant 0 : index
    %c0_440 = arith.constant 0 : index
    %c0_441 = arith.constant 0 : index
    %c0_442 = arith.constant 0 : index
    %320 = vector.load %arg2[%c0_437, %c0_438, %c0_439, %c0_440, %c0_441, %c0_442] : memref<4x8x4x1x8x128xf32, #tpu.memory_space<vmem>>, vector<1x1x4x1x8x128xf32>
    %321 = vector.shape_cast %320 : vector<1x1x4x1x8x128xf32> to vector<4x8x128xf32>
    %322 = arith.mulf %321, %194 : vector<4x8x128xf32>
    %323 = arith.addf %319, %322 : vector<4x8x128xf32>
    %c1_443 = arith.constant 1 : index
    %c0_444 = arith.constant 0 : index
    %c0_445 = arith.constant 0 : index
    %c0_446 = arith.constant 0 : index
    %c0_447 = arith.constant 0 : index
    %c0_448 = arith.constant 0 : index
    %324 = vector.load %arg2[%c1_443, %c0_444, %c0_445, %c0_446, %c0_447, %c0_448] : memref<4x8x4x1x8x128xf32, #tpu.memory_space<vmem>>, vector<1x1x4x1x8x128xf32>
    %325 = vector.shape_cast %324 : vector<1x1x4x1x8x128xf32> to vector<4x8x128xf32>
    %326 = arith.mulf %325, %235 : vector<4x8x128xf32>
    %327 = arith.addf %323, %326 : vector<4x8x128xf32>
    %c2_449 = arith.constant 2 : index
    %c0_450 = arith.constant 0 : index
    %c0_451 = arith.constant 0 : index
    %c0_452 = arith.constant 0 : index
    %c0_453 = arith.constant 0 : index
    %c0_454 = arith.constant 0 : index
    %328 = vector.load %arg2[%c2_449, %c0_450, %c0_451, %c0_452, %c0_453, %c0_454] : memref<4x8x4x1x8x128xf32, #tpu.memory_space<vmem>>, vector<1x1x4x1x8x128xf32>
    %329 = vector.shape_cast %328 : vector<1x1x4x1x8x128xf32> to vector<4x8x128xf32>
    %330 = arith.mulf %329, %276 : vector<4x8x128xf32>
    %331 = arith.addf %327, %330 : vector<4x8x128xf32>
    %c3_455 = arith.constant 3 : index
    %c0_456 = arith.constant 0 : index
    %c0_457 = arith.constant 0 : index
    %c0_458 = arith.constant 0 : index
    %c0_459 = arith.constant 0 : index
    %c0_460 = arith.constant 0 : index
    %332 = vector.load %arg2[%c3_455, %c0_456, %c0_457, %c0_458, %c0_459, %c0_460] : memref<4x8x4x1x8x128xf32, #tpu.memory_space<vmem>>, vector<1x1x4x1x8x128xf32>
    %333 = vector.shape_cast %332 : vector<1x1x4x1x8x128xf32> to vector<4x8x128xf32>
    %334 = arith.mulf %333, %317 : vector<4x8x128xf32>
    %335 = arith.addf %331, %334 : vector<4x8x128xf32>
    %c0_461 = arith.constant 0 : index
    %c1_462 = arith.constant 1 : index
    %c0_463 = arith.constant 0 : index
    %c0_464 = arith.constant 0 : index
    %c0_465 = arith.constant 0 : index
    %336 = vector.load %arg1[%c0_461, %c1_462, %c0_463, %c0_464, %c0_465] : memref<1x8x4x8x128xf32, #tpu.memory_space<vmem>>, vector<1x1x4x8x128xf32>
    %337 = vector.shape_cast %336 : vector<1x1x4x8x128xf32> to vector<4x8x128xf32>
    %c0_466 = arith.constant 0 : index
    %c1_467 = arith.constant 1 : index
    %c0_468 = arith.constant 0 : index
    %c0_469 = arith.constant 0 : index
    %c0_470 = arith.constant 0 : index
    %c0_471 = arith.constant 0 : index
    %338 = vector.load %arg2[%c0_466, %c1_467, %c0_468, %c0_469, %c0_470, %c0_471] : memref<4x8x4x1x8x128xf32, #tpu.memory_space<vmem>>, vector<1x1x4x1x8x128xf32>
    %339 = vector.shape_cast %338 : vector<1x1x4x1x8x128xf32> to vector<4x8x128xf32>
    %340 = arith.mulf %339, %194 : vector<4x8x128xf32>
    %341 = arith.addf %337, %340 : vector<4x8x128xf32>
    %c1_472 = arith.constant 1 : index
    %c1_473 = arith.constant 1 : index
    %c0_474 = arith.constant 0 : index
    %c0_475 = arith.constant 0 : index
    %c0_476 = arith.constant 0 : index
    %c0_477 = arith.constant 0 : index
    %342 = vector.load %arg2[%c1_472, %c1_473, %c0_474, %c0_475, %c0_476, %c0_477] : memref<4x8x4x1x8x128xf32, #tpu.memory_space<vmem>>, vector<1x1x4x1x8x128xf32>
    %343 = vector.shape_cast %342 : vector<1x1x4x1x8x128xf32> to vector<4x8x128xf32>
    %344 = arith.mulf %343, %235 : vector<4x8x128xf32>
    %345 = arith.addf %341, %344 : vector<4x8x128xf32>
    %c2_478 = arith.constant 2 : index
    %c1_479 = arith.constant 1 : index
    %c0_480 = arith.constant 0 : index
    %c0_481 = arith.constant 0 : index
    %c0_482 = arith.constant 0 : index
    %c0_483 = arith.constant 0 : index
    %346 = vector.load %arg2[%c2_478, %c1_479, %c0_480, %c0_481, %c0_482, %c0_483] : memref<4x8x4x1x8x128xf32, #tpu.memory_space<vmem>>, vector<1x1x4x1x8x128xf32>
    %347 = vector.shape_cast %346 : vector<1x1x4x1x8x128xf32> to vector<4x8x128xf32>
    %348 = arith.mulf %347, %276 : vector<4x8x128xf32>
    %349 = arith.addf %345, %348 : vector<4x8x128xf32>
    %c3_484 = arith.constant 3 : index
    %c1_485 = arith.constant 1 : index
    %c0_486 = arith.constant 0 : index
    %c0_487 = arith.constant 0 : index
    %c0_488 = arith.constant 0 : index
    %c0_489 = arith.constant 0 : index
    %350 = vector.load %arg2[%c3_484, %c1_485, %c0_486, %c0_487, %c0_488, %c0_489] : memref<4x8x4x1x8x128xf32, #tpu.memory_space<vmem>>, vector<1x1x4x1x8x128xf32>
    %351 = vector.shape_cast %350 : vector<1x1x4x1x8x128xf32> to vector<4x8x128xf32>
    %352 = arith.mulf %351, %317 : vector<4x8x128xf32>
    %353 = arith.addf %349, %352 : vector<4x8x128xf32>
    %c0_490 = arith.constant 0 : index
    %c2_491 = arith.constant 2 : index
    %c0_492 = arith.constant 0 : index
    %c0_493 = arith.constant 0 : index
    %c0_494 = arith.constant 0 : index
    %354 = vector.load %arg1[%c0_490, %c2_491, %c0_492, %c0_493, %c0_494] : memref<1x8x4x8x128xf32, #tpu.memory_space<vmem>>, vector<1x1x4x8x128xf32>
    %355 = vector.shape_cast %354 : vector<1x1x4x8x128xf32> to vector<4x8x128xf32>
    %c0_495 = arith.constant 0 : index
    %c2_496 = arith.constant 2 : index
    %c0_497 = arith.constant 0 : index
    %c0_498 = arith.constant 0 : index
    %c0_499 = arith.constant 0 : index
    %c0_500 = arith.constant 0 : index
    %356 = vector.load %arg2[%c0_495, %c2_496, %c0_497, %c0_498, %c0_499, %c0_500] : memref<4x8x4x1x8x128xf32, #tpu.memory_space<vmem>>, vector<1x1x4x1x8x128xf32>
    %357 = vector.shape_cast %356 : vector<1x1x4x1x8x128xf32> to vector<4x8x128xf32>
    %358 = arith.mulf %357, %194 : vector<4x8x128xf32>
    %359 = arith.addf %355, %358 : vector<4x8x128xf32>
    %c1_501 = arith.constant 1 : index
    %c2_502 = arith.constant 2 : index
    %c0_503 = arith.constant 0 : index
    %c0_504 = arith.constant 0 : index
    %c0_505 = arith.constant 0 : index
    %c0_506 = arith.constant 0 : index
    %360 = vector.load %arg2[%c1_501, %c2_502, %c0_503, %c0_504, %c0_505, %c0_506] : memref<4x8x4x1x8x128xf32, #tpu.memory_space<vmem>>, vector<1x1x4x1x8x128xf32>
    %361 = vector.shape_cast %360 : vector<1x1x4x1x8x128xf32> to vector<4x8x128xf32>
    %362 = arith.mulf %361, %235 : vector<4x8x128xf32>
    %363 = arith.addf %359, %362 : vector<4x8x128xf32>
    %c2_507 = arith.constant 2 : index
    %c2_508 = arith.constant 2 : index
    %c0_509 = arith.constant 0 : index
    %c0_510 = arith.constant 0 : index
    %c0_511 = arith.constant 0 : index
    %c0_512 = arith.constant 0 : index
    %364 = vector.load %arg2[%c2_507, %c2_508, %c0_509, %c0_510, %c0_511, %c0_512] : memref<4x8x4x1x8x128xf32, #tpu.memory_space<vmem>>, vector<1x1x4x1x8x128xf32>
    %365 = vector.shape_cast %364 : vector<1x1x4x1x8x128xf32> to vector<4x8x128xf32>
    %366 = arith.mulf %365, %276 : vector<4x8x128xf32>
    %367 = arith.addf %363, %366 : vector<4x8x128xf32>
    %c3_513 = arith.constant 3 : index
    %c2_514 = arith.constant 2 : index
    %c0_515 = arith.constant 0 : index
    %c0_516 = arith.constant 0 : index
    %c0_517 = arith.constant 0 : index
    %c0_518 = arith.constant 0 : index
    %368 = vector.load %arg2[%c3_513, %c2_514, %c0_515, %c0_516, %c0_517, %c0_518] : memref<4x8x4x1x8x128xf32, #tpu.memory_space<vmem>>, vector<1x1x4x1x8x128xf32>
    %369 = vector.shape_cast %368 : vector<1x1x4x1x8x128xf32> to vector<4x8x128xf32>
    %370 = arith.mulf %369, %317 : vector<4x8x128xf32>
    %371 = arith.addf %367, %370 : vector<4x8x128xf32>
    %c0_519 = arith.constant 0 : index
    %c3_520 = arith.constant 3 : index
    %c0_521 = arith.constant 0 : index
    %c0_522 = arith.constant 0 : index
    %c0_523 = arith.constant 0 : index
    %372 = vector.load %arg1[%c0_519, %c3_520, %c0_521, %c0_522, %c0_523] : memref<1x8x4x8x128xf32, #tpu.memory_space<vmem>>, vector<1x1x4x8x128xf32>
    %373 = vector.shape_cast %372 : vector<1x1x4x8x128xf32> to vector<4x8x128xf32>
    %c0_524 = arith.constant 0 : index
    %c3_525 = arith.constant 3 : index
    %c0_526 = arith.constant 0 : index
    %c0_527 = arith.constant 0 : index
    %c0_528 = arith.constant 0 : index
    %c0_529 = arith.constant 0 : index
    %374 = vector.load %arg2[%c0_524, %c3_525, %c0_526, %c0_527, %c0_528, %c0_529] : memref<4x8x4x1x8x128xf32, #tpu.memory_space<vmem>>, vector<1x1x4x1x8x128xf32>
    %375 = vector.shape_cast %374 : vector<1x1x4x1x8x128xf32> to vector<4x8x128xf32>
    %376 = arith.mulf %375, %194 : vector<4x8x128xf32>
    %377 = arith.addf %373, %376 : vector<4x8x128xf32>
    %c1_530 = arith.constant 1 : index
    %c3_531 = arith.constant 3 : index
    %c0_532 = arith.constant 0 : index
    %c0_533 = arith.constant 0 : index
    %c0_534 = arith.constant 0 : index
    %c0_535 = arith.constant 0 : index
    %378 = vector.load %arg2[%c1_530, %c3_531, %c0_532, %c0_533, %c0_534, %c0_535] : memref<4x8x4x1x8x128xf32, #tpu.memory_space<vmem>>, vector<1x1x4x1x8x128xf32>
    %379 = vector.shape_cast %378 : vector<1x1x4x1x8x128xf32> to vector<4x8x128xf32>
    %380 = arith.mulf %379, %235 : vector<4x8x128xf32>
    %381 = arith.addf %377, %380 : vector<4x8x128xf32>
    %c2_536 = arith.constant 2 : index
    %c3_537 = arith.constant 3 : index
    %c0_538 = arith.constant 0 : index
    %c0_539 = arith.constant 0 : index
    %c0_540 = arith.constant 0 : index
    %c0_541 = arith.constant 0 : index
    %382 = vector.load %arg2[%c2_536, %c3_537, %c0_538, %c0_539, %c0_540, %c0_541] : memref<4x8x4x1x8x128xf32, #tpu.memory_space<vmem>>, vector<1x1x4x1x8x128xf32>
    %383 = vector.shape_cast %382 : vector<1x1x4x1x8x128xf32> to vector<4x8x128xf32>
    %384 = arith.mulf %383, %276 : vector<4x8x128xf32>
    %385 = arith.addf %381, %384 : vector<4x8x128xf32>
    %c3_542 = arith.constant 3 : index
    %c3_543 = arith.constant 3 : index
    %c0_544 = arith.constant 0 : index
    %c0_545 = arith.constant 0 : index
    %c0_546 = arith.constant 0 : index
    %c0_547 = arith.constant 0 : index
    %386 = vector.load %arg2[%c3_542, %c3_543, %c0_544, %c0_545, %c0_546, %c0_547] : memref<4x8x4x1x8x128xf32, #tpu.memory_space<vmem>>, vector<1x1x4x1x8x128xf32>
    %387 = vector.shape_cast %386 : vector<1x1x4x1x8x128xf32> to vector<4x8x128xf32>
    %388 = arith.mulf %387, %317 : vector<4x8x128xf32>
    %389 = arith.addf %385, %388 : vector<4x8x128xf32>
    %c0_548 = arith.constant 0 : index
    %c4_549 = arith.constant 4 : index
    %c0_550 = arith.constant 0 : index
    %c0_551 = arith.constant 0 : index
    %c0_552 = arith.constant 0 : index
    %390 = vector.load %arg1[%c0_548, %c4_549, %c0_550, %c0_551, %c0_552] : memref<1x8x4x8x128xf32, #tpu.memory_space<vmem>>, vector<1x1x4x8x128xf32>
    %391 = vector.shape_cast %390 : vector<1x1x4x8x128xf32> to vector<4x8x128xf32>
    %c0_553 = arith.constant 0 : index
    %c4_554 = arith.constant 4 : index
    %c0_555 = arith.constant 0 : index
    %c0_556 = arith.constant 0 : index
    %c0_557 = arith.constant 0 : index
    %c0_558 = arith.constant 0 : index
    %392 = vector.load %arg2[%c0_553, %c4_554, %c0_555, %c0_556, %c0_557, %c0_558] : memref<4x8x4x1x8x128xf32, #tpu.memory_space<vmem>>, vector<1x1x4x1x8x128xf32>
    %393 = vector.shape_cast %392 : vector<1x1x4x1x8x128xf32> to vector<4x8x128xf32>
    %394 = arith.mulf %393, %194 : vector<4x8x128xf32>
    %395 = arith.addf %391, %394 : vector<4x8x128xf32>
    %c1_559 = arith.constant 1 : index
    %c4_560 = arith.constant 4 : index
    %c0_561 = arith.constant 0 : index
    %c0_562 = arith.constant 0 : index
    %c0_563 = arith.constant 0 : index
    %c0_564 = arith.constant 0 : index
    %396 = vector.load %arg2[%c1_559, %c4_560, %c0_561, %c0_562, %c0_563, %c0_564] : memref<4x8x4x1x8x128xf32, #tpu.memory_space<vmem>>, vector<1x1x4x1x8x128xf32>
    %397 = vector.shape_cast %396 : vector<1x1x4x1x8x128xf32> to vector<4x8x128xf32>
    %398 = arith.mulf %397, %235 : vector<4x8x128xf32>
    %399 = arith.addf %395, %398 : vector<4x8x128xf32>
    %c2_565 = arith.constant 2 : index
    %c4_566 = arith.constant 4 : index
    %c0_567 = arith.constant 0 : index
    %c0_568 = arith.constant 0 : index
    %c0_569 = arith.constant 0 : index
    %c0_570 = arith.constant 0 : index
    %400 = vector.load %arg2[%c2_565, %c4_566, %c0_567, %c0_568, %c0_569, %c0_570] : memref<4x8x4x1x8x128xf32, #tpu.memory_space<vmem>>, vector<1x1x4x1x8x128xf32>
    %401 = vector.shape_cast %400 : vector<1x1x4x1x8x128xf32> to vector<4x8x128xf32>
    %402 = arith.mulf %401, %276 : vector<4x8x128xf32>
    %403 = arith.addf %399, %402 : vector<4x8x128xf32>
    %c3_571 = arith.constant 3 : index
    %c4_572 = arith.constant 4 : index
    %c0_573 = arith.constant 0 : index
    %c0_574 = arith.constant 0 : index
    %c0_575 = arith.constant 0 : index
    %c0_576 = arith.constant 0 : index
    %404 = vector.load %arg2[%c3_571, %c4_572, %c0_573, %c0_574, %c0_575, %c0_576] : memref<4x8x4x1x8x128xf32, #tpu.memory_space<vmem>>, vector<1x1x4x1x8x128xf32>
    %405 = vector.shape_cast %404 : vector<1x1x4x1x8x128xf32> to vector<4x8x128xf32>
    %406 = arith.mulf %405, %317 : vector<4x8x128xf32>
    %407 = arith.addf %403, %406 : vector<4x8x128xf32>
    %c0_577 = arith.constant 0 : index
    %c5_578 = arith.constant 5 : index
    %c0_579 = arith.constant 0 : index
    %c0_580 = arith.constant 0 : index
    %c0_581 = arith.constant 0 : index
    %408 = vector.load %arg1[%c0_577, %c5_578, %c0_579, %c0_580, %c0_581] : memref<1x8x4x8x128xf32, #tpu.memory_space<vmem>>, vector<1x1x4x8x128xf32>
    %409 = vector.shape_cast %408 : vector<1x1x4x8x128xf32> to vector<4x8x128xf32>
    %c0_582 = arith.constant 0 : index
    %c5_583 = arith.constant 5 : index
    %c0_584 = arith.constant 0 : index
    %c0_585 = arith.constant 0 : index
    %c0_586 = arith.constant 0 : index
    %c0_587 = arith.constant 0 : index
    %410 = vector.load %arg2[%c0_582, %c5_583, %c0_584, %c0_585, %c0_586, %c0_587] : memref<4x8x4x1x8x128xf32, #tpu.memory_space<vmem>>, vector<1x1x4x1x8x128xf32>
    %411 = vector.shape_cast %410 : vector<1x1x4x1x8x128xf32> to vector<4x8x128xf32>
    %412 = arith.mulf %411, %194 : vector<4x8x128xf32>
    %413 = arith.addf %409, %412 : vector<4x8x128xf32>
    %c1_588 = arith.constant 1 : index
    %c5_589 = arith.constant 5 : index
    %c0_590 = arith.constant 0 : index
    %c0_591 = arith.constant 0 : index
    %c0_592 = arith.constant 0 : index
    %c0_593 = arith.constant 0 : index
    %414 = vector.load %arg2[%c1_588, %c5_589, %c0_590, %c0_591, %c0_592, %c0_593] : memref<4x8x4x1x8x128xf32, #tpu.memory_space<vmem>>, vector<1x1x4x1x8x128xf32>
    %415 = vector.shape_cast %414 : vector<1x1x4x1x8x128xf32> to vector<4x8x128xf32>
    %416 = arith.mulf %415, %235 : vector<4x8x128xf32>
    %417 = arith.addf %413, %416 : vector<4x8x128xf32>
    %c2_594 = arith.constant 2 : index
    %c5_595 = arith.constant 5 : index
    %c0_596 = arith.constant 0 : index
    %c0_597 = arith.constant 0 : index
    %c0_598 = arith.constant 0 : index
    %c0_599 = arith.constant 0 : index
    %418 = vector.load %arg2[%c2_594, %c5_595, %c0_596, %c0_597, %c0_598, %c0_599] : memref<4x8x4x1x8x128xf32, #tpu.memory_space<vmem>>, vector<1x1x4x1x8x128xf32>
    %419 = vector.shape_cast %418 : vector<1x1x4x1x8x128xf32> to vector<4x8x128xf32>
    %420 = arith.mulf %419, %276 : vector<4x8x128xf32>
    %421 = arith.addf %417, %420 : vector<4x8x128xf32>
    %c3_600 = arith.constant 3 : index
    %c5_601 = arith.constant 5 : index
    %c0_602 = arith.constant 0 : index
    %c0_603 = arith.constant 0 : index
    %c0_604 = arith.constant 0 : index
    %c0_605 = arith.constant 0 : index
    %422 = vector.load %arg2[%c3_600, %c5_601, %c0_602, %c0_603, %c0_604, %c0_605] : memref<4x8x4x1x8x128xf32, #tpu.memory_space<vmem>>, vector<1x1x4x1x8x128xf32>
    %423 = vector.shape_cast %422 : vector<1x1x4x1x8x128xf32> to vector<4x8x128xf32>
    %424 = arith.mulf %423, %317 : vector<4x8x128xf32>
    %425 = arith.addf %421, %424 : vector<4x8x128xf32>
    %c0_606 = arith.constant 0 : index
    %c6_607 = arith.constant 6 : index
    %c0_608 = arith.constant 0 : index
    %c0_609 = arith.constant 0 : index
    %c0_610 = arith.constant 0 : index
    %426 = vector.load %arg1[%c0_606, %c6_607, %c0_608, %c0_609, %c0_610] : memref<1x8x4x8x128xf32, #tpu.memory_space<vmem>>, vector<1x1x4x8x128xf32>
    %427 = vector.shape_cast %426 : vector<1x1x4x8x128xf32> to vector<4x8x128xf32>
    %c0_611 = arith.constant 0 : index
    %c6_612 = arith.constant 6 : index
    %c0_613 = arith.constant 0 : index
    %c0_614 = arith.constant 0 : index
    %c0_615 = arith.constant 0 : index
    %c0_616 = arith.constant 0 : index
    %428 = vector.load %arg2[%c0_611, %c6_612, %c0_613, %c0_614, %c0_615, %c0_616] : memref<4x8x4x1x8x128xf32, #tpu.memory_space<vmem>>, vector<1x1x4x1x8x128xf32>
    %429 = vector.shape_cast %428 : vector<1x1x4x1x8x128xf32> to vector<4x8x128xf32>
    %430 = arith.mulf %429, %194 : vector<4x8x128xf32>
    %431 = arith.addf %427, %430 : vector<4x8x128xf32>
    %c1_617 = arith.constant 1 : index
    %c6_618 = arith.constant 6 : index
    %c0_619 = arith.constant 0 : index
    %c0_620 = arith.constant 0 : index
    %c0_621 = arith.constant 0 : index
    %c0_622 = arith.constant 0 : index
    %432 = vector.load %arg2[%c1_617, %c6_618, %c0_619, %c0_620, %c0_621, %c0_622] : memref<4x8x4x1x8x128xf32, #tpu.memory_space<vmem>>, vector<1x1x4x1x8x128xf32>
    %433 = vector.shape_cast %432 : vector<1x1x4x1x8x128xf32> to vector<4x8x128xf32>
    %434 = arith.mulf %433, %235 : vector<4x8x128xf32>
    %435 = arith.addf %431, %434 : vector<4x8x128xf32>
    %c2_623 = arith.constant 2 : index
    %c6_624 = arith.constant 6 : index
    %c0_625 = arith.constant 0 : index
    %c0_626 = arith.constant 0 : index
    %c0_627 = arith.constant 0 : index
    %c0_628 = arith.constant 0 : index
    %436 = vector.load %arg2[%c2_623, %c6_624, %c0_625, %c0_626, %c0_627, %c0_628] : memref<4x8x4x1x8x128xf32, #tpu.memory_space<vmem>>, vector<1x1x4x1x8x128xf32>
    %437 = vector.shape_cast %436 : vector<1x1x4x1x8x128xf32> to vector<4x8x128xf32>
    %438 = arith.mulf %437, %276 : vector<4x8x128xf32>
    %439 = arith.addf %435, %438 : vector<4x8x128xf32>
    %c3_629 = arith.constant 3 : index
    %c6_630 = arith.constant 6 : index
    %c0_631 = arith.constant 0 : index
    %c0_632 = arith.constant 0 : index
    %c0_633 = arith.constant 0 : index
    %c0_634 = arith.constant 0 : index
    %440 = vector.load %arg2[%c3_629, %c6_630, %c0_631, %c0_632, %c0_633, %c0_634] : memref<4x8x4x1x8x128xf32, #tpu.memory_space<vmem>>, vector<1x1x4x1x8x128xf32>
    %441 = vector.shape_cast %440 : vector<1x1x4x1x8x128xf32> to vector<4x8x128xf32>
    %442 = arith.mulf %441, %317 : vector<4x8x128xf32>
    %443 = arith.addf %439, %442 : vector<4x8x128xf32>
    %c0_635 = arith.constant 0 : index
    %c7_636 = arith.constant 7 : index
    %c0_637 = arith.constant 0 : index
    %c0_638 = arith.constant 0 : index
    %c0_639 = arith.constant 0 : index
    %444 = vector.load %arg1[%c0_635, %c7_636, %c0_637, %c0_638, %c0_639] : memref<1x8x4x8x128xf32, #tpu.memory_space<vmem>>, vector<1x1x4x8x128xf32>
    %445 = vector.shape_cast %444 : vector<1x1x4x8x128xf32> to vector<4x8x128xf32>
    %c0_640 = arith.constant 0 : index
    %c7_641 = arith.constant 7 : index
    %c0_642 = arith.constant 0 : index
    %c0_643 = arith.constant 0 : index
    %c0_644 = arith.constant 0 : index
    %c0_645 = arith.constant 0 : index
    %446 = vector.load %arg2[%c0_640, %c7_641, %c0_642, %c0_643, %c0_644, %c0_645] : memref<4x8x4x1x8x128xf32, #tpu.memory_space<vmem>>, vector<1x1x4x1x8x128xf32>
    %447 = vector.shape_cast %446 : vector<1x1x4x1x8x128xf32> to vector<4x8x128xf32>
    %448 = arith.mulf %447, %194 : vector<4x8x128xf32>
    %449 = arith.addf %445, %448 : vector<4x8x128xf32>
    %c1_646 = arith.constant 1 : index
    %c7_647 = arith.constant 7 : index
    %c0_648 = arith.constant 0 : index
    %c0_649 = arith.constant 0 : index
    %c0_650 = arith.constant 0 : index
    %c0_651 = arith.constant 0 : index
    %450 = vector.load %arg2[%c1_646, %c7_647, %c0_648, %c0_649, %c0_650, %c0_651] : memref<4x8x4x1x8x128xf32, #tpu.memory_space<vmem>>, vector<1x1x4x1x8x128xf32>
    %451 = vector.shape_cast %450 : vector<1x1x4x1x8x128xf32> to vector<4x8x128xf32>
    %452 = arith.mulf %451, %235 : vector<4x8x128xf32>
    %453 = arith.addf %449, %452 : vector<4x8x128xf32>
    %c2_652 = arith.constant 2 : index
    %c7_653 = arith.constant 7 : index
    %c0_654 = arith.constant 0 : index
    %c0_655 = arith.constant 0 : index
    %c0_656 = arith.constant 0 : index
    %c0_657 = arith.constant 0 : index
    %454 = vector.load %arg2[%c2_652, %c7_653, %c0_654, %c0_655, %c0_656, %c0_657] : memref<4x8x4x1x8x128xf32, #tpu.memory_space<vmem>>, vector<1x1x4x1x8x128xf32>
    %455 = vector.shape_cast %454 : vector<1x1x4x1x8x128xf32> to vector<4x8x128xf32>
    %456 = arith.mulf %455, %276 : vector<4x8x128xf32>
    %457 = arith.addf %453, %456 : vector<4x8x128xf32>
    %c3_658 = arith.constant 3 : index
    %c7_659 = arith.constant 7 : index
    %c0_660 = arith.constant 0 : index
    %c0_661 = arith.constant 0 : index
    %c0_662 = arith.constant 0 : index
    %c0_663 = arith.constant 0 : index
    %458 = vector.load %arg2[%c3_658, %c7_659, %c0_660, %c0_661, %c0_662, %c0_663] : memref<4x8x4x1x8x128xf32, #tpu.memory_space<vmem>>, vector<1x1x4x1x8x128xf32>
    %459 = vector.shape_cast %458 : vector<1x1x4x1x8x128xf32> to vector<4x8x128xf32>
    %460 = arith.mulf %459, %317 : vector<4x8x128xf32>
    %461 = arith.addf %457, %460 : vector<4x8x128xf32>
    %462 = arith.mulf %335, %335 : vector<4x8x128xf32>
    %463 = arith.mulf %353, %353 : vector<4x8x128xf32>
    %464 = arith.addf %462, %463 : vector<4x8x128xf32>
    %465 = arith.mulf %371, %371 : vector<4x8x128xf32>
    %466 = arith.addf %464, %465 : vector<4x8x128xf32>
    %467 = arith.mulf %389, %389 : vector<4x8x128xf32>
    %468 = arith.addf %466, %467 : vector<4x8x128xf32>
    %469 = arith.mulf %407, %407 : vector<4x8x128xf32>
    %470 = arith.addf %468, %469 : vector<4x8x128xf32>
    %471 = arith.mulf %425, %425 : vector<4x8x128xf32>
    %472 = arith.addf %470, %471 : vector<4x8x128xf32>
    %473 = arith.mulf %443, %443 : vector<4x8x128xf32>
    %474 = arith.addf %472, %473 : vector<4x8x128xf32>
    %475 = arith.mulf %461, %461 : vector<4x8x128xf32>
    %476 = arith.addf %474, %475 : vector<4x8x128xf32>
    %cst_664 = arith.constant 1.000000e-24 : f32
    %477 = vector.broadcast %cst_664 : f32 to vector<4x8x128xf32>
    %478 = arith.maximumf %476, %477 : vector<4x8x128xf32>
    %479 = math.rsqrt %478 : vector<4x8x128xf32>
    %480 = arith.mulf %335, %479 : vector<4x8x128xf32>
    %481 = arith.mulf %353, %479 : vector<4x8x128xf32>
    %482 = arith.mulf %371, %479 : vector<4x8x128xf32>
    %483 = arith.mulf %389, %479 : vector<4x8x128xf32>
    %484 = arith.mulf %407, %479 : vector<4x8x128xf32>
    %485 = arith.mulf %425, %479 : vector<4x8x128xf32>
    %486 = arith.mulf %443, %479 : vector<4x8x128xf32>
    %487 = arith.mulf %461, %479 : vector<4x8x128xf32>
    %c0_665 = arith.constant 0 : index
    %c0_666 = arith.constant 0 : index
    %c0_667 = arith.constant 0 : index
    %c0_668 = arith.constant 0 : index
    %c0_669 = arith.constant 0 : index
    %c0_670 = arith.constant 0 : index
    %488 = vector.load %arg2[%c0_665, %c0_666, %c0_667, %c0_668, %c0_669, %c0_670] : memref<4x8x4x1x8x128xf32, #tpu.memory_space<vmem>>, vector<1x1x4x1x8x128xf32>
    %489 = vector.shape_cast %488 : vector<1x1x4x1x8x128xf32> to vector<4x8x128xf32>
    %490 = arith.mulf %489, %480 : vector<4x8x128xf32>
    %c0_671 = arith.constant 0 : index
    %c1_672 = arith.constant 1 : index
    %c0_673 = arith.constant 0 : index
    %c0_674 = arith.constant 0 : index
    %c0_675 = arith.constant 0 : index
    %c0_676 = arith.constant 0 : index
    %491 = vector.load %arg2[%c0_671, %c1_672, %c0_673, %c0_674, %c0_675, %c0_676] : memref<4x8x4x1x8x128xf32, #tpu.memory_space<vmem>>, vector<1x1x4x1x8x128xf32>
    %492 = vector.shape_cast %491 : vector<1x1x4x1x8x128xf32> to vector<4x8x128xf32>
    %493 = arith.mulf %492, %481 : vector<4x8x128xf32>
    %494 = arith.addf %490, %493 : vector<4x8x128xf32>
    %c0_677 = arith.constant 0 : index
    %c2_678 = arith.constant 2 : index
    %c0_679 = arith.constant 0 : index
    %c0_680 = arith.constant 0 : index
    %c0_681 = arith.constant 0 : index
    %c0_682 = arith.constant 0 : index
    %495 = vector.load %arg2[%c0_677, %c2_678, %c0_679, %c0_680, %c0_681, %c0_682] : memref<4x8x4x1x8x128xf32, #tpu.memory_space<vmem>>, vector<1x1x4x1x8x128xf32>
    %496 = vector.shape_cast %495 : vector<1x1x4x1x8x128xf32> to vector<4x8x128xf32>
    %497 = arith.mulf %496, %482 : vector<4x8x128xf32>
    %498 = arith.addf %494, %497 : vector<4x8x128xf32>
    %c0_683 = arith.constant 0 : index
    %c3_684 = arith.constant 3 : index
    %c0_685 = arith.constant 0 : index
    %c0_686 = arith.constant 0 : index
    %c0_687 = arith.constant 0 : index
    %c0_688 = arith.constant 0 : index
    %499 = vector.load %arg2[%c0_683, %c3_684, %c0_685, %c0_686, %c0_687, %c0_688] : memref<4x8x4x1x8x128xf32, #tpu.memory_space<vmem>>, vector<1x1x4x1x8x128xf32>
    %500 = vector.shape_cast %499 : vector<1x1x4x1x8x128xf32> to vector<4x8x128xf32>
    %501 = arith.mulf %500, %483 : vector<4x8x128xf32>
    %502 = arith.addf %498, %501 : vector<4x8x128xf32>
    %c0_689 = arith.constant 0 : index
    %c4_690 = arith.constant 4 : index
    %c0_691 = arith.constant 0 : index
    %c0_692 = arith.constant 0 : index
    %c0_693 = arith.constant 0 : index
    %c0_694 = arith.constant 0 : index
    %503 = vector.load %arg2[%c0_689, %c4_690, %c0_691, %c0_692, %c0_693, %c0_694] : memref<4x8x4x1x8x128xf32, #tpu.memory_space<vmem>>, vector<1x1x4x1x8x128xf32>
    %504 = vector.shape_cast %503 : vector<1x1x4x1x8x128xf32> to vector<4x8x128xf32>
    %505 = arith.mulf %504, %484 : vector<4x8x128xf32>
    %506 = arith.addf %502, %505 : vector<4x8x128xf32>
    %c0_695 = arith.constant 0 : index
    %c5_696 = arith.constant 5 : index
    %c0_697 = arith.constant 0 : index
    %c0_698 = arith.constant 0 : index
    %c0_699 = arith.constant 0 : index
    %c0_700 = arith.constant 0 : index
    %507 = vector.load %arg2[%c0_695, %c5_696, %c0_697, %c0_698, %c0_699, %c0_700] : memref<4x8x4x1x8x128xf32, #tpu.memory_space<vmem>>, vector<1x1x4x1x8x128xf32>
    %508 = vector.shape_cast %507 : vector<1x1x4x1x8x128xf32> to vector<4x8x128xf32>
    %509 = arith.mulf %508, %485 : vector<4x8x128xf32>
    %510 = arith.addf %506, %509 : vector<4x8x128xf32>
    %c0_701 = arith.constant 0 : index
    %c6_702 = arith.constant 6 : index
    %c0_703 = arith.constant 0 : index
    %c0_704 = arith.constant 0 : index
    %c0_705 = arith.constant 0 : index
    %c0_706 = arith.constant 0 : index
    %511 = vector.load %arg2[%c0_701, %c6_702, %c0_703, %c0_704, %c0_705, %c0_706] : memref<4x8x4x1x8x128xf32, #tpu.memory_space<vmem>>, vector<1x1x4x1x8x128xf32>
    %512 = vector.shape_cast %511 : vector<1x1x4x1x8x128xf32> to vector<4x8x128xf32>
    %513 = arith.mulf %512, %486 : vector<4x8x128xf32>
    %514 = arith.addf %510, %513 : vector<4x8x128xf32>
    %c0_707 = arith.constant 0 : index
    %c7_708 = arith.constant 7 : index
    %c0_709 = arith.constant 0 : index
    %c0_710 = arith.constant 0 : index
    %c0_711 = arith.constant 0 : index
    %c0_712 = arith.constant 0 : index
    %515 = vector.load %arg2[%c0_707, %c7_708, %c0_709, %c0_710, %c0_711, %c0_712] : memref<4x8x4x1x8x128xf32, #tpu.memory_space<vmem>>, vector<1x1x4x1x8x128xf32>
    %516 = vector.shape_cast %515 : vector<1x1x4x1x8x128xf32> to vector<4x8x128xf32>
    %517 = arith.mulf %516, %487 : vector<4x8x128xf32>
    %518 = arith.addf %514, %517 : vector<4x8x128xf32>
    %cst_713 = arith.constant dense<0xFF800000> : vector<8x128xf32>
    %519 = vector.multi_reduction <maximumf>, %518, %cst_713 [0] : vector<4x8x128xf32> to vector<8x128xf32>
    %520 = vector.shape_cast %519 : vector<8x128xf32> to vector<1x8x128xf32>
    %521 = vector.broadcast %520 : vector<1x8x128xf32> to vector<4x8x128xf32>
    %522 = arith.subf %518, %521 : vector<4x8x128xf32>
    %523 = math.exp %522 : vector<4x8x128xf32>
    %cst_714 = arith.constant dense<0.000000e+00> : vector<8x128xf32>
    %524 = vector.multi_reduction <add>, %523, %cst_714 [0] : vector<4x8x128xf32> to vector<8x128xf32>
    %525 = vector.shape_cast %524 : vector<8x128xf32> to vector<1x8x128xf32>
    %526 = tpu.reciprocal %525 : vector<1x8x128xf32> -> vector<1x8x128xf32>
    %527 = vector.broadcast %526 : vector<1x8x128xf32> to vector<4x8x128xf32>
    %528 = arith.mulf %523, %527 : vector<4x8x128xf32>
    %c1_715 = arith.constant 1 : index
    %c0_716 = arith.constant 0 : index
    %c0_717 = arith.constant 0 : index
    %c0_718 = arith.constant 0 : index
    %c0_719 = arith.constant 0 : index
    %c0_720 = arith.constant 0 : index
    %529 = vector.load %arg2[%c1_715, %c0_716, %c0_717, %c0_718, %c0_719, %c0_720] : memref<4x8x4x1x8x128xf32, #tpu.memory_space<vmem>>, vector<1x1x4x1x8x128xf32>
    %530 = vector.shape_cast %529 : vector<1x1x4x1x8x128xf32> to vector<4x8x128xf32>
    %531 = arith.mulf %530, %480 : vector<4x8x128xf32>
    %c1_721 = arith.constant 1 : index
    %c1_722 = arith.constant 1 : index
    %c0_723 = arith.constant 0 : index
    %c0_724 = arith.constant 0 : index
    %c0_725 = arith.constant 0 : index
    %c0_726 = arith.constant 0 : index
    %532 = vector.load %arg2[%c1_721, %c1_722, %c0_723, %c0_724, %c0_725, %c0_726] : memref<4x8x4x1x8x128xf32, #tpu.memory_space<vmem>>, vector<1x1x4x1x8x128xf32>
    %533 = vector.shape_cast %532 : vector<1x1x4x1x8x128xf32> to vector<4x8x128xf32>
    %534 = arith.mulf %533, %481 : vector<4x8x128xf32>
    %535 = arith.addf %531, %534 : vector<4x8x128xf32>
    %c1_727 = arith.constant 1 : index
    %c2_728 = arith.constant 2 : index
    %c0_729 = arith.constant 0 : index
    %c0_730 = arith.constant 0 : index
    %c0_731 = arith.constant 0 : index
    %c0_732 = arith.constant 0 : index
    %536 = vector.load %arg2[%c1_727, %c2_728, %c0_729, %c0_730, %c0_731, %c0_732] : memref<4x8x4x1x8x128xf32, #tpu.memory_space<vmem>>, vector<1x1x4x1x8x128xf32>
    %537 = vector.shape_cast %536 : vector<1x1x4x1x8x128xf32> to vector<4x8x128xf32>
    %538 = arith.mulf %537, %482 : vector<4x8x128xf32>
    %539 = arith.addf %535, %538 : vector<4x8x128xf32>
    %c1_733 = arith.constant 1 : index
    %c3_734 = arith.constant 3 : index
    %c0_735 = arith.constant 0 : index
    %c0_736 = arith.constant 0 : index
    %c0_737 = arith.constant 0 : index
    %c0_738 = arith.constant 0 : index
    %540 = vector.load %arg2[%c1_733, %c3_734, %c0_735, %c0_736, %c0_737, %c0_738] : memref<4x8x4x1x8x128xf32, #tpu.memory_space<vmem>>, vector<1x1x4x1x8x128xf32>
    %541 = vector.shape_cast %540 : vector<1x1x4x1x8x128xf32> to vector<4x8x128xf32>
    %542 = arith.mulf %541, %483 : vector<4x8x128xf32>
    %543 = arith.addf %539, %542 : vector<4x8x128xf32>
    %c1_739 = arith.constant 1 : index
    %c4_740 = arith.constant 4 : index
    %c0_741 = arith.constant 0 : index
    %c0_742 = arith.constant 0 : index
    %c0_743 = arith.constant 0 : index
    %c0_744 = arith.constant 0 : index
    %544 = vector.load %arg2[%c1_739, %c4_740, %c0_741, %c0_742, %c0_743, %c0_744] : memref<4x8x4x1x8x128xf32, #tpu.memory_space<vmem>>, vector<1x1x4x1x8x128xf32>
    %545 = vector.shape_cast %544 : vector<1x1x4x1x8x128xf32> to vector<4x8x128xf32>
    %546 = arith.mulf %545, %484 : vector<4x8x128xf32>
    %547 = arith.addf %543, %546 : vector<4x8x128xf32>
    %c1_745 = arith.constant 1 : index
    %c5_746 = arith.constant 5 : index
    %c0_747 = arith.constant 0 : index
    %c0_748 = arith.constant 0 : index
    %c0_749 = arith.constant 0 : index
    %c0_750 = arith.constant 0 : index
    %548 = vector.load %arg2[%c1_745, %c5_746, %c0_747, %c0_748, %c0_749, %c0_750] : memref<4x8x4x1x8x128xf32, #tpu.memory_space<vmem>>, vector<1x1x4x1x8x128xf32>
    %549 = vector.shape_cast %548 : vector<1x1x4x1x8x128xf32> to vector<4x8x128xf32>
    %550 = arith.mulf %549, %485 : vector<4x8x128xf32>
    %551 = arith.addf %547, %550 : vector<4x8x128xf32>
    %c1_751 = arith.constant 1 : index
    %c6_752 = arith.constant 6 : index
    %c0_753 = arith.constant 0 : index
    %c0_754 = arith.constant 0 : index
    %c0_755 = arith.constant 0 : index
    %c0_756 = arith.constant 0 : index
    %552 = vector.load %arg2[%c1_751, %c6_752, %c0_753, %c0_754, %c0_755, %c0_756] : memref<4x8x4x1x8x128xf32, #tpu.memory_space<vmem>>, vector<1x1x4x1x8x128xf32>
    %553 = vector.shape_cast %552 : vector<1x1x4x1x8x128xf32> to vector<4x8x128xf32>
    %554 = arith.mulf %553, %486 : vector<4x8x128xf32>
    %555 = arith.addf %551, %554 : vector<4x8x128xf32>
    %c1_757 = arith.constant 1 : index
    %c7_758 = arith.constant 7 : index
    %c0_759 = arith.constant 0 : index
    %c0_760 = arith.constant 0 : index
    %c0_761 = arith.constant 0 : index
    %c0_762 = arith.constant 0 : index
    %556 = vector.load %arg2[%c1_757, %c7_758, %c0_759, %c0_760, %c0_761, %c0_762] : memref<4x8x4x1x8x128xf32, #tpu.memory_space<vmem>>, vector<1x1x4x1x8x128xf32>
    %557 = vector.shape_cast %556 : vector<1x1x4x1x8x128xf32> to vector<4x8x128xf32>
    %558 = arith.mulf %557, %487 : vector<4x8x128xf32>
    %559 = arith.addf %555, %558 : vector<4x8x128xf32>
    %cst_763 = arith.constant dense<0xFF800000> : vector<8x128xf32>
    %560 = vector.multi_reduction <maximumf>, %559, %cst_763 [0] : vector<4x8x128xf32> to vector<8x128xf32>
    %561 = vector.shape_cast %560 : vector<8x128xf32> to vector<1x8x128xf32>
    %562 = vector.broadcast %561 : vector<1x8x128xf32> to vector<4x8x128xf32>
    %563 = arith.subf %559, %562 : vector<4x8x128xf32>
    %564 = math.exp %563 : vector<4x8x128xf32>
    %cst_764 = arith.constant dense<0.000000e+00> : vector<8x128xf32>
    %565 = vector.multi_reduction <add>, %564, %cst_764 [0] : vector<4x8x128xf32> to vector<8x128xf32>
    %566 = vector.shape_cast %565 : vector<8x128xf32> to vector<1x8x128xf32>
    %567 = tpu.reciprocal %566 : vector<1x8x128xf32> -> vector<1x8x128xf32>
    %568 = vector.broadcast %567 : vector<1x8x128xf32> to vector<4x8x128xf32>
    %569 = arith.mulf %564, %568 : vector<4x8x128xf32>
    %c2_765 = arith.constant 2 : index
    %c0_766 = arith.constant 0 : index
    %c0_767 = arith.constant 0 : index
    %c0_768 = arith.constant 0 : index
    %c0_769 = arith.constant 0 : index
    %c0_770 = arith.constant 0 : index
    %570 = vector.load %arg2[%c2_765, %c0_766, %c0_767, %c0_768, %c0_769, %c0_770] : memref<4x8x4x1x8x128xf32, #tpu.memory_space<vmem>>, vector<1x1x4x1x8x128xf32>
    %571 = vector.shape_cast %570 : vector<1x1x4x1x8x128xf32> to vector<4x8x128xf32>
    %572 = arith.mulf %571, %480 : vector<4x8x128xf32>
    %c2_771 = arith.constant 2 : index
    %c1_772 = arith.constant 1 : index
    %c0_773 = arith.constant 0 : index
    %c0_774 = arith.constant 0 : index
    %c0_775 = arith.constant 0 : index
    %c0_776 = arith.constant 0 : index
    %573 = vector.load %arg2[%c2_771, %c1_772, %c0_773, %c0_774, %c0_775, %c0_776] : memref<4x8x4x1x8x128xf32, #tpu.memory_space<vmem>>, vector<1x1x4x1x8x128xf32>
    %574 = vector.shape_cast %573 : vector<1x1x4x1x8x128xf32> to vector<4x8x128xf32>
    %575 = arith.mulf %574, %481 : vector<4x8x128xf32>
    %576 = arith.addf %572, %575 : vector<4x8x128xf32>
    %c2_777 = arith.constant 2 : index
    %c2_778 = arith.constant 2 : index
    %c0_779 = arith.constant 0 : index
    %c0_780 = arith.constant 0 : index
    %c0_781 = arith.constant 0 : index
    %c0_782 = arith.constant 0 : index
    %577 = vector.load %arg2[%c2_777, %c2_778, %c0_779, %c0_780, %c0_781, %c0_782] : memref<4x8x4x1x8x128xf32, #tpu.memory_space<vmem>>, vector<1x1x4x1x8x128xf32>
    %578 = vector.shape_cast %577 : vector<1x1x4x1x8x128xf32> to vector<4x8x128xf32>
    %579 = arith.mulf %578, %482 : vector<4x8x128xf32>
    %580 = arith.addf %576, %579 : vector<4x8x128xf32>
    %c2_783 = arith.constant 2 : index
    %c3_784 = arith.constant 3 : index
    %c0_785 = arith.constant 0 : index
    %c0_786 = arith.constant 0 : index
    %c0_787 = arith.constant 0 : index
    %c0_788 = arith.constant 0 : index
    %581 = vector.load %arg2[%c2_783, %c3_784, %c0_785, %c0_786, %c0_787, %c0_788] : memref<4x8x4x1x8x128xf32, #tpu.memory_space<vmem>>, vector<1x1x4x1x8x128xf32>
    %582 = vector.shape_cast %581 : vector<1x1x4x1x8x128xf32> to vector<4x8x128xf32>
    %583 = arith.mulf %582, %483 : vector<4x8x128xf32>
    %584 = arith.addf %580, %583 : vector<4x8x128xf32>
    %c2_789 = arith.constant 2 : index
    %c4_790 = arith.constant 4 : index
    %c0_791 = arith.constant 0 : index
    %c0_792 = arith.constant 0 : index
    %c0_793 = arith.constant 0 : index
    %c0_794 = arith.constant 0 : index
    %585 = vector.load %arg2[%c2_789, %c4_790, %c0_791, %c0_792, %c0_793, %c0_794] : memref<4x8x4x1x8x128xf32, #tpu.memory_space<vmem>>, vector<1x1x4x1x8x128xf32>
    %586 = vector.shape_cast %585 : vector<1x1x4x1x8x128xf32> to vector<4x8x128xf32>
    %587 = arith.mulf %586, %484 : vector<4x8x128xf32>
    %588 = arith.addf %584, %587 : vector<4x8x128xf32>
    %c2_795 = arith.constant 2 : index
    %c5_796 = arith.constant 5 : index
    %c0_797 = arith.constant 0 : index
    %c0_798 = arith.constant 0 : index
    %c0_799 = arith.constant 0 : index
    %c0_800 = arith.constant 0 : index
    %589 = vector.load %arg2[%c2_795, %c5_796, %c0_797, %c0_798, %c0_799, %c0_800] : memref<4x8x4x1x8x128xf32, #tpu.memory_space<vmem>>, vector<1x1x4x1x8x128xf32>
    %590 = vector.shape_cast %589 : vector<1x1x4x1x8x128xf32> to vector<4x8x128xf32>
    %591 = arith.mulf %590, %485 : vector<4x8x128xf32>
    %592 = arith.addf %588, %591 : vector<4x8x128xf32>
    %c2_801 = arith.constant 2 : index
    %c6_802 = arith.constant 6 : index
    %c0_803 = arith.constant 0 : index
    %c0_804 = arith.constant 0 : index
    %c0_805 = arith.constant 0 : index
    %c0_806 = arith.constant 0 : index
    %593 = vector.load %arg2[%c2_801, %c6_802, %c0_803, %c0_804, %c0_805, %c0_806] : memref<4x8x4x1x8x128xf32, #tpu.memory_space<vmem>>, vector<1x1x4x1x8x128xf32>
    %594 = vector.shape_cast %593 : vector<1x1x4x1x8x128xf32> to vector<4x8x128xf32>
    %595 = arith.mulf %594, %486 : vector<4x8x128xf32>
    %596 = arith.addf %592, %595 : vector<4x8x128xf32>
    %c2_807 = arith.constant 2 : index
    %c7_808 = arith.constant 7 : index
    %c0_809 = arith.constant 0 : index
    %c0_810 = arith.constant 0 : index
    %c0_811 = arith.constant 0 : index
    %c0_812 = arith.constant 0 : index
    %597 = vector.load %arg2[%c2_807, %c7_808, %c0_809, %c0_810, %c0_811, %c0_812] : memref<4x8x4x1x8x128xf32, #tpu.memory_space<vmem>>, vector<1x1x4x1x8x128xf32>
    %598 = vector.shape_cast %597 : vector<1x1x4x1x8x128xf32> to vector<4x8x128xf32>
    %599 = arith.mulf %598, %487 : vector<4x8x128xf32>
    %600 = arith.addf %596, %599 : vector<4x8x128xf32>
    %cst_813 = arith.constant dense<0xFF800000> : vector<8x128xf32>
    %601 = vector.multi_reduction <maximumf>, %600, %cst_813 [0] : vector<4x8x128xf32> to vector<8x128xf32>
    %602 = vector.shape_cast %601 : vector<8x128xf32> to vector<1x8x128xf32>
    %603 = vector.broadcast %602 : vector<1x8x128xf32> to vector<4x8x128xf32>
    %604 = arith.subf %600, %603 : vector<4x8x128xf32>
    %605 = math.exp %604 : vector<4x8x128xf32>
    %cst_814 = arith.constant dense<0.000000e+00> : vector<8x128xf32>
    %606 = vector.multi_reduction <add>, %605, %cst_814 [0] : vector<4x8x128xf32> to vector<8x128xf32>
    %607 = vector.shape_cast %606 : vector<8x128xf32> to vector<1x8x128xf32>
    %608 = tpu.reciprocal %607 : vector<1x8x128xf32> -> vector<1x8x128xf32>
    %609 = vector.broadcast %608 : vector<1x8x128xf32> to vector<4x8x128xf32>
    %610 = arith.mulf %605, %609 : vector<4x8x128xf32>
    %c3_815 = arith.constant 3 : index
    %c0_816 = arith.constant 0 : index
    %c0_817 = arith.constant 0 : index
    %c0_818 = arith.constant 0 : index
    %c0_819 = arith.constant 0 : index
    %c0_820 = arith.constant 0 : index
    %611 = vector.load %arg2[%c3_815, %c0_816, %c0_817, %c0_818, %c0_819, %c0_820] : memref<4x8x4x1x8x128xf32, #tpu.memory_space<vmem>>, vector<1x1x4x1x8x128xf32>
    %612 = vector.shape_cast %611 : vector<1x1x4x1x8x128xf32> to vector<4x8x128xf32>
    %613 = arith.mulf %612, %480 : vector<4x8x128xf32>
    %c3_821 = arith.constant 3 : index
    %c1_822 = arith.constant 1 : index
    %c0_823 = arith.constant 0 : index
    %c0_824 = arith.constant 0 : index
    %c0_825 = arith.constant 0 : index
    %c0_826 = arith.constant 0 : index
    %614 = vector.load %arg2[%c3_821, %c1_822, %c0_823, %c0_824, %c0_825, %c0_826] : memref<4x8x4x1x8x128xf32, #tpu.memory_space<vmem>>, vector<1x1x4x1x8x128xf32>
    %615 = vector.shape_cast %614 : vector<1x1x4x1x8x128xf32> to vector<4x8x128xf32>
    %616 = arith.mulf %615, %481 : vector<4x8x128xf32>
    %617 = arith.addf %613, %616 : vector<4x8x128xf32>
    %c3_827 = arith.constant 3 : index
    %c2_828 = arith.constant 2 : index
    %c0_829 = arith.constant 0 : index
    %c0_830 = arith.constant 0 : index
    %c0_831 = arith.constant 0 : index
    %c0_832 = arith.constant 0 : index
    %618 = vector.load %arg2[%c3_827, %c2_828, %c0_829, %c0_830, %c0_831, %c0_832] : memref<4x8x4x1x8x128xf32, #tpu.memory_space<vmem>>, vector<1x1x4x1x8x128xf32>
    %619 = vector.shape_cast %618 : vector<1x1x4x1x8x128xf32> to vector<4x8x128xf32>
    %620 = arith.mulf %619, %482 : vector<4x8x128xf32>
    %621 = arith.addf %617, %620 : vector<4x8x128xf32>
    %c3_833 = arith.constant 3 : index
    %c3_834 = arith.constant 3 : index
    %c0_835 = arith.constant 0 : index
    %c0_836 = arith.constant 0 : index
    %c0_837 = arith.constant 0 : index
    %c0_838 = arith.constant 0 : index
    %622 = vector.load %arg2[%c3_833, %c3_834, %c0_835, %c0_836, %c0_837, %c0_838] : memref<4x8x4x1x8x128xf32, #tpu.memory_space<vmem>>, vector<1x1x4x1x8x128xf32>
    %623 = vector.shape_cast %622 : vector<1x1x4x1x8x128xf32> to vector<4x8x128xf32>
    %624 = arith.mulf %623, %483 : vector<4x8x128xf32>
    %625 = arith.addf %621, %624 : vector<4x8x128xf32>
    %c3_839 = arith.constant 3 : index
    %c4_840 = arith.constant 4 : index
    %c0_841 = arith.constant 0 : index
    %c0_842 = arith.constant 0 : index
    %c0_843 = arith.constant 0 : index
    %c0_844 = arith.constant 0 : index
    %626 = vector.load %arg2[%c3_839, %c4_840, %c0_841, %c0_842, %c0_843, %c0_844] : memref<4x8x4x1x8x128xf32, #tpu.memory_space<vmem>>, vector<1x1x4x1x8x128xf32>
    %627 = vector.shape_cast %626 : vector<1x1x4x1x8x128xf32> to vector<4x8x128xf32>
    %628 = arith.mulf %627, %484 : vector<4x8x128xf32>
    %629 = arith.addf %625, %628 : vector<4x8x128xf32>
    %c3_845 = arith.constant 3 : index
    %c5_846 = arith.constant 5 : index
    %c0_847 = arith.constant 0 : index
    %c0_848 = arith.constant 0 : index
    %c0_849 = arith.constant 0 : index
    %c0_850 = arith.constant 0 : index
    %630 = vector.load %arg2[%c3_845, %c5_846, %c0_847, %c0_848, %c0_849, %c0_850] : memref<4x8x4x1x8x128xf32, #tpu.memory_space<vmem>>, vector<1x1x4x1x8x128xf32>
    %631 = vector.shape_cast %630 : vector<1x1x4x1x8x128xf32> to vector<4x8x128xf32>
    %632 = arith.mulf %631, %485 : vector<4x8x128xf32>
    %633 = arith.addf %629, %632 : vector<4x8x128xf32>
    %c3_851 = arith.constant 3 : index
    %c6_852 = arith.constant 6 : index
    %c0_853 = arith.constant 0 : index
    %c0_854 = arith.constant 0 : index
    %c0_855 = arith.constant 0 : index
    %c0_856 = arith.constant 0 : index
    %634 = vector.load %arg2[%c3_851, %c6_852, %c0_853, %c0_854, %c0_855, %c0_856] : memref<4x8x4x1x8x128xf32, #tpu.memory_space<vmem>>, vector<1x1x4x1x8x128xf32>
    %635 = vector.shape_cast %634 : vector<1x1x4x1x8x128xf32> to vector<4x8x128xf32>
    %636 = arith.mulf %635, %486 : vector<4x8x128xf32>
    %637 = arith.addf %633, %636 : vector<4x8x128xf32>
    %c3_857 = arith.constant 3 : index
    %c7_858 = arith.constant 7 : index
    %c0_859 = arith.constant 0 : index
    %c0_860 = arith.constant 0 : index
    %c0_861 = arith.constant 0 : index
    %c0_862 = arith.constant 0 : index
    %638 = vector.load %arg2[%c3_857, %c7_858, %c0_859, %c0_860, %c0_861, %c0_862] : memref<4x8x4x1x8x128xf32, #tpu.memory_space<vmem>>, vector<1x1x4x1x8x128xf32>
    %639 = vector.shape_cast %638 : vector<1x1x4x1x8x128xf32> to vector<4x8x128xf32>
    %640 = arith.mulf %639, %487 : vector<4x8x128xf32>
    %641 = arith.addf %637, %640 : vector<4x8x128xf32>
    %cst_863 = arith.constant dense<0xFF800000> : vector<8x128xf32>
    %642 = vector.multi_reduction <maximumf>, %641, %cst_863 [0] : vector<4x8x128xf32> to vector<8x128xf32>
    %643 = vector.shape_cast %642 : vector<8x128xf32> to vector<1x8x128xf32>
    %644 = vector.broadcast %643 : vector<1x8x128xf32> to vector<4x8x128xf32>
    %645 = arith.subf %641, %644 : vector<4x8x128xf32>
    %646 = math.exp %645 : vector<4x8x128xf32>
    %cst_864 = arith.constant dense<0.000000e+00> : vector<8x128xf32>
    %647 = vector.multi_reduction <add>, %646, %cst_864 [0] : vector<4x8x128xf32> to vector<8x128xf32>
    %648 = vector.shape_cast %647 : vector<8x128xf32> to vector<1x8x128xf32>
    %649 = tpu.reciprocal %648 : vector<1x8x128xf32> -> vector<1x8x128xf32>
    %650 = vector.broadcast %649 : vector<1x8x128xf32> to vector<4x8x128xf32>
    %651 = arith.mulf %646, %650 : vector<4x8x128xf32>
    %c0_865 = arith.constant 0 : index
    %c0_866 = arith.constant 0 : index
    %c0_867 = arith.constant 0 : index
    %c0_868 = arith.constant 0 : index
    %c0_869 = arith.constant 0 : index
    %652 = vector.load %arg1[%c0_865, %c0_866, %c0_867, %c0_868, %c0_869] : memref<1x8x4x8x128xf32, #tpu.memory_space<vmem>>, vector<1x1x4x8x128xf32>
    %653 = vector.shape_cast %652 : vector<1x1x4x8x128xf32> to vector<4x8x128xf32>
    %c0_870 = arith.constant 0 : index
    %c0_871 = arith.constant 0 : index
    %c0_872 = arith.constant 0 : index
    %c0_873 = arith.constant 0 : index
    %c0_874 = arith.constant 0 : index
    %c0_875 = arith.constant 0 : index
    %654 = vector.load %arg2[%c0_870, %c0_871, %c0_872, %c0_873, %c0_874, %c0_875] : memref<4x8x4x1x8x128xf32, #tpu.memory_space<vmem>>, vector<1x1x4x1x8x128xf32>
    %655 = vector.shape_cast %654 : vector<1x1x4x1x8x128xf32> to vector<4x8x128xf32>
    %656 = arith.mulf %655, %528 : vector<4x8x128xf32>
    %657 = arith.addf %653, %656 : vector<4x8x128xf32>
    %c1_876 = arith.constant 1 : index
    %c0_877 = arith.constant 0 : index
    %c0_878 = arith.constant 0 : index
    %c0_879 = arith.constant 0 : index
    %c0_880 = arith.constant 0 : index
    %c0_881 = arith.constant 0 : index
    %658 = vector.load %arg2[%c1_876, %c0_877, %c0_878, %c0_879, %c0_880, %c0_881] : memref<4x8x4x1x8x128xf32, #tpu.memory_space<vmem>>, vector<1x1x4x1x8x128xf32>
    %659 = vector.shape_cast %658 : vector<1x1x4x1x8x128xf32> to vector<4x8x128xf32>
    %660 = arith.mulf %659, %569 : vector<4x8x128xf32>
    %661 = arith.addf %657, %660 : vector<4x8x128xf32>
    %c2_882 = arith.constant 2 : index
    %c0_883 = arith.constant 0 : index
    %c0_884 = arith.constant 0 : index
    %c0_885 = arith.constant 0 : index
    %c0_886 = arith.constant 0 : index
    %c0_887 = arith.constant 0 : index
    %662 = vector.load %arg2[%c2_882, %c0_883, %c0_884, %c0_885, %c0_886, %c0_887] : memref<4x8x4x1x8x128xf32, #tpu.memory_space<vmem>>, vector<1x1x4x1x8x128xf32>
    %663 = vector.shape_cast %662 : vector<1x1x4x1x8x128xf32> to vector<4x8x128xf32>
    %664 = arith.mulf %663, %610 : vector<4x8x128xf32>
    %665 = arith.addf %661, %664 : vector<4x8x128xf32>
    %c3_888 = arith.constant 3 : index
    %c0_889 = arith.constant 0 : index
    %c0_890 = arith.constant 0 : index
    %c0_891 = arith.constant 0 : index
    %c0_892 = arith.constant 0 : index
    %c0_893 = arith.constant 0 : index
    %666 = vector.load %arg2[%c3_888, %c0_889, %c0_890, %c0_891, %c0_892, %c0_893] : memref<4x8x4x1x8x128xf32, #tpu.memory_space<vmem>>, vector<1x1x4x1x8x128xf32>
    %667 = vector.shape_cast %666 : vector<1x1x4x1x8x128xf32> to vector<4x8x128xf32>
    %668 = arith.mulf %667, %651 : vector<4x8x128xf32>
    %669 = arith.addf %665, %668 : vector<4x8x128xf32>
    %c0_894 = arith.constant 0 : index
    %c1_895 = arith.constant 1 : index
    %c0_896 = arith.constant 0 : index
    %c0_897 = arith.constant 0 : index
    %c0_898 = arith.constant 0 : index
    %670 = vector.load %arg1[%c0_894, %c1_895, %c0_896, %c0_897, %c0_898] : memref<1x8x4x8x128xf32, #tpu.memory_space<vmem>>, vector<1x1x4x8x128xf32>
    %671 = vector.shape_cast %670 : vector<1x1x4x8x128xf32> to vector<4x8x128xf32>
    %c0_899 = arith.constant 0 : index
    %c1_900 = arith.constant 1 : index
    %c0_901 = arith.constant 0 : index
    %c0_902 = arith.constant 0 : index
    %c0_903 = arith.constant 0 : index
    %c0_904 = arith.constant 0 : index
    %672 = vector.load %arg2[%c0_899, %c1_900, %c0_901, %c0_902, %c0_903, %c0_904] : memref<4x8x4x1x8x128xf32, #tpu.memory_space<vmem>>, vector<1x1x4x1x8x128xf32>
    %673 = vector.shape_cast %672 : vector<1x1x4x1x8x128xf32> to vector<4x8x128xf32>
    %674 = arith.mulf %673, %528 : vector<4x8x128xf32>
    %675 = arith.addf %671, %674 : vector<4x8x128xf32>
    %c1_905 = arith.constant 1 : index
    %c1_906 = arith.constant 1 : index
    %c0_907 = arith.constant 0 : index
    %c0_908 = arith.constant 0 : index
    %c0_909 = arith.constant 0 : index
    %c0_910 = arith.constant 0 : index
    %676 = vector.load %arg2[%c1_905, %c1_906, %c0_907, %c0_908, %c0_909, %c0_910] : memref<4x8x4x1x8x128xf32, #tpu.memory_space<vmem>>, vector<1x1x4x1x8x128xf32>
    %677 = vector.shape_cast %676 : vector<1x1x4x1x8x128xf32> to vector<4x8x128xf32>
    %678 = arith.mulf %677, %569 : vector<4x8x128xf32>
    %679 = arith.addf %675, %678 : vector<4x8x128xf32>
    %c2_911 = arith.constant 2 : index
    %c1_912 = arith.constant 1 : index
    %c0_913 = arith.constant 0 : index
    %c0_914 = arith.constant 0 : index
    %c0_915 = arith.constant 0 : index
    %c0_916 = arith.constant 0 : index
    %680 = vector.load %arg2[%c2_911, %c1_912, %c0_913, %c0_914, %c0_915, %c0_916] : memref<4x8x4x1x8x128xf32, #tpu.memory_space<vmem>>, vector<1x1x4x1x8x128xf32>
    %681 = vector.shape_cast %680 : vector<1x1x4x1x8x128xf32> to vector<4x8x128xf32>
    %682 = arith.mulf %681, %610 : vector<4x8x128xf32>
    %683 = arith.addf %679, %682 : vector<4x8x128xf32>
    %c3_917 = arith.constant 3 : index
    %c1_918 = arith.constant 1 : index
    %c0_919 = arith.constant 0 : index
    %c0_920 = arith.constant 0 : index
    %c0_921 = arith.constant 0 : index
    %c0_922 = arith.constant 0 : index
    %684 = vector.load %arg2[%c3_917, %c1_918, %c0_919, %c0_920, %c0_921, %c0_922] : memref<4x8x4x1x8x128xf32, #tpu.memory_space<vmem>>, vector<1x1x4x1x8x128xf32>
    %685 = vector.shape_cast %684 : vector<1x1x4x1x8x128xf32> to vector<4x8x128xf32>
    %686 = arith.mulf %685, %651 : vector<4x8x128xf32>
    %687 = arith.addf %683, %686 : vector<4x8x128xf32>
    %c0_923 = arith.constant 0 : index
    %c2_924 = arith.constant 2 : index
    %c0_925 = arith.constant 0 : index
    %c0_926 = arith.constant 0 : index
    %c0_927 = arith.constant 0 : index
    %688 = vector.load %arg1[%c0_923, %c2_924, %c0_925, %c0_926, %c0_927] : memref<1x8x4x8x128xf32, #tpu.memory_space<vmem>>, vector<1x1x4x8x128xf32>
    %689 = vector.shape_cast %688 : vector<1x1x4x8x128xf32> to vector<4x8x128xf32>
    %c0_928 = arith.constant 0 : index
    %c2_929 = arith.constant 2 : index
    %c0_930 = arith.constant 0 : index
    %c0_931 = arith.constant 0 : index
    %c0_932 = arith.constant 0 : index
    %c0_933 = arith.constant 0 : index
    %690 = vector.load %arg2[%c0_928, %c2_929, %c0_930, %c0_931, %c0_932, %c0_933] : memref<4x8x4x1x8x128xf32, #tpu.memory_space<vmem>>, vector<1x1x4x1x8x128xf32>
    %691 = vector.shape_cast %690 : vector<1x1x4x1x8x128xf32> to vector<4x8x128xf32>
    %692 = arith.mulf %691, %528 : vector<4x8x128xf32>
    %693 = arith.addf %689, %692 : vector<4x8x128xf32>
    %c1_934 = arith.constant 1 : index
    %c2_935 = arith.constant 2 : index
    %c0_936 = arith.constant 0 : index
    %c0_937 = arith.constant 0 : index
    %c0_938 = arith.constant 0 : index
    %c0_939 = arith.constant 0 : index
    %694 = vector.load %arg2[%c1_934, %c2_935, %c0_936, %c0_937, %c0_938, %c0_939] : memref<4x8x4x1x8x128xf32, #tpu.memory_space<vmem>>, vector<1x1x4x1x8x128xf32>
    %695 = vector.shape_cast %694 : vector<1x1x4x1x8x128xf32> to vector<4x8x128xf32>
    %696 = arith.mulf %695, %569 : vector<4x8x128xf32>
    %697 = arith.addf %693, %696 : vector<4x8x128xf32>
    %c2_940 = arith.constant 2 : index
    %c2_941 = arith.constant 2 : index
    %c0_942 = arith.constant 0 : index
    %c0_943 = arith.constant 0 : index
    %c0_944 = arith.constant 0 : index
    %c0_945 = arith.constant 0 : index
    %698 = vector.load %arg2[%c2_940, %c2_941, %c0_942, %c0_943, %c0_944, %c0_945] : memref<4x8x4x1x8x128xf32, #tpu.memory_space<vmem>>, vector<1x1x4x1x8x128xf32>
    %699 = vector.shape_cast %698 : vector<1x1x4x1x8x128xf32> to vector<4x8x128xf32>
    %700 = arith.mulf %699, %610 : vector<4x8x128xf32>
    %701 = arith.addf %697, %700 : vector<4x8x128xf32>
    %c3_946 = arith.constant 3 : index
    %c2_947 = arith.constant 2 : index
    %c0_948 = arith.constant 0 : index
    %c0_949 = arith.constant 0 : index
    %c0_950 = arith.constant 0 : index
    %c0_951 = arith.constant 0 : index
    %702 = vector.load %arg2[%c3_946, %c2_947, %c0_948, %c0_949, %c0_950, %c0_951] : memref<4x8x4x1x8x128xf32, #tpu.memory_space<vmem>>, vector<1x1x4x1x8x128xf32>
    %703 = vector.shape_cast %702 : vector<1x1x4x1x8x128xf32> to vector<4x8x128xf32>
    %704 = arith.mulf %703, %651 : vector<4x8x128xf32>
    %705 = arith.addf %701, %704 : vector<4x8x128xf32>
    %c0_952 = arith.constant 0 : index
    %c3_953 = arith.constant 3 : index
    %c0_954 = arith.constant 0 : index
    %c0_955 = arith.constant 0 : index
    %c0_956 = arith.constant 0 : index
    %706 = vector.load %arg1[%c0_952, %c3_953, %c0_954, %c0_955, %c0_956] : memref<1x8x4x8x128xf32, #tpu.memory_space<vmem>>, vector<1x1x4x8x128xf32>
    %707 = vector.shape_cast %706 : vector<1x1x4x8x128xf32> to vector<4x8x128xf32>
    %c0_957 = arith.constant 0 : index
    %c3_958 = arith.constant 3 : index
    %c0_959 = arith.constant 0 : index
    %c0_960 = arith.constant 0 : index
    %c0_961 = arith.constant 0 : index
    %c0_962 = arith.constant 0 : index
    %708 = vector.load %arg2[%c0_957, %c3_958, %c0_959, %c0_960, %c0_961, %c0_962] : memref<4x8x4x1x8x128xf32, #tpu.memory_space<vmem>>, vector<1x1x4x1x8x128xf32>
    %709 = vector.shape_cast %708 : vector<1x1x4x1x8x128xf32> to vector<4x8x128xf32>
    %710 = arith.mulf %709, %528 : vector<4x8x128xf32>
    %711 = arith.addf %707, %710 : vector<4x8x128xf32>
    %c1_963 = arith.constant 1 : index
    %c3_964 = arith.constant 3 : index
    %c0_965 = arith.constant 0 : index
    %c0_966 = arith.constant 0 : index
    %c0_967 = arith.constant 0 : index
    %c0_968 = arith.constant 0 : index
    %712 = vector.load %arg2[%c1_963, %c3_964, %c0_965, %c0_966, %c0_967, %c0_968] : memref<4x8x4x1x8x128xf32, #tpu.memory_space<vmem>>, vector<1x1x4x1x8x128xf32>
    %713 = vector.shape_cast %712 : vector<1x1x4x1x8x128xf32> to vector<4x8x128xf32>
    %714 = arith.mulf %713, %569 : vector<4x8x128xf32>
    %715 = arith.addf %711, %714 : vector<4x8x128xf32>
    %c2_969 = arith.constant 2 : index
    %c3_970 = arith.constant 3 : index
    %c0_971 = arith.constant 0 : index
    %c0_972 = arith.constant 0 : index
    %c0_973 = arith.constant 0 : index
    %c0_974 = arith.constant 0 : index
    %716 = vector.load %arg2[%c2_969, %c3_970, %c0_971, %c0_972, %c0_973, %c0_974] : memref<4x8x4x1x8x128xf32, #tpu.memory_space<vmem>>, vector<1x1x4x1x8x128xf32>
    %717 = vector.shape_cast %716 : vector<1x1x4x1x8x128xf32> to vector<4x8x128xf32>
    %718 = arith.mulf %717, %610 : vector<4x8x128xf32>
    %719 = arith.addf %715, %718 : vector<4x8x128xf32>
    %c3_975 = arith.constant 3 : index
    %c3_976 = arith.constant 3 : index
    %c0_977 = arith.constant 0 : index
    %c0_978 = arith.constant 0 : index
    %c0_979 = arith.constant 0 : index
    %c0_980 = arith.constant 0 : index
    %720 = vector.load %arg2[%c3_975, %c3_976, %c0_977, %c0_978, %c0_979, %c0_980] : memref<4x8x4x1x8x128xf32, #tpu.memory_space<vmem>>, vector<1x1x4x1x8x128xf32>
    %721 = vector.shape_cast %720 : vector<1x1x4x1x8x128xf32> to vector<4x8x128xf32>
    %722 = arith.mulf %721, %651 : vector<4x8x128xf32>
    %723 = arith.addf %719, %722 : vector<4x8x128xf32>
    %c0_981 = arith.constant 0 : index
    %c4_982 = arith.constant 4 : index
    %c0_983 = arith.constant 0 : index
    %c0_984 = arith.constant 0 : index
    %c0_985 = arith.constant 0 : index
    %724 = vector.load %arg1[%c0_981, %c4_982, %c0_983, %c0_984, %c0_985] : memref<1x8x4x8x128xf32, #tpu.memory_space<vmem>>, vector<1x1x4x8x128xf32>
    %725 = vector.shape_cast %724 : vector<1x1x4x8x128xf32> to vector<4x8x128xf32>
    %c0_986 = arith.constant 0 : index
    %c4_987 = arith.constant 4 : index
    %c0_988 = arith.constant 0 : index
    %c0_989 = arith.constant 0 : index
    %c0_990 = arith.constant 0 : index
    %c0_991 = arith.constant 0 : index
    %726 = vector.load %arg2[%c0_986, %c4_987, %c0_988, %c0_989, %c0_990, %c0_991] : memref<4x8x4x1x8x128xf32, #tpu.memory_space<vmem>>, vector<1x1x4x1x8x128xf32>
    %727 = vector.shape_cast %726 : vector<1x1x4x1x8x128xf32> to vector<4x8x128xf32>
    %728 = arith.mulf %727, %528 : vector<4x8x128xf32>
    %729 = arith.addf %725, %728 : vector<4x8x128xf32>
    %c1_992 = arith.constant 1 : index
    %c4_993 = arith.constant 4 : index
    %c0_994 = arith.constant 0 : index
    %c0_995 = arith.constant 0 : index
    %c0_996 = arith.constant 0 : index
    %c0_997 = arith.constant 0 : index
    %730 = vector.load %arg2[%c1_992, %c4_993, %c0_994, %c0_995, %c0_996, %c0_997] : memref<4x8x4x1x8x128xf32, #tpu.memory_space<vmem>>, vector<1x1x4x1x8x128xf32>
    %731 = vector.shape_cast %730 : vector<1x1x4x1x8x128xf32> to vector<4x8x128xf32>
    %732 = arith.mulf %731, %569 : vector<4x8x128xf32>
    %733 = arith.addf %729, %732 : vector<4x8x128xf32>
    %c2_998 = arith.constant 2 : index
    %c4_999 = arith.constant 4 : index
    %c0_1000 = arith.constant 0 : index
    %c0_1001 = arith.constant 0 : index
    %c0_1002 = arith.constant 0 : index
    %c0_1003 = arith.constant 0 : index
    %734 = vector.load %arg2[%c2_998, %c4_999, %c0_1000, %c0_1001, %c0_1002, %c0_1003] : memref<4x8x4x1x8x128xf32, #tpu.memory_space<vmem>>, vector<1x1x4x1x8x128xf32>
    %735 = vector.shape_cast %734 : vector<1x1x4x1x8x128xf32> to vector<4x8x128xf32>
    %736 = arith.mulf %735, %610 : vector<4x8x128xf32>
    %737 = arith.addf %733, %736 : vector<4x8x128xf32>
    %c3_1004 = arith.constant 3 : index
    %c4_1005 = arith.constant 4 : index
    %c0_1006 = arith.constant 0 : index
    %c0_1007 = arith.constant 0 : index
    %c0_1008 = arith.constant 0 : index
    %c0_1009 = arith.constant 0 : index
    %738 = vector.load %arg2[%c3_1004, %c4_1005, %c0_1006, %c0_1007, %c0_1008, %c0_1009] : memref<4x8x4x1x8x128xf32, #tpu.memory_space<vmem>>, vector<1x1x4x1x8x128xf32>
    %739 = vector.shape_cast %738 : vector<1x1x4x1x8x128xf32> to vector<4x8x128xf32>
    %740 = arith.mulf %739, %651 : vector<4x8x128xf32>
    %741 = arith.addf %737, %740 : vector<4x8x128xf32>
    %c0_1010 = arith.constant 0 : index
    %c5_1011 = arith.constant 5 : index
    %c0_1012 = arith.constant 0 : index
    %c0_1013 = arith.constant 0 : index
    %c0_1014 = arith.constant 0 : index
    %742 = vector.load %arg1[%c0_1010, %c5_1011, %c0_1012, %c0_1013, %c0_1014] : memref<1x8x4x8x128xf32, #tpu.memory_space<vmem>>, vector<1x1x4x8x128xf32>
    %743 = vector.shape_cast %742 : vector<1x1x4x8x128xf32> to vector<4x8x128xf32>
    %c0_1015 = arith.constant 0 : index
    %c5_1016 = arith.constant 5 : index
    %c0_1017 = arith.constant 0 : index
    %c0_1018 = arith.constant 0 : index
    %c0_1019 = arith.constant 0 : index
    %c0_1020 = arith.constant 0 : index
    %744 = vector.load %arg2[%c0_1015, %c5_1016, %c0_1017, %c0_1018, %c0_1019, %c0_1020] : memref<4x8x4x1x8x128xf32, #tpu.memory_space<vmem>>, vector<1x1x4x1x8x128xf32>
    %745 = vector.shape_cast %744 : vector<1x1x4x1x8x128xf32> to vector<4x8x128xf32>
    %746 = arith.mulf %745, %528 : vector<4x8x128xf32>
    %747 = arith.addf %743, %746 : vector<4x8x128xf32>
    %c1_1021 = arith.constant 1 : index
    %c5_1022 = arith.constant 5 : index
    %c0_1023 = arith.constant 0 : index
    %c0_1024 = arith.constant 0 : index
    %c0_1025 = arith.constant 0 : index
    %c0_1026 = arith.constant 0 : index
    %748 = vector.load %arg2[%c1_1021, %c5_1022, %c0_1023, %c0_1024, %c0_1025, %c0_1026] : memref<4x8x4x1x8x128xf32, #tpu.memory_space<vmem>>, vector<1x1x4x1x8x128xf32>
    %749 = vector.shape_cast %748 : vector<1x1x4x1x8x128xf32> to vector<4x8x128xf32>
    %750 = arith.mulf %749, %569 : vector<4x8x128xf32>
    %751 = arith.addf %747, %750 : vector<4x8x128xf32>
    %c2_1027 = arith.constant 2 : index
    %c5_1028 = arith.constant 5 : index
    %c0_1029 = arith.constant 0 : index
    %c0_1030 = arith.constant 0 : index
    %c0_1031 = arith.constant 0 : index
    %c0_1032 = arith.constant 0 : index
    %752 = vector.load %arg2[%c2_1027, %c5_1028, %c0_1029, %c0_1030, %c0_1031, %c0_1032] : memref<4x8x4x1x8x128xf32, #tpu.memory_space<vmem>>, vector<1x1x4x1x8x128xf32>
    %753 = vector.shape_cast %752 : vector<1x1x4x1x8x128xf32> to vector<4x8x128xf32>
    %754 = arith.mulf %753, %610 : vector<4x8x128xf32>
    %755 = arith.addf %751, %754 : vector<4x8x128xf32>
    %c3_1033 = arith.constant 3 : index
    %c5_1034 = arith.constant 5 : index
    %c0_1035 = arith.constant 0 : index
    %c0_1036 = arith.constant 0 : index
    %c0_1037 = arith.constant 0 : index
    %c0_1038 = arith.constant 0 : index
    %756 = vector.load %arg2[%c3_1033, %c5_1034, %c0_1035, %c0_1036, %c0_1037, %c0_1038] : memref<4x8x4x1x8x128xf32, #tpu.memory_space<vmem>>, vector<1x1x4x1x8x128xf32>
    %757 = vector.shape_cast %756 : vector<1x1x4x1x8x128xf32> to vector<4x8x128xf32>
    %758 = arith.mulf %757, %651 : vector<4x8x128xf32>
    %759 = arith.addf %755, %758 : vector<4x8x128xf32>
    %c0_1039 = arith.constant 0 : index
    %c6_1040 = arith.constant 6 : index
    %c0_1041 = arith.constant 0 : index
    %c0_1042 = arith.constant 0 : index
    %c0_1043 = arith.constant 0 : index
    %760 = vector.load %arg1[%c0_1039, %c6_1040, %c0_1041, %c0_1042, %c0_1043] : memref<1x8x4x8x128xf32, #tpu.memory_space<vmem>>, vector<1x1x4x8x128xf32>
    %761 = vector.shape_cast %760 : vector<1x1x4x8x128xf32> to vector<4x8x128xf32>
    %c0_1044 = arith.constant 0 : index
    %c6_1045 = arith.constant 6 : index
    %c0_1046 = arith.constant 0 : index
    %c0_1047 = arith.constant 0 : index
    %c0_1048 = arith.constant 0 : index
    %c0_1049 = arith.constant 0 : index
    %762 = vector.load %arg2[%c0_1044, %c6_1045, %c0_1046, %c0_1047, %c0_1048, %c0_1049] : memref<4x8x4x1x8x128xf32, #tpu.memory_space<vmem>>, vector<1x1x4x1x8x128xf32>
    %763 = vector.shape_cast %762 : vector<1x1x4x1x8x128xf32> to vector<4x8x128xf32>
    %764 = arith.mulf %763, %528 : vector<4x8x128xf32>
    %765 = arith.addf %761, %764 : vector<4x8x128xf32>
    %c1_1050 = arith.constant 1 : index
    %c6_1051 = arith.constant 6 : index
    %c0_1052 = arith.constant 0 : index
    %c0_1053 = arith.constant 0 : index
    %c0_1054 = arith.constant 0 : index
    %c0_1055 = arith.constant 0 : index
    %766 = vector.load %arg2[%c1_1050, %c6_1051, %c0_1052, %c0_1053, %c0_1054, %c0_1055] : memref<4x8x4x1x8x128xf32, #tpu.memory_space<vmem>>, vector<1x1x4x1x8x128xf32>
    %767 = vector.shape_cast %766 : vector<1x1x4x1x8x128xf32> to vector<4x8x128xf32>
    %768 = arith.mulf %767, %569 : vector<4x8x128xf32>
    %769 = arith.addf %765, %768 : vector<4x8x128xf32>
    %c2_1056 = arith.constant 2 : index
    %c6_1057 = arith.constant 6 : index
    %c0_1058 = arith.constant 0 : index
    %c0_1059 = arith.constant 0 : index
    %c0_1060 = arith.constant 0 : index
    %c0_1061 = arith.constant 0 : index
    %770 = vector.load %arg2[%c2_1056, %c6_1057, %c0_1058, %c0_1059, %c0_1060, %c0_1061] : memref<4x8x4x1x8x128xf32, #tpu.memory_space<vmem>>, vector<1x1x4x1x8x128xf32>
    %771 = vector.shape_cast %770 : vector<1x1x4x1x8x128xf32> to vector<4x8x128xf32>
    %772 = arith.mulf %771, %610 : vector<4x8x128xf32>
    %773 = arith.addf %769, %772 : vector<4x8x128xf32>
    %c3_1062 = arith.constant 3 : index
    %c6_1063 = arith.constant 6 : index
    %c0_1064 = arith.constant 0 : index
    %c0_1065 = arith.constant 0 : index
    %c0_1066 = arith.constant 0 : index
    %c0_1067 = arith.constant 0 : index
    %774 = vector.load %arg2[%c3_1062, %c6_1063, %c0_1064, %c0_1065, %c0_1066, %c0_1067] : memref<4x8x4x1x8x128xf32, #tpu.memory_space<vmem>>, vector<1x1x4x1x8x128xf32>
    %775 = vector.shape_cast %774 : vector<1x1x4x1x8x128xf32> to vector<4x8x128xf32>
    %776 = arith.mulf %775, %651 : vector<4x8x128xf32>
    %777 = arith.addf %773, %776 : vector<4x8x128xf32>
    %c0_1068 = arith.constant 0 : index
    %c7_1069 = arith.constant 7 : index
    %c0_1070 = arith.constant 0 : index
    %c0_1071 = arith.constant 0 : index
    %c0_1072 = arith.constant 0 : index
    %778 = vector.load %arg1[%c0_1068, %c7_1069, %c0_1070, %c0_1071, %c0_1072] : memref<1x8x4x8x128xf32, #tpu.memory_space<vmem>>, vector<1x1x4x8x128xf32>
    %779 = vector.shape_cast %778 : vector<1x1x4x8x128xf32> to vector<4x8x128xf32>
    %c0_1073 = arith.constant 0 : index
    %c7_1074 = arith.constant 7 : index
    %c0_1075 = arith.constant 0 : index
    %c0_1076 = arith.constant 0 : index
    %c0_1077 = arith.constant 0 : index
    %c0_1078 = arith.constant 0 : index
    %780 = vector.load %arg2[%c0_1073, %c7_1074, %c0_1075, %c0_1076, %c0_1077, %c0_1078] : memref<4x8x4x1x8x128xf32, #tpu.memory_space<vmem>>, vector<1x1x4x1x8x128xf32>
    %781 = vector.shape_cast %780 : vector<1x1x4x1x8x128xf32> to vector<4x8x128xf32>
    %782 = arith.mulf %781, %528 : vector<4x8x128xf32>
    %783 = arith.addf %779, %782 : vector<4x8x128xf32>
    %c1_1079 = arith.constant 1 : index
    %c7_1080 = arith.constant 7 : index
    %c0_1081 = arith.constant 0 : index
    %c0_1082 = arith.constant 0 : index
    %c0_1083 = arith.constant 0 : index
    %c0_1084 = arith.constant 0 : index
    %784 = vector.load %arg2[%c1_1079, %c7_1080, %c0_1081, %c0_1082, %c0_1083, %c0_1084] : memref<4x8x4x1x8x128xf32, #tpu.memory_space<vmem>>, vector<1x1x4x1x8x128xf32>
    %785 = vector.shape_cast %784 : vector<1x1x4x1x8x128xf32> to vector<4x8x128xf32>
    %786 = arith.mulf %785, %569 : vector<4x8x128xf32>
    %787 = arith.addf %783, %786 : vector<4x8x128xf32>
    %c2_1085 = arith.constant 2 : index
    %c7_1086 = arith.constant 7 : index
    %c0_1087 = arith.constant 0 : index
    %c0_1088 = arith.constant 0 : index
    %c0_1089 = arith.constant 0 : index
    %c0_1090 = arith.constant 0 : index
    %788 = vector.load %arg2[%c2_1085, %c7_1086, %c0_1087, %c0_1088, %c0_1089, %c0_1090] : memref<4x8x4x1x8x128xf32, #tpu.memory_space<vmem>>, vector<1x1x4x1x8x128xf32>
    %789 = vector.shape_cast %788 : vector<1x1x4x1x8x128xf32> to vector<4x8x128xf32>
    %790 = arith.mulf %789, %610 : vector<4x8x128xf32>
    %791 = arith.addf %787, %790 : vector<4x8x128xf32>
    %c3_1091 = arith.constant 3 : index
    %c7_1092 = arith.constant 7 : index
    %c0_1093 = arith.constant 0 : index
    %c0_1094 = arith.constant 0 : index
    %c0_1095 = arith.constant 0 : index
    %c0_1096 = arith.constant 0 : index
    %792 = vector.load %arg2[%c3_1091, %c7_1092, %c0_1093, %c0_1094, %c0_1095, %c0_1096] : memref<4x8x4x1x8x128xf32, #tpu.memory_space<vmem>>, vector<1x1x4x1x8x128xf32>
    %793 = vector.shape_cast %792 : vector<1x1x4x1x8x128xf32> to vector<4x8x128xf32>
    %794 = arith.mulf %793, %651 : vector<4x8x128xf32>
    %795 = arith.addf %791, %794 : vector<4x8x128xf32>
    %c0_1097 = arith.constant 0 : index
    %c0_1098 = arith.constant 0 : index
    %c0_1099 = arith.constant 0 : index
    %c0_1100 = arith.constant 0 : index
    %c0_1101 = arith.constant 0 : index
    %796 = vector.load %arg3[%c0_1097, %c0_1098, %c0_1099, %c0_1100, %c0_1101] : memref<1x8x4x8x128xf32, #tpu.memory_space<vmem>>, vector<1x1x4x8x128xf32>
    %797 = vector.shape_cast %796 : vector<1x1x4x8x128xf32> to vector<4x8x128xf32>
    %798 = vector.shape_cast %669 : vector<4x8x128xf32> to vector<1x1x4x8x128xf32>
    tpu.vector_store %arg3[%c0_1097, %c0_1098, %c0_1099, %c0_1100, %c0_1101], %798 {strides = array<i32>} : memref<1x8x4x8x128xf32, #tpu.memory_space<vmem>>, vector<1x1x4x8x128xf32>,
    %c0_1102 = arith.constant 0 : index
    %c1_1103 = arith.constant 1 : index
    %c0_1104 = arith.constant 0 : index
    %c0_1105 = arith.constant 0 : index
    %c0_1106 = arith.constant 0 : index
    %799 = vector.load %arg3[%c0_1102, %c1_1103, %c0_1104, %c0_1105, %c0_1106] : memref<1x8x4x8x128xf32, #tpu.memory_space<vmem>>, vector<1x1x4x8x128xf32>
    %800 = vector.shape_cast %799 : vector<1x1x4x8x128xf32> to vector<4x8x128xf32>
    %801 = vector.shape_cast %687 : vector<4x8x128xf32> to vector<1x1x4x8x128xf32>
    tpu.vector_store %arg3[%c0_1102, %c1_1103, %c0_1104, %c0_1105, %c0_1106], %801 {strides = array<i32>} : memref<1x8x4x8x128xf32, #tpu.memory_space<vmem>>, vector<1x1x4x8x128xf32>,
    %c0_1107 = arith.constant 0 : index
    %c2_1108 = arith.constant 2 : index
    %c0_1109 = arith.constant 0 : index
    %c0_1110 = arith.constant 0 : index
    %c0_1111 = arith.constant 0 : index
    %802 = vector.load %arg3[%c0_1107, %c2_1108, %c0_1109, %c0_1110, %c0_1111] : memref<1x8x4x8x128xf32, #tpu.memory_space<vmem>>, vector<1x1x4x8x128xf32>
    %803 = vector.shape_cast %802 : vector<1x1x4x8x128xf32> to vector<4x8x128xf32>
    %804 = vector.shape_cast %705 : vector<4x8x128xf32> to vector<1x1x4x8x128xf32>
    tpu.vector_store %arg3[%c0_1107, %c2_1108, %c0_1109, %c0_1110, %c0_1111], %804 {strides = array<i32>} : memref<1x8x4x8x128xf32, #tpu.memory_space<vmem>>, vector<1x1x4x8x128xf32>,
    %c0_1112 = arith.constant 0 : index
    %c3_1113 = arith.constant 3 : index
    %c0_1114 = arith.constant 0 : index
    %c0_1115 = arith.constant 0 : index
    %c0_1116 = arith.constant 0 : index
    %805 = vector.load %arg3[%c0_1112, %c3_1113, %c0_1114, %c0_1115, %c0_1116] : memref<1x8x4x8x128xf32, #tpu.memory_space<vmem>>, vector<1x1x4x8x128xf32>
    %806 = vector.shape_cast %805 : vector<1x1x4x8x128xf32> to vector<4x8x128xf32>
    %807 = vector.shape_cast %723 : vector<4x8x128xf32> to vector<1x1x4x8x128xf32>
    tpu.vector_store %arg3[%c0_1112, %c3_1113, %c0_1114, %c0_1115, %c0_1116], %807 {strides = array<i32>} : memref<1x8x4x8x128xf32, #tpu.memory_space<vmem>>, vector<1x1x4x8x128xf32>,
    %c0_1117 = arith.constant 0 : index
    %c4_1118 = arith.constant 4 : index
    %c0_1119 = arith.constant 0 : index
    %c0_1120 = arith.constant 0 : index
    %c0_1121 = arith.constant 0 : index
    %808 = vector.load %arg3[%c0_1117, %c4_1118, %c0_1119, %c0_1120, %c0_1121] : memref<1x8x4x8x128xf32, #tpu.memory_space<vmem>>, vector<1x1x4x8x128xf32>
    %809 = vector.shape_cast %808 : vector<1x1x4x8x128xf32> to vector<4x8x128xf32>
    %810 = vector.shape_cast %741 : vector<4x8x128xf32> to vector<1x1x4x8x128xf32>
    tpu.vector_store %arg3[%c0_1117, %c4_1118, %c0_1119, %c0_1120, %c0_1121], %810 {strides = array<i32>} : memref<1x8x4x8x128xf32, #tpu.memory_space<vmem>>, vector<1x1x4x8x128xf32>,
    %c0_1122 = arith.constant 0 : index
    %c5_1123 = arith.constant 5 : index
    %c0_1124 = arith.constant 0 : index
    %c0_1125 = arith.constant 0 : index
    %c0_1126 = arith.constant 0 : index
    %811 = vector.load %arg3[%c0_1122, %c5_1123, %c0_1124, %c0_1125, %c0_1126] : memref<1x8x4x8x128xf32, #tpu.memory_space<vmem>>, vector<1x1x4x8x128xf32>
    %812 = vector.shape_cast %811 : vector<1x1x4x8x128xf32> to vector<4x8x128xf32>
    %813 = vector.shape_cast %759 : vector<4x8x128xf32> to vector<1x1x4x8x128xf32>
    tpu.vector_store %arg3[%c0_1122, %c5_1123, %c0_1124, %c0_1125, %c0_1126], %813 {strides = array<i32>} : memref<1x8x4x8x128xf32, #tpu.memory_space<vmem>>, vector<1x1x4x8x128xf32>,
    %c0_1127 = arith.constant 0 : index
    %c6_1128 = arith.constant 6 : index
    %c0_1129 = arith.constant 0 : index
    %c0_1130 = arith.constant 0 : index
    %c0_1131 = arith.constant 0 : index
    %814 = vector.load %arg3[%c0_1127, %c6_1128, %c0_1129, %c0_1130, %c0_1131] : memref<1x8x4x8x128xf32, #tpu.memory_space<vmem>>, vector<1x1x4x8x128xf32>
    %815 = vector.shape_cast %814 : vector<1x1x4x8x128xf32> to vector<4x8x128xf32>
    %816 = vector.shape_cast %777 : vector<4x8x128xf32> to vector<1x1x4x8x128xf32>
    tpu.vector_store %arg3[%c0_1127, %c6_1128, %c0_1129, %c0_1130, %c0_1131], %816 {strides = array<i32>} : memref<1x8x4x8x128xf32, #tpu.memory_space<vmem>>, vector<1x1x4x8x128xf32>,
    %c0_1132 = arith.constant 0 : index
    %c7_1133 = arith.constant 7 : index
    %c0_1134 = arith.constant 0 : index
    %c0_1135 = arith.constant 0 : index
    %c0_1136 = arith.constant 0 : index
    %817 = vector.load %arg3[%c0_1132, %c7_1133, %c0_1134, %c0_1135, %c0_1136] : memref<1x8x4x8x128xf32, #tpu.memory_space<vmem>>, vector<1x1x4x8x128xf32>
    %818 = vector.shape_cast %817 : vector<1x1x4x8x128xf32> to vector<4x8x128xf32>
    %819 = vector.shape_cast %795 : vector<4x8x128xf32> to vector<1x1x4x8x128xf32>
    tpu.vector_store %arg3[%c0_1132, %c7_1133, %c0_1134, %c0_1135, %c0_1136], %819 {strides = array<i32>} : memref<1x8x4x8x128xf32, #tpu.memory_space<vmem>>, vector<1x1x4x8x128xf32>,
    return
  }
  func.func @transform_0(%arg0: i32) -> (i32, i32, i32, i32, i32) {
    %c0_i32 = arith.constant 0 : i32
    %c0_i32_0 = arith.constant 0 : i32
    %c0_i32_1 = arith.constant 0 : i32
    %c0_i32_2 = arith.constant 0 : i32
    %c0_i32_3 = arith.constant 0 : i32
    return %arg0, %c0_i32, %c0_i32_0, %c0_i32_1, %c0_i32_2 : i32, i32, i32, i32, i32
  }
  func.func @transform_1(%arg0: i32) -> (i32, i32, i32, i32, i32, i32) {
    %c0_i32 = arith.constant 0 : i32
    %c0_i32_0 = arith.constant 0 : i32
    %c0_i32_1 = arith.constant 0 : i32
    %c0_i32_2 = arith.constant 0 : i32
    %c0_i32_3 = arith.constant 0 : i32
    %c0_i32_4 = arith.constant 0 : i32
    return %c0_i32, %c0_i32_0, %c0_i32_1, %arg0, %c0_i32_2, %c0_i32_3 : i32, i32, i32, i32, i32, i32
  }
  func.func @transform_2(%arg0: i32) -> (i32, i32, i32, i32, i32) {
    %c0_i32 = arith.constant 0 : i32
    %c0_i32_0 = arith.constant 0 : i32
    %c0_i32_1 = arith.constant 0 : i32
    %c0_i32_2 = arith.constant 0 : i32
    %c0_i32_3 = arith.constant 0 : i32
    return %arg0, %c0_i32, %c0_i32_0, %c0_i32_1, %c0_i32_2 : i32, i32, i32, i32, i32
  }
}

</mosaic_0001>

<llo_original>
// kernel: tpu_custom_call.1
$region0: #{tpu_custom_call.1}
  #allocation0 [shape = 'u32[]', space=smem, size = 0x4, offset = 0x4, fixed_abs, tag = 'smem constant byte address 0x4 - core index']
  #allocation1 [shape = 'u32[72,128]{1,0:T(1,128)}', space=vmem, size = 0x9000, scoped, tag = 'internal scratch']
  %s0 = inlined_call_operand.hbm [shape: f32[2,8,4,8,128], index: 0, kind: input, shape index: {}]
  %s1 = inlined_call_operand.hbm [shape: f32[4,8,4,2,8,128], index: 1, kind: input, shape index: {}]
  %s2 = inlined_call_operand.hbm [shape: f32[2,8,4,8,128], index: 2, kind: output, shape index: {}]
  %s3 = sld [smem:[#allocation0]]
  $region49: #{tpu_custom_call.1} parent=0
    _
  %s5 = ssub.s32 1, %s3
  %s6 = scalar_select 0, %s5, %s3
  $region1: #{tpu_custom_call.1} parent=0
    #allocation2 [shape = 'u8[262144]{0}', space=vmem, size = 0x40000, scoped, tag = 'input window, operand 0']
    #allocation3 [shape = 's32[2]{0}', space=sflag, size = 0x8, scoped, tag = 'scoped memory for tpu_custom_call.1']
    #allocation4 [shape = 's32[2]{0}', space=sflag, size = 0x8, scoped, tag = 'scoped memory for tpu_custom_call.1']
    #allocation5 [shape = 'u8[1048576]{0}', space=vmem, size = 0x100000, scoped, tag = 'input window, operand 1']
    #allocation6 [shape = 's32[2]{0}', space=sflag, size = 0x8, scoped, tag = 'scoped memory for tpu_custom_call.1']
    #allocation7 [shape = 'u8[262144]{0}', space=vmem, size = 0x40000, scoped, tag = 'output window, operand 0']
    %7 = vsyncpa [#allocation3], 0
    %s8 = scalar_lea.sflag [#allocation3], 1
    %9 = vsyncpa %s8, 0
    %10 = vsyncpa [#allocation6], 0
    %s11 = scalar_lea.sflag [#allocation6], 1
    %12 = vsyncpa %s11, 0
    %13 = vsyncpa [#allocation4], 0
    %s14 = scalar_lea.sflag [#allocation4], 1
    %15 = vsyncpa %s14, 0
    loop: start=0, step=1, limit=4
    $region2: #{tpu_custom_call.1} parent=1 // loop_pre_header
      _
    $region3: #{tpu_custom_call.1} parent=1 // loop_header
      %s17 = sphi 0, %s21
      %p18 = scmp.ge.s32.totalorder %s17, 4
      %s27 = sphi 0, %s29
      %s30 = sphi 0, %s27
      %s31 = sphi 0, %s30
      %s47 = sphi 0, %s31
      %s53 = sphi 0, %s55
      %s56 = sphi 0, %s53
      %s57 = sphi 0, %s56
      %s73 = sphi 0, %s57
      %s79 = sphi 0, %s81
      %s82 = sphi 0, %s79
      %s83 = sphi 0, %s82
      %s99 = sphi 0, %s83
    $region4: #{tpu_custom_call.1} parent=1 // loop_header_branch
      %20 = sbr.rel (%p18) target = $region8
    $region5: #{tpu_custom_call.1} parent=1 // loop_body
      %s22 = ssub.s32 %s17, 1
      %s23 = ssub.s32 %s17, 2
      %s24 = sadd.s32 %s17, 1
      %s25 = ssub.s32 %s17, %s24
      %p26 = scmp.eq.s32.totalorder %s25, 0
      %s28 = sadd.s32 %s27, 1
      %s29 = scalar_select %p26, %s27, %s28
      %p32 = pneg %p26
      %p33 = scmp.eq.s32.totalorder %s17, 1
      %p34 = por %p32, %p33
      %p35 = scmp.ne.s32.totalorder %s27, %s30
      %p36 = scmp.eq.s32.totalorder %s17, 0
      %p37 = por %p35, %p36
      %p38 = scmp.ne.s32.totalorder %s27, %s30
      %p39 = scmp.eq.s32.totalorder %s22, 1
      %p40 = por %p38, %p39
      %p41 = scmp.ne.s32.totalorder %s30, %s31
      %p42 = scmp.eq.s32.totalorder %s22, 0
      %p43 = por %p41, %p42
      %p44 = scmp.ne.s32.totalorder %s30, %s31
      %p45 = scmp.eq.s32.totalorder %s23, 1
      %p46 = por %p44, %p45
      %p48 = scmp.ne.s32.totalorder %s31, %s47
      %p49 = scmp.eq.s32.totalorder %s23, 0
      %p50 = por %p48, %p49
      %s51 = ssub.s32 %s17, %s24
      %p52 = scmp.eq.s32.totalorder %s51, 0
      %s54 = sadd.s32 %s53, 1
      %s55 = scalar_select %p52, %s53, %s54
      %p58 = pneg %p52
      %p59 = scmp.eq.s32.totalorder %s17, 1
      %p60 = por %p58, %p59
      %p61 = scmp.ne.s32.totalorder %s53, %s56
      %p62 = scmp.eq.s32.totalorder %s17, 0
      %p63 = por %p61, %p62
      %p64 = scmp.ne.s32.totalorder %s53, %s56
      %p65 = scmp.eq.s32.totalorder %s22, 1
      %p66 = por %p64, %p65
      %p67 = scmp.ne.s32.totalorder %s56, %s57
      %p68 = scmp.eq.s32.totalorder %s22, 0
      %p69 = por %p67, %p68
      %p70 = scmp.ne.s32.totalorder %s56, %s57
      %p71 = scmp.eq.s32.totalorder %s23, 1
      %p72 = por %p70, %p71
      %p74 = scmp.ne.s32.totalorder %s57, %s73
      %p75 = scmp.eq.s32.totalorder %s23, 0
      %p76 = por %p74, %p75
      %s77 = ssub.s32 %s17, %s24
      %p78 = scmp.eq.s32.totalorder %s77, 0
      %s80 = sadd.s32 %s79, 1
      %s81 = scalar_select %p78, %s79, %s80
      %p84 = pneg %p78
      %p85 = scmp.eq.s32.totalorder %s17, 1
      %p86 = por %p84, %p85
      %p87 = scmp.ne.s32.totalorder %s79, %s82
      %p88 = scmp.eq.s32.totalorder %s17, 0
      %p89 = por %p87, %p88
      %p90 = scmp.ne.s32.totalorder %s79, %s82
      %p91 = scmp.eq.s32.totalorder %s22, 1
      %p92 = por %p90, %p91
      %p93 = scmp.ne.s32.totalorder %s82, %s83
      %p94 = scmp.eq.s32.totalorder %s22, 0
      %p95 = por %p93, %p94
      %p96 = scmp.ne.s32.totalorder %s82, %s83
      %p97 = scmp.eq.s32.totalorder %s23, 1
      %p98 = por %p96, %p97
      %p100 = scmp.ne.s32.totalorder %s83, %s99
      %p101 = scmp.eq.s32.totalorder %s23, 0
      %p102 = por %p100, %p101
      %p103 = scmp.le.s32.totalorder 1, %s17
      %p104 = scmp.lt.s32.totalorder %s17, 3
      %p105 = pnand %p103, %p104
      %p106 = pneg %p105
      // Predicated region
      $region9: #{tpu_custom_call.1} parent=5 // pred_check
        _
      $region10: #{tpu_custom_call.1} parent=5 // pred_check_branch
        %108 = sbr.rel (%p105) target = $region12
      $region11: #{tpu_custom_call.1} parent=5 // pred_region
        %s109 = ssub.s32 %s17, 1
      $region12: #{tpu_custom_call.1} parent=5 // pred_fallthru
        _
      %p110 = scmp.lt.s32.totalorder %s17, 2
      // Predicated region
      $region13: #{tpu_custom_call.1} parent=5 // pred_check
        %p111 = pneg %p110
      $region14: #{tpu_custom_call.1} parent=5 // pred_check_branch
        %113 = sbr.rel (%p111) target = $region16
      $region15: #{tpu_custom_call.1} parent=5 // pred_region
        // Predicated region
        $region17: #{tpu_custom_call.1} parent=15 // pred_check
          %p114 = pneg %p37
        $region18: #{tpu_custom_call.1} parent=15 // pred_check_branch
          %116 = sbr.rel (%p114) target = $region20
        $region19: #{tpu_custom_call.1} parent=15 // pred_region
          %s117 = sand.u32 %s27, 1
          %s118 = scalar_lea.sflag [#allocation3], %s117
          %s119 = sand.u32 %s27, 1
          %s120 = smul.addr %s119, 256
          %s121 = scalar_lea.vmem [#allocation2], %s120
          %123 = vsyncadd %s118, 0
          %s124 = smul.addr %s17, 32
          %s125 = smul.addr %s124, 8
          %s126 = scalar_lea.hbm %s0, %s125
          %s127 = sshll.u32 %s126, 4
          %s128 = int_to_ptr.hbm [resolvable:$true] %s127
          %s129 = sshll.u32 %s121, 4
          %s130 = int_to_ptr.vmem [resolvable:$true] %s129
          %135 = dma.hbm_to_vmem [thread:$0]  %s128, 4096, %s130, %s118, 128, 128, 8
        $region20: #{tpu_custom_call.1} parent=15 // pred_fallthru
          _
        // Predicated region
        $region21: #{tpu_custom_call.1} parent=15 // pred_check
          %p136 = pneg %p63
        $region22: #{tpu_custom_call.1} parent=15 // pred_check_branch
          %138 = sbr.rel (%p136) target = $region24
        $region23: #{tpu_custom_call.1} parent=15 // pred_region
          %s139 = sand.u32 %s53, 1
          %s140 = scalar_lea.sflag [#allocation6], %s139
          %s141 = sand.u32 %s53, 1
          %s142 = smul.addr %s141, 1024
          %s143 = scalar_lea.vmem [#allocation5], %s142
          %145 = vsyncadd %s140, 0
          %s146 = smul.addr %s17, 8
          %s147 = scalar_lea.hbm %s1, %s146
          %s148 = sshll.u32 %s147, 4
          %s149 = int_to_ptr.hbm [resolvable:$true] %s148
          %s150 = sshll.u32 %s143, 4
          %s151 = int_to_ptr.vmem [resolvable:$true] %s150
          %156 = dma.hbm_to_vmem [thread:$0]  %s149, 16384, %s151, %s140, 256, 128, 8
        $region24: #{tpu_custom_call.1} parent=15 // pred_fallthru
          _
      $region16: #{tpu_custom_call.1} parent=5 // pred_fallthru
        _
      %p157 = scmp.le.s32.totalorder 1, %s17
      %p158 = scmp.lt.s32.totalorder %s17, 3
      %p159 = pnand %p157, %p158
      %p160 = pneg %p159
      // Predicated region
      $region25: #{tpu_custom_call.1} parent=5 // pred_check
        _
      $region26: #{tpu_custom_call.1} parent=5 // pred_check_branch
        %162 = sbr.rel (%p159) target = $region28
      $region27: #{tpu_custom_call.1} parent=5 // pred_region
        %s163 = ssub.s32 %s17, 1
        %s164 = sand.u32 %s30, 1
        %s165 = scalar_lea.sflag [#allocation3], %s164
        %s166 = sand.u32 %s30, 1
        %s167 = smul.addr %s166, 256
        %s168 = scalar_lea.vmem [#allocation2], %s167
        // Predicated region
        $region29: #{tpu_custom_call.1} parent=27 // pred_check
          %p169 = pneg %p43
        $region30: #{tpu_custom_call.1} parent=27 // pred_check_branch
          %171 = sbr.rel (%p169) target = $region32
        $region31: #{tpu_custom_call.1} parent=27 // pred_region
          %173 = dma.done %s165, 4096
        $region32: #{tpu_custom_call.1} parent=27 // pred_fallthru
          _
        %s174 = sand.u32 %s56, 1
        %s175 = scalar_lea.sflag [#allocation6], %s174
        %s176 = sand.u32 %s56, 1
        %s177 = smul.addr %s176, 1024
        %s178 = scalar_lea.vmem [#allocation5], %s177
        // Predicated region
        $region33: #{tpu_custom_call.1} parent=27 // pred_check
          %p179 = pneg %p69
        $region34: #{tpu_custom_call.1} parent=27 // pred_check_branch
          %181 = sbr.rel (%p179) target = $region36
        $region35: #{tpu_custom_call.1} parent=27 // pred_region
          %183 = dma.done %s175, 16384
        $region36: #{tpu_custom_call.1} parent=27 // pred_fallthru
          _
        %s184 = sand.u32 %s30, 1
        %s185 = scalar_lea.sflag [#allocation3], %s184
        %s186 = sand.u32 %s30, 1
        %s187 = smul.addr %s186, 256
        %s188 = scalar_lea.vmem [#allocation2], %s187
        %p189 = pneg %p43
        %p190 = pneg %p40
        %s191 = sand.u32 %s56, 1
        %s192 = scalar_lea.sflag [#allocation6], %s191
        %s193 = sand.u32 %s56, 1
        %s194 = smul.addr %s193, 1024
        %s195 = scalar_lea.vmem [#allocation5], %s194
        %p196 = pneg %p69
        %p197 = pneg %p66
        %p198 = pneg %p95
        %p199 = pneg %p92
        %s200 = sand.u32 %s82, 1
        %s201 = scalar_lea.sflag [#allocation4], %s200
        %s202 = sand.u32 %s82, 1
        %s203 = smul.addr %s202, 256
        %s204 = scalar_lea.vmem [#allocation7], %s203
        %v205 = vld [vmem:[%s178] sm:$0xff]
        %v206 = vld [vmem:[%s178 + $0x8] sm:$0xff]
        %v207 = vld [vmem:[%s178 + $0x10] sm:$0xff]
        %v208 = vld [vmem:[%s178 + $0x18] sm:$0xff]
        %s209 = scalar_lea.vmem %s178, 256 [#allocation5]
        %v210 = vld [vmem:[%s209] sm:$0xff]
        %v211 = vld [vmem:[%s209 + $0x8] sm:$0xff]
        %v212 = vld [vmem:[%s209 + $0x10] sm:$0xff]
        %v213 = vld [vmem:[%s209 + $0x18] sm:$0xff]
        %v214 = vadd.f32 %v205, %v210
        %v215 = vadd.f32 %v206, %v211
        %v216 = vadd.f32 %v207, %v212
        %v217 = vadd.f32 %v208, %v213
        %s218 = scalar_lea.vmem %s178, 512 [#allocation5]
        %v219 = vld [vmem:[%s218] sm:$0xff]
        %v220 = vld [vmem:[%s218 + $0x8] sm:$0xff]
        %v221 = vld [vmem:[%s218 + $0x10] sm:$0xff]
        %v222 = vld [vmem:[%s218 + $0x18] sm:$0xff]
        %v223 = vadd.f32 %v214, %v219
        %v224 = vadd.f32 %v215, %v220
        %v225 = vadd.f32 %v216, %v221
        %v226 = vadd.f32 %v217, %v222
        %s227 = scalar_lea.vmem %s178, 768 [#allocation5]
        %v228 = vld [vmem:[%s227] sm:$0xff]
        %v229 = vld [vmem:[%s227 + $0x8] sm:$0xff]
        %v230 = vld [vmem:[%s227 + $0x10] sm:$0xff]
        %v231 = vld [vmem:[%s227 + $0x18] sm:$0xff]
        %v232 = vadd.f32 %v223, %v228
        %v233 = vadd.f32 %v224, %v229
        %v234 = vadd.f32 %v225, %v230
        %v235 = vadd.f32 %v226, %v231
        %v236 = vmul.f32 %v232, 0.25
        %v237 = vmul.f32 %v233, 0.25
        %v238 = vmul.f32 %v234, 0.25
        %v239 = vmul.f32 %v235, 0.25
        %v240 = vld [vmem:[%s168] sm:$0xff]
        %v241 = vld [vmem:[%s168 + $0x8] sm:$0xff]
        %v242 = vld [vmem:[%s168 + $0x10] sm:$0xff]
        %v243 = vld [vmem:[%s168 + $0x18] sm:$0xff]
        %v244 = vadd.f32 %v236, %v240
        %v245 = vadd.f32 %v237, %v241
        %v246 = vadd.f32 %v238, %v242
        %v247 = vadd.f32 %v239, %v243
        %s248 = scalar_lea.vmem %s178, 32 [#allocation5]
        %v249 = vld [vmem:[%s248] sm:$0xff]
        %v250 = vld [vmem:[%s248 + $0x8] sm:$0xff]
        %v251 = vld [vmem:[%s248 + $0x10] sm:$0xff]
        %v252 = vld [vmem:[%s248 + $0x18] sm:$0xff]
        %s253 = scalar_lea.vmem %s178, 288 [#allocation5]
        %v254 = vld [vmem:[%s253] sm:$0xff]
        %v255 = vld [vmem:[%s253 + $0x8] sm:$0xff]
        %v256 = vld [vmem:[%s253 + $0x10] sm:$0xff]
        %v257 = vld [vmem:[%s253 + $0x18] sm:$0xff]
        %v258 = vadd.f32 %v249, %v254
        %v259 = vadd.f32 %v250, %v255
        %v260 = vadd.f32 %v251, %v256
        %v261 = vadd.f32 %v252, %v257
        %s262 = scalar_lea.vmem %s178, 544 [#allocation5]
        %v263 = vld [vmem:[%s262] sm:$0xff]
        %v264 = vld [vmem:[%s262 + $0x8] sm:$0xff]
        %v265 = vld [vmem:[%s262 + $0x10] sm:$0xff]
        %v266 = vld [vmem:[%s262 + $0x18] sm:$0xff]
        %v267 = vadd.f32 %v258, %v263
        %v268 = vadd.f32 %v259, %v264
        %v269 = vadd.f32 %v260, %v265
        %v270 = vadd.f32 %v261, %v266
        %s271 = scalar_lea.vmem %s178, 800 [#allocation5]
        %v272 = vld [vmem:[%s271] sm:$0xff]
        %v273 = vld [vmem:[%s271 + $0x8] sm:$0xff]
        %v274 = vld [vmem:[%s271 + $0x10] sm:$0xff]
        %v275 = vld [vmem:[%s271 + $0x18] sm:$0xff]
        %v276 = vadd.f32 %v267, %v272
        %v277 = vadd.f32 %v268, %v273
        %v278 = vadd.f32 %v269, %v274
        %v279 = vadd.f32 %v270, %v275
        %v280 = vmul.f32 %v276, 0.25
        %v281 = vmul.f32 %v277, 0.25
        %v282 = vmul.f32 %v278, 0.25
        %v283 = vmul.f32 %v279, 0.25
        %s284 = scalar_lea.vmem %s168, 32 [#allocation2]
        %v285 = vld [vmem:[%s284] sm:$0xff]
        %v286 = vld [vmem:[%s284 + $0x8] sm:$0xff]
        %v287 = vld [vmem:[%s284 + $0x10] sm:$0xff]
        %v288 = vld [vmem:[%s284 + $0x18] sm:$0xff]
        %v289 = vadd.f32 %v280, %v285
        %v290 = vadd.f32 %v281, %v286
        %v291 = vadd.f32 %v282, %v287
        %v292 = vadd.f32 %v283, %v288
        %s293 = scalar_lea.vmem %s178, 64 [#allocation5]
        %v294 = vld [vmem:[%s293] sm:$0xff]
        %v295 = vld [vmem:[%s293 + $0x8] sm:$0xff]
        %v296 = vld [vmem:[%s293 + $0x10] sm:$0xff]
        %v297 = vld [vmem:[%s293 + $0x18] sm:$0xff]
        %s298 = scalar_lea.vmem %s178, 320 [#allocation5]
        %v299 = vld [vmem:[%s298] sm:$0xff]
        %v300 = vld [vmem:[%s298 + $0x8] sm:$0xff]
        %v301 = vld [vmem:[%s298 + $0x10] sm:$0xff]
        %v302 = vld [vmem:[%s298 + $0x18] sm:$0xff]
        %v303 = vadd.f32 %v294, %v299
        %v304 = vadd.f32 %v295, %v300
        %v305 = vadd.f32 %v296, %v301
        %v306 = vadd.f32 %v297, %v302
        %s307 = scalar_lea.vmem %s178, 576 [#allocation5]
        %v308 = vld [vmem:[%s307] sm:$0xff]
        %v309 = vld [vmem:[%s307 + $0x8] sm:$0xff]
        %v310 = vld [vmem:[%s307 + $0x10] sm:$0xff]
        %v311 = vld [vmem:[%s307 + $0x18] sm:$0xff]
        %v312 = vadd.f32 %v303, %v308
        %v313 = vadd.f32 %v304, %v309
        %v314 = vadd.f32 %v305, %v310
        %v315 = vadd.f32 %v306, %v311
        %s316 = scalar_lea.vmem %s178, 832 [#allocation5]
        %v317 = vld [vmem:[%s316] sm:$0xff]
        %v318 = vld [vmem:[%s316 + $0x8] sm:$0xff]
        %v319 = vld [vmem:[%s316 + $0x10] sm:$0xff]
        %v320 = vld [vmem:[%s316 + $0x18] sm:$0xff]
        %v321 = vadd.f32 %v312, %v317
        %v322 = vadd.f32 %v313, %v318
        %v323 = vadd.f32 %v314, %v319
        %v324 = vadd.f32 %v315, %v320
        %v325 = vmul.f32 %v321, 0.25
        %v326 = vmul.f32 %v322, 0.25
        %v327 = vmul.f32 %v323, 0.25
        %v328 = vmul.f32 %v324, 0.25
        %s329 = scalar_lea.vmem %s168, 64 [#allocation2]
        %v330 = vld [vmem:[%s329] sm:$0xff]
        %v331 = vld [vmem:[%s329 + $0x8] sm:$0xff]
        %v332 = vld [vmem:[%s329 + $0x10] sm:$0xff]
        %v333 = vld [vmem:[%s329 + $0x18] sm:$0xff]
        %v334 = vadd.f32 %v325, %v330
        %v335 = vadd.f32 %v326, %v331
        %v336 = vadd.f32 %v327, %v332
        %v337 = vadd.f32 %v328, %v333
        %s338 = scalar_lea.vmem %s178, 96 [#allocation5]
        %v339 = vld [vmem:[%s338] sm:$0xff]
        %v340 = vld [vmem:[%s338 + $0x8] sm:$0xff]
        %v341 = vld [vmem:[%s338 + $0x10] sm:$0xff]
        %v342 = vld [vmem:[%s338 + $0x18] sm:$0xff]
        %s343 = scalar_lea.vmem %s178, 352 [#allocation5]
        %v344 = vld [vmem:[%s343] sm:$0xff]
        %v345 = vld [vmem:[%s343 + $0x8] sm:$0xff]
        %v346 = vld [vmem:[%s343 + $0x10] sm:$0xff]
        %v347 = vld [vmem:[%s343 + $0x18] sm:$0xff]
        %v348 = vadd.f32 %v339, %v344
        %v349 = vadd.f32 %v340, %v345
        %v350 = vadd.f32 %v341, %v346
        %v351 = vadd.f32 %v342, %v347
        %s352 = scalar_lea.vmem %s178, 608 [#allocation5]
        %v353 = vld [vmem:[%s352] sm:$0xff]
        %v354 = vld [vmem:[%s352 + $0x8] sm:$0xff]
        %v355 = vld [vmem:[%s352 + $0x10] sm:$0xff]
        %v356 = vld [vmem:[%s352 + $0x18] sm:$0xff]
        %v357 = vadd.f32 %v348, %v353
        %v358 = vadd.f32 %v349, %v354
        %v359 = vadd.f32 %v350, %v355
        %v360 = vadd.f32 %v351, %v356
        %s361 = scalar_lea.vmem %s178, 864 [#allocation5]
        %v362 = vld [vmem:[%s361] sm:$0xff]
        %v363 = vld [vmem:[%s361 + $0x8] sm:$0xff]
        %v364 = vld [vmem:[%s361 + $0x10] sm:$0xff]
        %v365 = vld [vmem:[%s361 + $0x18] sm:$0xff]
        %v366 = vadd.f32 %v357, %v362
        %v367 = vadd.f32 %v358, %v363
        %v368 = vadd.f32 %v359, %v364
        %v369 = vadd.f32 %v360, %v365
        %v370 = vmul.f32 %v366, 0.25
        %v371 = vmul.f32 %v367, 0.25
        %v372 = vmul.f32 %v368, 0.25
        %v373 = vmul.f32 %v369, 0.25
        %s374 = scalar_lea.vmem %s168, 96 [#allocation2]
        %v375 = vld [vmem:[%s374] sm:$0xff]
        %v376 = vld [vmem:[%s374 + $0x8] sm:$0xff]
        %v377 = vld [vmem:[%s374 + $0x10] sm:$0xff]
        %v378 = vld [vmem:[%s374 + $0x18] sm:$0xff]
        %v379 = vadd.f32 %v370, %v375
        %v380 = vadd.f32 %v371, %v376
        %v381 = vadd.f32 %v372, %v377
        %v382 = vadd.f32 %v373, %v378
        %s383 = scalar_lea.vmem %s178, 128 [#allocation5]
        %v384 = vld [vmem:[%s383] sm:$0xff]
        %v385 = vld [vmem:[%s383 + $0x8] sm:$0xff]
        %v386 = vld [vmem:[%s383 + $0x10] sm:$0xff]
        %v387 = vld [vmem:[%s383 + $0x18] sm:$0xff]
        %s388 = scalar_lea.vmem %s178, 384 [#allocation5]
        %v389 = vld [vmem:[%s388] sm:$0xff]
        %v390 = vld [vmem:[%s388 + $0x8] sm:$0xff]
        %v391 = vld [vmem:[%s388 + $0x10] sm:$0xff]
        %v392 = vld [vmem:[%s388 + $0x18] sm:$0xff]
        %v393 = vadd.f32 %v384, %v389
        %v394 = vadd.f32 %v385, %v390
        %v395 = vadd.f32 %v386, %v391
        %v396 = vadd.f32 %v387, %v392
        %s397 = scalar_lea.vmem %s178, 640 [#allocation5]
        %v398 = vld [vmem:[%s397] sm:$0xff]
        %v399 = vld [vmem:[%s397 + $0x8] sm:$0xff]
        %v400 = vld [vmem:[%s397 + $0x10] sm:$0xff]
        %v401 = vld [vmem:[%s397 + $0x18] sm:$0xff]
        %v402 = vadd.f32 %v393, %v398
        %v403 = vadd.f32 %v394, %v399
        %v404 = vadd.f32 %v395, %v400
        %v405 = vadd.f32 %v396, %v401
        %s406 = scalar_lea.vmem %s178, 896 [#allocation5]
        %v407 = vld [vmem:[%s406] sm:$0xff]
        %v408 = vld [vmem:[%s406 + $0x8] sm:$0xff]
        %v409 = vld [vmem:[%s406 + $0x10] sm:$0xff]
        %v410 = vld [vmem:[%s406 + $0x18] sm:$0xff]
        %v411 = vadd.f32 %v402, %v407
        %v412 = vadd.f32 %v403, %v408
        %v413 = vadd.f32 %v404, %v409
        %v414 = vadd.f32 %v405, %v410
        %v415 = vmul.f32 %v411, 0.25
        %v416 = vmul.f32 %v412, 0.25
        %v417 = vmul.f32 %v413, 0.25
        %v418 = vmul.f32 %v414, 0.25
        %s419 = scalar_lea.vmem %s168, 128 [#allocation2]
        %v420 = vld [vmem:[%s419] sm:$0xff]
        %v421 = vld [vmem:[%s419 + $0x8] sm:$0xff]
        %v422 = vld [vmem:[%s419 + $0x10] sm:$0xff]
        %v423 = vld [vmem:[%s419 + $0x18] sm:$0xff]
        %v424 = vadd.f32 %v415, %v420
        %v425 = vadd.f32 %v416, %v421
        %v426 = vadd.f32 %v417, %v422
        %v427 = vadd.f32 %v418, %v423
        %s428 = scalar_lea.vmem %s178, 160 [#allocation5]
        %v429 = vld [vmem:[%s428] sm:$0xff]
        %v430 = vld [vmem:[%s428 + $0x8] sm:$0xff]
        %v431 = vld [vmem:[%s428 + $0x10] sm:$0xff]
        %v432 = vld [vmem:[%s428 + $0x18] sm:$0xff]
        %s433 = scalar_lea.vmem %s178, 416 [#allocation5]
        %v434 = vld [vmem:[%s433] sm:$0xff]
        %v435 = vld [vmem:[%s433 + $0x8] sm:$0xff]
        %v436 = vld [vmem:[%s433 + $0x10] sm:$0xff]
        %v437 = vld [vmem:[%s433 + $0x18] sm:$0xff]
        %v438 = vadd.f32 %v429, %v434
        %v439 = vadd.f32 %v430, %v435
        %v440 = vadd.f32 %v431, %v436
        %v441 = vadd.f32 %v432, %v437
        %s442 = scalar_lea.vmem %s178, 672 [#allocation5]
        %v443 = vld [vmem:[%s442] sm:$0xff]
        %v444 = vld [vmem:[%s442 + $0x8] sm:$0xff]
        %v445 = vld [vmem:[%s442 + $0x10] sm:$0xff]
        %v446 = vld [vmem:[%s442 + $0x18] sm:$0xff]
        %v447 = vadd.f32 %v438, %v443
        %v448 = vadd.f32 %v439, %v444
        %v449 = vadd.f32 %v440, %v445
        %v450 = vadd.f32 %v441, %v446
        %s451 = scalar_lea.vmem %s178, 928 [#allocation5]
        %v452 = vld [vmem:[%s451] sm:$0xff]
        %v453 = vld [vmem:[%s451 + $0x8] sm:$0xff]
        %v454 = vld [vmem:[%s451 + $0x10] sm:$0xff]
        %v455 = vld [vmem:[%s451 + $0x18] sm:$0xff]
        %v456 = vadd.f32 %v447, %v452
        %v457 = vadd.f32 %v448, %v453
        %v458 = vadd.f32 %v449, %v454
        %v459 = vadd.f32 %v450, %v455
        %v460 = vmul.f32 %v456, 0.25
        %v461 = vmul.f32 %v457, 0.25
        %v462 = vmul.f32 %v458, 0.25
        %v463 = vmul.f32 %v459, 0.25
        %s464 = scalar_lea.vmem %s168, 160 [#allocation2]
        %v465 = vld [vmem:[%s464] sm:$0xff]
        %v466 = vld [vmem:[%s464 + $0x8] sm:$0xff]
        %v467 = vld [vmem:[%s464 + $0x10] sm:$0xff]
        %v468 = vld [vmem:[%s464 + $0x18] sm:$0xff]
        %v469 = vadd.f32 %v460, %v465
        %v470 = vadd.f32 %v461, %v466
        %v471 = vadd.f32 %v462, %v467
        %v472 = vadd.f32 %v463, %v468
        %s473 = scalar_lea.vmem %s178, 192 [#allocation5]
        %v474 = vld [vmem:[%s473] sm:$0xff]
        %v475 = vld [vmem:[%s473 + $0x8] sm:$0xff]
        %v476 = vld [vmem:[%s473 + $0x10] sm:$0xff]
        %v477 = vld [vmem:[%s473 + $0x18] sm:$0xff]
        %s478 = scalar_lea.vmem %s178, 448 [#allocation5]
        %v479 = vld [vmem:[%s478] sm:$0xff]
        %v480 = vld [vmem:[%s478 + $0x8] sm:$0xff]
        %v481 = vld [vmem:[%s478 + $0x10] sm:$0xff]
        %v482 = vld [vmem:[%s478 + $0x18] sm:$0xff]
        %v483 = vadd.f32 %v474, %v479
        %v484 = vadd.f32 %v475, %v480
        %v485 = vadd.f32 %v476, %v481
        %v486 = vadd.f32 %v477, %v482
        %s487 = scalar_lea.vmem %s178, 704 [#allocation5]
        %v488 = vld [vmem:[%s487] sm:$0xff]
        %v489 = vld [vmem:[%s487 + $0x8] sm:$0xff]
        %v490 = vld [vmem:[%s487 + $0x10] sm:$0xff]
        %v491 = vld [vmem:[%s487 + $0x18] sm:$0xff]
        %v492 = vadd.f32 %v483, %v488
        %v493 = vadd.f32 %v484, %v489
        %v494 = vadd.f32 %v485, %v490
        %v495 = vadd.f32 %v486, %v491
        %s496 = scalar_lea.vmem %s178, 960 [#allocation5]
        %v497 = vld [vmem:[%s496] sm:$0xff]
        %v498 = vld [vmem:[%s496 + $0x8] sm:$0xff]
        %v499 = vld [vmem:[%s496 + $0x10] sm:$0xff]
        %v500 = vld [vmem:[%s496 + $0x18] sm:$0xff]
        %v501 = vadd.f32 %v492, %v497
        %v502 = vadd.f32 %v493, %v498
        %v503 = vadd.f32 %v494, %v499
        %v504 = vadd.f32 %v495, %v500
        %v505 = vmul.f32 %v501, 0.25
        %v506 = vmul.f32 %v502, 0.25
        %v507 = vmul.f32 %v503, 0.25
        %v508 = vmul.f32 %v504, 0.25
        %s509 = scalar_lea.vmem %s168, 192 [#allocation2]
        %v510 = vld [vmem:[%s509] sm:$0xff]
        %v511 = vld [vmem:[%s509 + $0x8] sm:$0xff]
        %v512 = vld [vmem:[%s509 + $0x10] sm:$0xff]
        %v513 = vld [vmem:[%s509 + $0x18] sm:$0xff]
        %v514 = vadd.f32 %v505, %v510
        %v515 = vadd.f32 %v506, %v511
        %v516 = vadd.f32 %v507, %v512
        %v517 = vadd.f32 %v508, %v513
        %s518 = scalar_lea.vmem %s178, 224 [#allocation5]
        %v519 = vld [vmem:[%s518] sm:$0xff]
        %v520 = vld [vmem:[%s518 + $0x8] sm:$0xff]
        %v521 = vld [vmem:[%s518 + $0x10] sm:$0xff]
        %v522 = vld [vmem:[%s518 + $0x18] sm:$0xff]
        %s523 = scalar_lea.vmem %s178, 480 [#allocation5]
        %v524 = vld [vmem:[%s523] sm:$0xff]
        %v525 = vld [vmem:[%s523 + $0x8] sm:$0xff]
        %v526 = vld [vmem:[%s523 + $0x10] sm:$0xff]
        %v527 = vld [vmem:[%s523 + $0x18] sm:$0xff]
        %v528 = vadd.f32 %v519, %v524
        %v529 = vadd.f32 %v520, %v525
        %v530 = vadd.f32 %v521, %v526
        %v531 = vadd.f32 %v522, %v527
        %s532 = scalar_lea.vmem %s178, 736 [#allocation5]
        %v533 = vld [vmem:[%s532] sm:$0xff]
        %v534 = vld [vmem:[%s532 + $0x8] sm:$0xff]
        %v535 = vld [vmem:[%s532 + $0x10] sm:$0xff]
        %v536 = vld [vmem:[%s532 + $0x18] sm:$0xff]
        %v537 = vadd.f32 %v528, %v533
        %v538 = vadd.f32 %v529, %v534
        %v539 = vadd.f32 %v530, %v535
        %v540 = vadd.f32 %v531, %v536
        %s541 = scalar_lea.vmem %s178, 992 [#allocation5]
        %v542 = vld [vmem:[%s541] sm:$0xff]
        %v543 = vld [vmem:[%s541 + $0x8] sm:$0xff]
        %v544 = vld [vmem:[%s541 + $0x10] sm:$0xff]
        %v545 = vld [vmem:[%s541 + $0x18] sm:$0xff]
        %v546 = vadd.f32 %v537, %v542
        %v547 = vadd.f32 %v538, %v543
        %v548 = vadd.f32 %v539, %v544
        %v549 = vadd.f32 %v540, %v545
        %v550 = vmul.f32 %v546, 0.25
        %v551 = vmul.f32 %v547, 0.25
        %v552 = vmul.f32 %v548, 0.25
        %v553 = vmul.f32 %v549, 0.25
        %s554 = scalar_lea.vmem %s168, 224 [#allocation2]
        %v555 = vld [vmem:[%s554] sm:$0xff]
        %v556 = vld [vmem:[%s554 + $0x8] sm:$0xff]
        %v557 = vld [vmem:[%s554 + $0x10] sm:$0xff]
        %v558 = vld [vmem:[%s554 + $0x18] sm:$0xff]
        %v559 = vadd.f32 %v550, %v555
        %v560 = vadd.f32 %v551, %v556
        %v561 = vadd.f32 %v552, %v557
        %v562 = vadd.f32 %v553, %v558
        %v563 = vmul.f32 %v244, %v244
        %v564 = vmul.f32 %v245, %v245
        %v565 = vmul.f32 %v246, %v246
        %v566 = vmul.f32 %v247, %v247
        %v567 = vmul.f32 %v289, %v289
        %v568 = vmul.f32 %v290, %v290
        %v569 = vmul.f32 %v291, %v291
        %v570 = vmul.f32 %v292, %v292
        %v571 = vadd.f32 %v563, %v567
        %v572 = vadd.f32 %v564, %v568
        %v573 = vadd.f32 %v565, %v569
        %v574 = vadd.f32 %v566, %v570
        %v575 = vmul.f32 %v334, %v334
        %v576 = vmul.f32 %v335, %v335
        %v577 = vmul.f32 %v336, %v336
        %v578 = vmul.f32 %v337, %v337
        %v579 = vadd.f32 %v571, %v575
        %v580 = vadd.f32 %v572, %v576
        %v581 = vadd.f32 %v573, %v577
        %v582 = vadd.f32 %v574, %v578
        %v583 = vmul.f32 %v379, %v379
        %v584 = vmul.f32 %v380, %v380
        %v585 = vmul.f32 %v381, %v381
        %v586 = vmul.f32 %v382, %v382
        %v587 = vadd.f32 %v579, %v583
        %v588 = vadd.f32 %v580, %v584
        %v589 = vadd.f32 %v581, %v585
        %v590 = vadd.f32 %v582, %v586
        %v591 = vmul.f32 %v424, %v424
        %v592 = vmul.f32 %v425, %v425
        %v593 = vmul.f32 %v426, %v426
        %v594 = vmul.f32 %v427, %v427
        %v595 = vadd.f32 %v587, %v591
        %v596 = vadd.f32 %v588, %v592
        %v597 = vadd.f32 %v589, %v593
        %v598 = vadd.f32 %v590, %v594
        %v599 = vmul.f32 %v469, %v469
        %v600 = vmul.f32 %v470, %v470
        %v601 = vmul.f32 %v471, %v471
        %v602 = vmul.f32 %v472, %v472
        %v603 = vadd.f32 %v595, %v599
        %v604 = vadd.f32 %v596, %v600
        %v605 = vadd.f32 %v597, %v601
        %v606 = vadd.f32 %v598, %v602
        %v607 = vmul.f32 %v514, %v514
        %v608 = vmul.f32 %v515, %v515
        %v609 = vmul.f32 %v516, %v516
        %v610 = vmul.f32 %v517, %v517
        %v611 = vadd.f32 %v603, %v607
        %v612 = vadd.f32 %v604, %v608
        %v613 = vadd.f32 %v605, %v609
        %v614 = vadd.f32 %v606, %v610
        %v615 = vmul.f32 %v559, %v559
        %v616 = vmul.f32 %v560, %v560
        %v617 = vmul.f32 %v561, %v561
        %v618 = vmul.f32 %v562, %v562
        %v619 = vadd.f32 %v611, %v615
        %v620 = vadd.f32 %v612, %v616
        %v621 = vadd.f32 %v613, %v617
        %v622 = vadd.f32 %v614, %v618
        %v623 = vmax.f32 %v619, 1e-24
        %v624 = vmax.f32 %v620, 1e-24
        %v625 = vmax.f32 %v621, 1e-24
        %v626 = vmax.f32 %v622, 1e-24
        %v627 = vrsqrt.pop %v623
        %v628 = vmul.f32 %v627, %v623
        %v629 = vmul.f32 %v628, %v627
        %v630 = vmul.f32 0.5, %v629
        %v631 = vsub.f32 1.5, %v630
        %v632 = vmul.f32 %v627, %v631
        %vm633 = vweird.f32 %v623
        %vm634 = vweird.f32 %v627
        %vm635 = vmor %vm633, %vm634
        %v636 = vsel %vm635, %v627, %v632
        %v637 = vrsqrt.pop %v624
        %v638 = vmul.f32 %v637, %v624
        %v639 = vmul.f32 %v638, %v637
        %v640 = vmul.f32 0.5, %v639
        %v641 = vsub.f32 1.5, %v640
        %v642 = vmul.f32 %v637, %v641
        %vm643 = vweird.f32 %v624
        %vm644 = vweird.f32 %v637
        %vm645 = vmor %vm643, %vm644
        %v646 = vsel %vm645, %v637, %v642
        %v647 = vrsqrt.pop %v625
        %v648 = vmul.f32 %v647, %v625
        %v649 = vmul.f32 %v648, %v647
        %v650 = vmul.f32 0.5, %v649
        %v651 = vsub.f32 1.5, %v650
        %v652 = vmul.f32 %v647, %v651
        %vm653 = vweird.f32 %v625
        %vm654 = vweird.f32 %v647
        %vm655 = vmor %vm653, %vm654
        %v656 = vsel %vm655, %v647, %v652
        %v657 = vrsqrt.pop %v626
        %v658 = vmul.f32 %v657, %v626
        %v659 = vmul.f32 %v658, %v657
        %v660 = vmul.f32 0.5, %v659
        %v661 = vsub.f32 1.5, %v660
        %v662 = vmul.f32 %v657, %v661
        %vm663 = vweird.f32 %v626
        %vm664 = vweird.f32 %v657
        %vm665 = vmor %vm663, %vm664
        %v666 = vsel %vm665, %v657, %v662
        %v667 = vmul.f32 %v244, %v636
        %v668 = vmul.f32 %v245, %v646
        %v669 = vmul.f32 %v246, %v656
        %v670 = vmul.f32 %v247, %v666
        %v671 = vmul.f32 %v289, %v636
        %v672 = vmul.f32 %v290, %v646
        %v673 = vmul.f32 %v291, %v656
        %v674 = vmul.f32 %v292, %v666
        %v675 = vmul.f32 %v334, %v636
        %v676 = vmul.f32 %v335, %v646
        %v677 = vmul.f32 %v336, %v656
        %v678 = vmul.f32 %v337, %v666
        %v679 = vmul.f32 %v379, %v636
        %v680 = vmul.f32 %v380, %v646
        %v681 = vmul.f32 %v381, %v656
        %v682 = vmul.f32 %v382, %v666
        %v683 = vmul.f32 %v424, %v636
        %v684 = vmul.f32 %v425, %v646
        %v685 = vmul.f32 %v426, %v656
        %v686 = vmul.f32 %v427, %v666
        %v687 = vmul.f32 %v469, %v636
        %v688 = vmul.f32 %v470, %v646
        %v689 = vmul.f32 %v471, %v656
        %v690 = vmul.f32 %v472, %v666
        %v691 = vmul.f32 %v514, %v636
        %v692 = vmul.f32 %v515, %v646
        %v693 = vmul.f32 %v516, %v656
        %v694 = vmul.f32 %v517, %v666
        %v695 = vmul.f32 %v559, %v636
        %v696 = vmul.f32 %v560, %v646
        %v697 = vmul.f32 %v561, %v656
        %v698 = vmul.f32 %v562, %v666
        %v699 = vmul.f32 %v205, %v667
        %v700 = vmul.f32 %v206, %v668
        %v701 = vmul.f32 %v207, %v669
        %v702 = vmul.f32 %v208, %v670
        %v703 = vmul.f32 %v249, %v671
        %v704 = vmul.f32 %v250, %v672
        %v705 = vmul.f32 %v251, %v673
        %v706 = vmul.f32 %v252, %v674
        %v707 = vadd.f32 %v699, %v703
        %v708 = vadd.f32 %v700, %v704
        %v709 = vadd.f32 %v701, %v705
        %v710 = vadd.f32 %v702, %v706
        %v711 = vmul.f32 %v294, %v675
        %v712 = vmul.f32 %v295, %v676
        %v713 = vmul.f32 %v296, %v677
        %v714 = vmul.f32 %v297, %v678
        %v715 = vadd.f32 %v707, %v711
        %v716 = vadd.f32 %v708, %v712
        %v717 = vadd.f32 %v709, %v713
        %v718 = vadd.f32 %v710, %v714
        %v719 = vmul.f32 %v339, %v679
        %v720 = vmul.f32 %v340, %v680
        %v721 = vmul.f32 %v341, %v681
        %v722 = vmul.f32 %v342, %v682
        %v723 = vadd.f32 %v715, %v719
        %v724 = vadd.f32 %v716, %v720
        %v725 = vadd.f32 %v717, %v721
        %v726 = vadd.f32 %v718, %v722
        %v727 = vmul.f32 %v384, %v683
        %v728 = vmul.f32 %v385, %v684
        %v729 = vmul.f32 %v386, %v685
        %v730 = vmul.f32 %v387, %v686
        %v731 = vadd.f32 %v723, %v727
        %v732 = vadd.f32 %v724, %v728
        %v733 = vadd.f32 %v725, %v729
        %v734 = vadd.f32 %v726, %v730
        %v735 = vmul.f32 %v429, %v687
        %v736 = vmul.f32 %v430, %v688
        %v737 = vmul.f32 %v431, %v689
        %v738 = vmul.f32 %v432, %v690
        %v739 = vadd.f32 %v731, %v735
        %v740 = vadd.f32 %v732, %v736
        %v741 = vadd.f32 %v733, %v737
        %v742 = vadd.f32 %v734, %v738
        %v743 = vmul.f32 %v474, %v691
        %v744 = vmul.f32 %v475, %v692
        %v745 = vmul.f32 %v476, %v693
        %v746 = vmul.f32 %v477, %v694
        %v747 = vadd.f32 %v739, %v743
        %v748 = vadd.f32 %v740, %v744
        %v749 = vadd.f32 %v741, %v745
        %v750 = vadd.f32 %v742, %v746
        %v751 = vmul.f32 %v519, %v695
        %v752 = vmul.f32 %v520, %v696
        %v753 = vmul.f32 %v521, %v697
        %v754 = vmul.f32 %v522, %v698
        %v755 = vadd.f32 %v747, %v751
        %v756 = vadd.f32 %v748, %v752
        %v757 = vadd.f32 %v749, %v753
        %v758 = vadd.f32 %v750, %v754
        %v759 = vmax.f32 %v755, %v756
        %v760 = vmax.f32 %v757, %v758
        %v761 = vmax.f32 %v759, %v760
        %v762 = vsub.f32 %v755, %v761
        %v763 = vsub.f32 %v756, %v761
        %v764 = vsub.f32 %v757, %v761
        %v765 = vsub.f32 %v758, %v761
        %v766 = vmul.f32 %v762, 1.442695
        %v767 = vpow.pop %v766
        %v768 = vmul.f32 %v763, 1.442695
        %v769 = vpow.pop %v768
        %v770 = vmul.f32 %v764, 1.442695
        %v771 = vpow.pop %v770
        %v772 = vmul.f32 %v765, 1.442695
        %v773 = vpow.pop %v772
        %v774 = vadd.f32 %v767, %v769
        %v775 = vadd.f32 %v774, %v771
        %v776 = vadd.f32 %v775, %v773
        %v777 = vrcp.pop %v776
        %v778 = vmul.f32 %v776, %v777
        %v779 = vsub.f32 1.0, %v778
        %v780 = vmul.f32 %v777, %v779
        %v781 = vadd.f32 %v777, %v780
        %vm782 = vweird.f32 %v776
        %vm783 = vweird.f32 %v777
        %vm784 = vmor %vm782, %vm783
        %v785 = vsel %vm784, %v777, %v781
        %v786 = vand.u32 2147483647, %v776
        %vm787 = vcmp.eq.f32.partialorder %v786, 8.507059e+37
        %v788 = vand.u32 %v776, 2147483648
        %v789 = vor.u32 1.1754944e-38, %v788
        %v790 = vsel %vm787, %v789, %v785
        %v791 = vmul.f32 %v767, %v790
        %v792 = vmul.f32 %v769, %v790
        %v793 = vmul.f32 %v771, %v790
        %v794 = vmul.f32 %v773, %v790
        %v795 = vmul.f32 %v210, %v667
        %v796 = vmul.f32 %v211, %v668
        %v797 = vmul.f32 %v212, %v669
        %v798 = vmul.f32 %v213, %v670
        %v799 = vmul.f32 %v254, %v671
        %v800 = vmul.f32 %v255, %v672
        %v801 = vmul.f32 %v256, %v673
        %v802 = vmul.f32 %v257, %v674
        %v803 = vadd.f32 %v795, %v799
        %v804 = vadd.f32 %v796, %v800
        %v805 = vadd.f32 %v797, %v801
        %v806 = vadd.f32 %v798, %v802
        %v807 = vmul.f32 %v299, %v675
        %v808 = vmul.f32 %v300, %v676
        %v809 = vmul.f32 %v301, %v677
        %v810 = vmul.f32 %v302, %v678
        %v811 = vadd.f32 %v803, %v807
        %v812 = vadd.f32 %v804, %v808
        %v813 = vadd.f32 %v805, %v809
        %v814 = vadd.f32 %v806, %v810
        %v815 = vmul.f32 %v344, %v679
        %v816 = vmul.f32 %v345, %v680
        %v817 = vmul.f32 %v346, %v681
        %v818 = vmul.f32 %v347, %v682
        %v819 = vadd.f32 %v811, %v815
        %v820 = vadd.f32 %v812, %v816
        %v821 = vadd.f32 %v813, %v817
        %v822 = vadd.f32 %v814, %v818
        %v823 = vmul.f32 %v389, %v683
        %v824 = vmul.f32 %v390, %v684
        %v825 = vmul.f32 %v391, %v685
        %v826 = vmul.f32 %v392, %v686
        %v827 = vadd.f32 %v819, %v823
        %v828 = vadd.f32 %v820, %v824
        %v829 = vadd.f32 %v821, %v825
        %v830 = vadd.f32 %v822, %v826
        %v831 = vmul.f32 %v434, %v687
        %v832 = vmul.f32 %v435, %v688
        %v833 = vmul.f32 %v436, %v689
        %v834 = vmul.f32 %v437, %v690
        %v835 = vadd.f32 %v827, %v831
        %v836 = vadd.f32 %v828, %v832
        %v837 = vadd.f32 %v829, %v833
        %v838 = vadd.f32 %v830, %v834
        %v839 = vmul.f32 %v479, %v691
        %v840 = vmul.f32 %v480, %v692
        %v841 = vmul.f32 %v481, %v693
        %v842 = vmul.f32 %v482, %v694
        %v843 = vadd.f32 %v835, %v839
        %v844 = vadd.f32 %v836, %v840
        %v845 = vadd.f32 %v837, %v841
        %v846 = vadd.f32 %v838, %v842
        %v847 = vmul.f32 %v524, %v695
        %v848 = vmul.f32 %v525, %v696
        %v849 = vmul.f32 %v526, %v697
        %v850 = vmul.f32 %v527, %v698
        %v851 = vadd.f32 %v843, %v847
        %v852 = vadd.f32 %v844, %v848
        %v853 = vadd.f32 %v845, %v849
        %v854 = vadd.f32 %v846, %v850
        %v855 = vmax.f32 %v851, %v852
        %v856 = vmax.f32 %v853, %v854
        %v857 = vmax.f32 %v855, %v856
        %v858 = vsub.f32 %v851, %v857
        %v859 = vsub.f32 %v852, %v857
        %v860 = vsub.f32 %v853, %v857
        %v861 = vsub.f32 %v854, %v857
        %v862 = vmul.f32 %v858, 1.442695
        %v863 = vpow.pop %v862
        %v864 = vmul.f32 %v859, 1.442695
        %v865 = vpow.pop %v864
        %v866 = vmul.f32 %v860, 1.442695
        %v867 = vpow.pop %v866
        %v868 = vmul.f32 %v861, 1.442695
        %v869 = vpow.pop %v868
        %v870 = vadd.f32 %v863, %v865
        %v871 = vadd.f32 %v870, %v867
        %v872 = vadd.f32 %v871, %v869
        %v873 = vrcp.pop %v872
        %v874 = vmul.f32 %v872, %v873
        %v875 = vsub.f32 1.0, %v874
        %v876 = vmul.f32 %v873, %v875
        %v877 = vadd.f32 %v873, %v876
        %vm878 = vweird.f32 %v872
        %vm879 = vweird.f32 %v873
        %vm880 = vmor %vm878, %vm879
        %v881 = vsel %vm880, %v873, %v877
        %v882 = vand.u32 2147483647, %v872
        %vm883 = vcmp.eq.f32.partialorder %v882, 8.507059e+37
        %v884 = vand.u32 %v872, 2147483648
        %v885 = vor.u32 1.1754944e-38, %v884
        %v886 = vsel %vm883, %v885, %v881
        %v887 = vmul.f32 %v863, %v886
        %v888 = vmul.f32 %v865, %v886
        %v889 = vmul.f32 %v867, %v886
        %v890 = vmul.f32 %v869, %v886
        %v891 = vmul.f32 %v219, %v667
        %v892 = vmul.f32 %v220, %v668
        %v893 = vmul.f32 %v221, %v669
        %v894 = vmul.f32 %v222, %v670
        %v895 = vmul.f32 %v263, %v671
        %v896 = vmul.f32 %v264, %v672
        %v897 = vmul.f32 %v265, %v673
        %v898 = vmul.f32 %v266, %v674
        %v899 = vadd.f32 %v891, %v895
        %v900 = vadd.f32 %v892, %v896
        %v901 = vadd.f32 %v893, %v897
        %v902 = vadd.f32 %v894, %v898
        %v903 = vmul.f32 %v308, %v675
        %v904 = vmul.f32 %v309, %v676
        %v905 = vmul.f32 %v310, %v677
        %v906 = vmul.f32 %v311, %v678
        %v907 = vadd.f32 %v899, %v903
        %v908 = vadd.f32 %v900, %v904
        %v909 = vadd.f32 %v901, %v905
        %v910 = vadd.f32 %v902, %v906
        %v911 = vmul.f32 %v353, %v679
        %v912 = vmul.f32 %v354, %v680
        %v913 = vmul.f32 %v355, %v681
        %v914 = vmul.f32 %v356, %v682
        %v915 = vadd.f32 %v907, %v911
        %v916 = vadd.f32 %v908, %v912
        %v917 = vadd.f32 %v909, %v913
        %v918 = vadd.f32 %v910, %v914
        %v919 = vmul.f32 %v398, %v683
        %v920 = vmul.f32 %v399, %v684
        %v921 = vmul.f32 %v400, %v685
        %v922 = vmul.f32 %v401, %v686
        %v923 = vadd.f32 %v915, %v919
        %v924 = vadd.f32 %v916, %v920
        %v925 = vadd.f32 %v917, %v921
        %v926 = vadd.f32 %v918, %v922
        %v927 = vmul.f32 %v443, %v687
        %v928 = vmul.f32 %v444, %v688
        %v929 = vmul.f32 %v445, %v689
        %v930 = vmul.f32 %v446, %v690
        %v931 = vadd.f32 %v923, %v927
        %v932 = vadd.f32 %v924, %v928
        %v933 = vadd.f32 %v925, %v929
        %v934 = vadd.f32 %v926, %v930
        %v935 = vmul.f32 %v488, %v691
        %v936 = vmul.f32 %v489, %v692
        %v937 = vmul.f32 %v490, %v693
        %v938 = vmul.f32 %v491, %v694
        %v939 = vadd.f32 %v931, %v935
        %v940 = vadd.f32 %v932, %v936
        %v941 = vadd.f32 %v933, %v937
        %v942 = vadd.f32 %v934, %v938
        %v943 = vmul.f32 %v533, %v695
        %v944 = vmul.f32 %v534, %v696
        %v945 = vmul.f32 %v535, %v697
        %v946 = vmul.f32 %v536, %v698
        %v947 = vadd.f32 %v939, %v943
        %v948 = vadd.f32 %v940, %v944
        %v949 = vadd.f32 %v941, %v945
        %v950 = vadd.f32 %v942, %v946
        %v951 = vmax.f32 %v947, %v948
        %v952 = vmax.f32 %v949, %v950
        %v953 = vmax.f32 %v951, %v952
        %v954 = vsub.f32 %v947, %v953
        %v955 = vsub.f32 %v948, %v953
        %v956 = vsub.f32 %v949, %v953
        %v957 = vsub.f32 %v950, %v953
        %v958 = vmul.f32 %v954, 1.442695
        %v959 = vpow.pop %v958
        %v960 = vmul.f32 %v955, 1.442695
        %v961 = vpow.pop %v960
        %v962 = vmul.f32 %v956, 1.442695
        %v963 = vpow.pop %v962
        %v964 = vmul.f32 %v957, 1.442695
        %v965 = vpow.pop %v964
        %v966 = vadd.f32 %v959, %v961
        %v967 = vadd.f32 %v966, %v963
        %v968 = vadd.f32 %v967, %v965
        %v969 = vrcp.pop %v968
        %v970 = vmul.f32 %v968, %v969
        %v971 = vsub.f32 1.0, %v970
        %v972 = vmul.f32 %v969, %v971
        %v973 = vadd.f32 %v969, %v972
        %vm974 = vweird.f32 %v968
        %vm975 = vweird.f32 %v969
        %vm976 = vmor %vm974, %vm975
        %v977 = vsel %vm976, %v969, %v973
        %v978 = vand.u32 2147483647, %v968
        %vm979 = vcmp.eq.f32.partialorder %v978, 8.507059e+37
        %v980 = vand.u32 %v968, 2147483648
        %v981 = vor.u32 1.1754944e-38, %v980
        %v982 = vsel %vm979, %v981, %v977
        %v983 = vmul.f32 %v959, %v982
        %v984 = vmul.f32 %v961, %v982
        %v985 = vmul.f32 %v963, %v982
        %v986 = vmul.f32 %v965, %v982
        %v987 = vmul.f32 %v228, %v667
        %v988 = vmul.f32 %v229, %v668
        %v989 = vmul.f32 %v230, %v669
        %v990 = vmul.f32 %v231, %v670
        %v991 = vmul.f32 %v272, %v671
        %v992 = vmul.f32 %v273, %v672
        %v993 = vmul.f32 %v274, %v673
        %v994 = vmul.f32 %v275, %v674
        %v995 = vadd.f32 %v987, %v991
        %v996 = vadd.f32 %v988, %v992
        %v997 = vadd.f32 %v989, %v993
        %v998 = vadd.f32 %v990, %v994
        %v999 = vmul.f32 %v317, %v675
        %v1000 = vmul.f32 %v318, %v676
        %v1001 = vmul.f32 %v319, %v677
        %v1002 = vmul.f32 %v320, %v678
        %v1003 = vadd.f32 %v995, %v999
        %v1004 = vadd.f32 %v996, %v1000
        %v1005 = vadd.f32 %v997, %v1001
        %v1006 = vadd.f32 %v998, %v1002
        %v1007 = vmul.f32 %v362, %v679
        %v1008 = vmul.f32 %v363, %v680
        %v1009 = vmul.f32 %v364, %v681
        %v1010 = vmul.f32 %v365, %v682
        %v1011 = vadd.f32 %v1003, %v1007
        %v1012 = vadd.f32 %v1004, %v1008
        %v1013 = vadd.f32 %v1005, %v1009
        %v1014 = vadd.f32 %v1006, %v1010
        %v1015 = vmul.f32 %v407, %v683
        %v1016 = vmul.f32 %v408, %v684
        %v1017 = vmul.f32 %v409, %v685
        %v1018 = vmul.f32 %v410, %v686
        %v1019 = vadd.f32 %v1011, %v1015
        %v1020 = vadd.f32 %v1012, %v1016
        %v1021 = vadd.f32 %v1013, %v1017
        %v1022 = vadd.f32 %v1014, %v1018
        %v1023 = vmul.f32 %v452, %v687
        %v1024 = vmul.f32 %v453, %v688
        %v1025 = vmul.f32 %v454, %v689
        %v1026 = vmul.f32 %v455, %v690
        %v1027 = vadd.f32 %v1019, %v1023
        %v1028 = vadd.f32 %v1020, %v1024
        %v1029 = vadd.f32 %v1021, %v1025
        %v1030 = vadd.f32 %v1022, %v1026
        %v1031 = vmul.f32 %v497, %v691
        %v1032 = vmul.f32 %v498, %v692
        %v1033 = vmul.f32 %v499, %v693
        %v1034 = vmul.f32 %v500, %v694
        %v1035 = vadd.f32 %v1027, %v1031
        %v1036 = vadd.f32 %v1028, %v1032
        %v1037 = vadd.f32 %v1029, %v1033
        %v1038 = vadd.f32 %v1030, %v1034
        %v1039 = vmul.f32 %v542, %v695
        %v1040 = vmul.f32 %v543, %v696
        %v1041 = vmul.f32 %v544, %v697
        %v1042 = vmul.f32 %v545, %v698
        %v1043 = vadd.f32 %v1035, %v1039
        %v1044 = vadd.f32 %v1036, %v1040
        %v1045 = vadd.f32 %v1037, %v1041
        %v1046 = vadd.f32 %v1038, %v1042
        %v1047 = vmax.f32 %v1043, %v1044
        %v1048 = vmax.f32 %v1045, %v1046
        %v1049 = vmax.f32 %v1047, %v1048
        %v1050 = vsub.f32 %v1043, %v1049
        %v1051 = vsub.f32 %v1044, %v1049
        %v1052 = vsub.f32 %v1045, %v1049
        %v1053 = vsub.f32 %v1046, %v1049
        %v1054 = vmul.f32 %v1050, 1.442695
        %v1055 = vpow.pop %v1054
        %v1056 = vmul.f32 %v1051, 1.442695
        %v1057 = vpow.pop %v1056
        %v1058 = vmul.f32 %v1052, 1.442695
        %v1059 = vpow.pop %v1058
        %v1060 = vmul.f32 %v1053, 1.442695
        %v1061 = vpow.pop %v1060
        %v1062 = vadd.f32 %v1055, %v1057
        %v1063 = vadd.f32 %v1062, %v1059
        %v1064 = vadd.f32 %v1063, %v1061
        %v1065 = vrcp.pop %v1064
        %v1066 = vmul.f32 %v1064, %v1065
        %v1067 = vsub.f32 1.0, %v1066
        %v1068 = vmul.f32 %v1065, %v1067
        %v1069 = vadd.f32 %v1065, %v1068
        %vm1070 = vweird.f32 %v1064
        %vm1071 = vweird.f32 %v1065
        %vm1072 = vmor %vm1070, %vm1071
        %v1073 = vsel %vm1072, %v1065, %v1069
        %v1074 = vand.u32 2147483647, %v1064
        %vm1075 = vcmp.eq.f32.partialorder %v1074, 8.507059e+37
        %v1076 = vand.u32 %v1064, 2147483648
        %v1077 = vor.u32 1.1754944e-38, %v1076
        %v1078 = vsel %vm1075, %v1077, %v1073
        %v1079 = vmul.f32 %v1055, %v1078
        %v1080 = vmul.f32 %v1057, %v1078
        %v1081 = vmul.f32 %v1059, %v1078
        %v1082 = vmul.f32 %v1061, %v1078
        %v1083 = vmul.f32 %v205, %v791
        %v1084 = vmul.f32 %v206, %v792
        %v1085 = vmul.f32 %v207, %v793
        %v1086 = vmul.f32 %v208, %v794
        %v1087 = vadd.f32 %v240, %v1083
        %v1088 = vadd.f32 %v241, %v1084
        %v1089 = vadd.f32 %v242, %v1085
        %v1090 = vadd.f32 %v243, %v1086
        %v1091 = vmul.f32 %v210, %v887
        %v1092 = vmul.f32 %v211, %v888
        %v1093 = vmul.f32 %v212, %v889
        %v1094 = vmul.f32 %v213, %v890
        %v1095 = vadd.f32 %v1087, %v1091
        %v1096 = vadd.f32 %v1088, %v1092
        %v1097 = vadd.f32 %v1089, %v1093
        %v1098 = vadd.f32 %v1090, %v1094
        %v1099 = vmul.f32 %v219, %v983
        %v1100 = vmul.f32 %v220, %v984
        %v1101 = vmul.f32 %v221, %v985
        %v1102 = vmul.f32 %v222, %v986
        %v1103 = vadd.f32 %v1095, %v1099
        %v1104 = vadd.f32 %v1096, %v1100
        %v1105 = vadd.f32 %v1097, %v1101
        %v1106 = vadd.f32 %v1098, %v1102
        %v1107 = vmul.f32 %v228, %v1079
        %v1108 = vmul.f32 %v229, %v1080
        %v1109 = vmul.f32 %v230, %v1081
        %v1110 = vmul.f32 %v231, %v1082
        %v1111 = vadd.f32 %v1103, %v1107
        %v1112 = vadd.f32 %v1104, %v1108
        %v1113 = vadd.f32 %v1105, %v1109
        %v1114 = vadd.f32 %v1106, %v1110
        %v1115 = vmul.f32 %v249, %v791
        %v1116 = vmul.f32 %v250, %v792
        %v1117 = vmul.f32 %v251, %v793
        %v1118 = vmul.f32 %v252, %v794
        %v1119 = vadd.f32 %v285, %v1115
        %v1120 = vadd.f32 %v286, %v1116
        %v1121 = vadd.f32 %v287, %v1117
        %v1122 = vadd.f32 %v288, %v1118
        %v1123 = vmul.f32 %v254, %v887
        %v1124 = vmul.f32 %v255, %v888
        %v1125 = vmul.f32 %v256, %v889
        %v1126 = vmul.f32 %v257, %v890
        %v1127 = vadd.f32 %v1119, %v1123
        %v1128 = vadd.f32 %v1120, %v1124
        %v1129 = vadd.f32 %v1121, %v1125
        %v1130 = vadd.f32 %v1122, %v1126
        %v1131 = vmul.f32 %v263, %v983
        %v1132 = vmul.f32 %v264, %v984
        %v1133 = vmul.f32 %v265, %v985
        %v1134 = vmul.f32 %v266, %v986
        %v1135 = vadd.f32 %v1127, %v1131
        %v1136 = vadd.f32 %v1128, %v1132
        %v1137 = vadd.f32 %v1129, %v1133
        %v1138 = vadd.f32 %v1130, %v1134
        %v1139 = vmul.f32 %v272, %v1079
        %v1140 = vmul.f32 %v273, %v1080
        %v1141 = vmul.f32 %v274, %v1081
        %v1142 = vmul.f32 %v275, %v1082
        %v1143 = vadd.f32 %v1135, %v1139
        %v1144 = vadd.f32 %v1136, %v1140
        %v1145 = vadd.f32 %v1137, %v1141
        %v1146 = vadd.f32 %v1138, %v1142
        %v1147 = vmul.f32 %v294, %v791
        %v1148 = vmul.f32 %v295, %v792
        %v1149 = vmul.f32 %v296, %v793
        %v1150 = vmul.f32 %v297, %v794
        %v1151 = vadd.f32 %v330, %v1147
        %v1152 = vadd.f32 %v331, %v1148
        %v1153 = vadd.f32 %v332, %v1149
        %v1154 = vadd.f32 %v333, %v1150
        %v1155 = vmul.f32 %v299, %v887
        %v1156 = vmul.f32 %v300, %v888
        %v1157 = vmul.f32 %v301, %v889
        %v1158 = vmul.f32 %v302, %v890
        %v1159 = vadd.f32 %v1151, %v1155
        %v1160 = vadd.f32 %v1152, %v1156
        %v1161 = vadd.f32 %v1153, %v1157
        %v1162 = vadd.f32 %v1154, %v1158
        %v1163 = vmul.f32 %v308, %v983
        %v1164 = vmul.f32 %v309, %v984
        %v1165 = vmul.f32 %v310, %v985
        %v1166 = vmul.f32 %v311, %v986
        %v1167 = vadd.f32 %v1159, %v1163
        %v1168 = vadd.f32 %v1160, %v1164
        %v1169 = vadd.f32 %v1161, %v1165
        %v1170 = vadd.f32 %v1162, %v1166
        %v1171 = vmul.f32 %v317, %v1079
        %v1172 = vmul.f32 %v318, %v1080
        %v1173 = vmul.f32 %v319, %v1081
        %v1174 = vmul.f32 %v320, %v1082
        %v1175 = vadd.f32 %v1167, %v1171
        %v1176 = vadd.f32 %v1168, %v1172
        %v1177 = vadd.f32 %v1169, %v1173
        %v1178 = vadd.f32 %v1170, %v1174
        %v1179 = vmul.f32 %v339, %v791
        %v1180 = vmul.f32 %v340, %v792
        %v1181 = vmul.f32 %v341, %v793
        %v1182 = vmul.f32 %v342, %v794
        %v1183 = vadd.f32 %v375, %v1179
        %v1184 = vadd.f32 %v376, %v1180
        %v1185 = vadd.f32 %v377, %v1181
        %v1186 = vadd.f32 %v378, %v1182
        %v1187 = vmul.f32 %v344, %v887
        %v1188 = vmul.f32 %v345, %v888
        %v1189 = vmul.f32 %v346, %v889
        %v1190 = vmul.f32 %v347, %v890
        %v1191 = vadd.f32 %v1183, %v1187
        %v1192 = vadd.f32 %v1184, %v1188
        %v1193 = vadd.f32 %v1185, %v1189
        %v1194 = vadd.f32 %v1186, %v1190
        %v1195 = vmul.f32 %v353, %v983
        %v1196 = vmul.f32 %v354, %v984
        %v1197 = vmul.f32 %v355, %v985
        %v1198 = vmul.f32 %v356, %v986
        %v1199 = vadd.f32 %v1191, %v1195
        %v1200 = vadd.f32 %v1192, %v1196
        %v1201 = vadd.f32 %v1193, %v1197
        %v1202 = vadd.f32 %v1194, %v1198
        %v1203 = vmul.f32 %v362, %v1079
        %v1204 = vmul.f32 %v363, %v1080
        %v1205 = vmul.f32 %v364, %v1081
        %v1206 = vmul.f32 %v365, %v1082
        %v1207 = vadd.f32 %v1199, %v1203
        %v1208 = vadd.f32 %v1200, %v1204
        %v1209 = vadd.f32 %v1201, %v1205
        %v1210 = vadd.f32 %v1202, %v1206
        %v1211 = vmul.f32 %v384, %v791
        %v1212 = vmul.f32 %v385, %v792
        %v1213 = vmul.f32 %v386, %v793
        %v1214 = vmul.f32 %v387, %v794
        %v1215 = vadd.f32 %v420, %v1211
        %v1216 = vadd.f32 %v421, %v1212
        %v1217 = vadd.f32 %v422, %v1213
        %v1218 = vadd.f32 %v423, %v1214
        %v1219 = vmul.f32 %v389, %v887
        %v1220 = vmul.f32 %v390, %v888
        %v1221 = vmul.f32 %v391, %v889
        %v1222 = vmul.f32 %v392, %v890
        %v1223 = vadd.f32 %v1215, %v1219
        %v1224 = vadd.f32 %v1216, %v1220
        %v1225 = vadd.f32 %v1217, %v1221
        %v1226 = vadd.f32 %v1218, %v1222
        %v1227 = vmul.f32 %v398, %v983
        %v1228 = vmul.f32 %v399, %v984
        %v1229 = vmul.f32 %v400, %v985
        %v1230 = vmul.f32 %v401, %v986
        %v1231 = vadd.f32 %v1223, %v1227
        %v1232 = vadd.f32 %v1224, %v1228
        %v1233 = vadd.f32 %v1225, %v1229
        %v1234 = vadd.f32 %v1226, %v1230
        %v1235 = vmul.f32 %v407, %v1079
        %v1236 = vmul.f32 %v408, %v1080
        %v1237 = vmul.f32 %v409, %v1081
        %v1238 = vmul.f32 %v410, %v1082
        %v1239 = vadd.f32 %v1231, %v1235
        %v1240 = vadd.f32 %v1232, %v1236
        %v1241 = vadd.f32 %v1233, %v1237
        %v1242 = vadd.f32 %v1234, %v1238
        %v1243 = vmul.f32 %v429, %v791
        %v1244 = vmul.f32 %v430, %v792
        %v1245 = vmul.f32 %v431, %v793
        %v1246 = vmul.f32 %v432, %v794
        %v1247 = vadd.f32 %v465, %v1243
        %v1248 = vadd.f32 %v466, %v1244
        %v1249 = vadd.f32 %v467, %v1245
        %v1250 = vadd.f32 %v468, %v1246
        %v1251 = vmul.f32 %v434, %v887
        %v1252 = vmul.f32 %v435, %v888
        %v1253 = vmul.f32 %v436, %v889
        %v1254 = vmul.f32 %v437, %v890
        %v1255 = vadd.f32 %v1247, %v1251
        %v1256 = vadd.f32 %v1248, %v1252
        %v1257 = vadd.f32 %v1249, %v1253
        %v1258 = vadd.f32 %v1250, %v1254
        %v1259 = vmul.f32 %v443, %v983
        %v1260 = vmul.f32 %v444, %v984
        %v1261 = vmul.f32 %v445, %v985
        %v1262 = vmul.f32 %v446, %v986
        %v1263 = vadd.f32 %v1255, %v1259
        %v1264 = vadd.f32 %v1256, %v1260
        %v1265 = vadd.f32 %v1257, %v1261
        %v1266 = vadd.f32 %v1258, %v1262
        %v1267 = vmul.f32 %v452, %v1079
        %v1268 = vmul.f32 %v453, %v1080
        %v1269 = vmul.f32 %v454, %v1081
        %v1270 = vmul.f32 %v455, %v1082
        %v1271 = vadd.f32 %v1263, %v1267
        %v1272 = vadd.f32 %v1264, %v1268
        %v1273 = vadd.f32 %v1265, %v1269
        %v1274 = vadd.f32 %v1266, %v1270
        %v1275 = vmul.f32 %v474, %v791
        %v1276 = vmul.f32 %v475, %v792
        %v1277 = vmul.f32 %v476, %v793
        %v1278 = vmul.f32 %v477, %v794
        %v1279 = vadd.f32 %v510, %v1275
        %v1280 = vadd.f32 %v511, %v1276
        %v1281 = vadd.f32 %v512, %v1277
        %v1282 = vadd.f32 %v513, %v1278
        %v1283 = vmul.f32 %v479, %v887
        %v1284 = vmul.f32 %v480, %v888
        %v1285 = vmul.f32 %v481, %v889
        %v1286 = vmul.f32 %v482, %v890
        %v1287 = vadd.f32 %v1279, %v1283
        %v1288 = vadd.f32 %v1280, %v1284
        %v1289 = vadd.f32 %v1281, %v1285
        %v1290 = vadd.f32 %v1282, %v1286
        %v1291 = vmul.f32 %v488, %v983
        %v1292 = vmul.f32 %v489, %v984
        %v1293 = vmul.f32 %v490, %v985
        %v1294 = vmul.f32 %v491, %v986
        %v1295 = vadd.f32 %v1287, %v1291
        %v1296 = vadd.f32 %v1288, %v1292
        %v1297 = vadd.f32 %v1289, %v1293
        %v1298 = vadd.f32 %v1290, %v1294
        %v1299 = vmul.f32 %v497, %v1079
        %v1300 = vmul.f32 %v498, %v1080
        %v1301 = vmul.f32 %v499, %v1081
        %v1302 = vmul.f32 %v500, %v1082
        %v1303 = vadd.f32 %v1295, %v1299
        %v1304 = vadd.f32 %v1296, %v1300
        %v1305 = vadd.f32 %v1297, %v1301
        %v1306 = vadd.f32 %v1298, %v1302
        %v1307 = vmul.f32 %v519, %v791
        %v1308 = vmul.f32 %v520, %v792
        %v1309 = vmul.f32 %v521, %v793
        %v1310 = vmul.f32 %v522, %v794
        %v1311 = vadd.f32 %v555, %v1307
        %v1312 = vadd.f32 %v556, %v1308
        %v1313 = vadd.f32 %v557, %v1309
        %v1314 = vadd.f32 %v558, %v1310
        %v1315 = vmul.f32 %v524, %v887
        %v1316 = vmul.f32 %v525, %v888
        %v1317 = vmul.f32 %v526, %v889
        %v1318 = vmul.f32 %v527, %v890
        %v1319 = vadd.f32 %v1311, %v1315
        %v1320 = vadd.f32 %v1312, %v1316
        %v1321 = vadd.f32 %v1313, %v1317
        %v1322 = vadd.f32 %v1314, %v1318
        %v1323 = vmul.f32 %v533, %v983
        %v1324 = vmul.f32 %v534, %v984
        %v1325 = vmul.f32 %v535, %v985
        %v1326 = vmul.f32 %v536, %v986
        %v1327 = vadd.f32 %v1319, %v1323
        %v1328 = vadd.f32 %v1320, %v1324
        %v1329 = vadd.f32 %v1321, %v1325
        %v1330 = vadd.f32 %v1322, %v1326
        %v1331 = vmul.f32 %v542, %v1079
        %v1332 = vmul.f32 %v543, %v1080
        %v1333 = vmul.f32 %v544, %v1081
        %v1334 = vmul.f32 %v545, %v1082
        %v1335 = vadd.f32 %v1327, %v1331
        %v1336 = vadd.f32 %v1328, %v1332
        %v1337 = vadd.f32 %v1329, %v1333
        %v1338 = vadd.f32 %v1330, %v1334
        %v1339 = vmul.f32 %v1111, %v1111
        %v1340 = vmul.f32 %v1112, %v1112
        %v1341 = vmul.f32 %v1113, %v1113
        %v1342 = vmul.f32 %v1114, %v1114
        %v1343 = vmul.f32 %v1143, %v1143
        %v1344 = vmul.f32 %v1144, %v1144
        %v1345 = vmul.f32 %v1145, %v1145
        %v1346 = vmul.f32 %v1146, %v1146
        %v1347 = vadd.f32 %v1339, %v1343
        %v1348 = vadd.f32 %v1340, %v1344
        %v1349 = vadd.f32 %v1341, %v1345
        %v1350 = vadd.f32 %v1342, %v1346
        %v1351 = vmul.f32 %v1175, %v1175
        %v1352 = vmul.f32 %v1176, %v1176
        %v1353 = vmul.f32 %v1177, %v1177
        %v1354 = vmul.f32 %v1178, %v1178
        %v1355 = vadd.f32 %v1347, %v1351
        %v1356 = vadd.f32 %v1348, %v1352
        %v1357 = vadd.f32 %v1349, %v1353
        %v1358 = vadd.f32 %v1350, %v1354
        %v1359 = vmul.f32 %v1207, %v1207
        %v1360 = vmul.f32 %v1208, %v1208
        %v1361 = vmul.f32 %v1209, %v1209
        %v1362 = vmul.f32 %v1210, %v1210
        %v1363 = vadd.f32 %v1355, %v1359
        %v1364 = vadd.f32 %v1356, %v1360
        %v1365 = vadd.f32 %v1357, %v1361
        %v1366 = vadd.f32 %v1358, %v1362
        %v1367 = vmul.f32 %v1239, %v1239
        %v1368 = vmul.f32 %v1240, %v1240
        %v1369 = vmul.f32 %v1241, %v1241
        %v1370 = vmul.f32 %v1242, %v1242
        %v1371 = vadd.f32 %v1363, %v1367
        %v1372 = vadd.f32 %v1364, %v1368
        %v1373 = vadd.f32 %v1365, %v1369
        %v1374 = vadd.f32 %v1366, %v1370
        %v1375 = vmul.f32 %v1271, %v1271
        %v1376 = vmul.f32 %v1272, %v1272
        %v1377 = vmul.f32 %v1273, %v1273
        %v1378 = vmul.f32 %v1274, %v1274
        %v1379 = vadd.f32 %v1371, %v1375
        %v1380 = vadd.f32 %v1372, %v1376
        %v1381 = vadd.f32 %v1373, %v1377
        %v1382 = vadd.f32 %v1374, %v1378
        %v1383 = vmul.f32 %v1303, %v1303
        %v1384 = vmul.f32 %v1304, %v1304
        %v1385 = vmul.f32 %v1305, %v1305
        %v1386 = vmul.f32 %v1306, %v1306
        %v1387 = vadd.f32 %v1379, %v1383
        %v1388 = vadd.f32 %v1380, %v1384
        %v1389 = vadd.f32 %v1381, %v1385
        %v1390 = vadd.f32 %v1382, %v1386
        %v1391 = vmul.f32 %v1335, %v1335
        %v1392 = vmul.f32 %v1336, %v1336
        %v1393 = vmul.f32 %v1337, %v1337
        %v1394 = vmul.f32 %v1338, %v1338
        %v1395 = vadd.f32 %v1387, %v1391
        %v1396 = vadd.f32 %v1388, %v1392
        %v1397 = vadd.f32 %v1389, %v1393
        %v1398 = vadd.f32 %v1390, %v1394
        %v1399 = vmax.f32 %v1395, 1e-24
        %v1400 = vmax.f32 %v1396, 1e-24
        %v1401 = vmax.f32 %v1397, 1e-24
        %v1402 = vmax.f32 %v1398, 1e-24
        %v1403 = vrsqrt.pop %v1399
        %v1404 = vmul.f32 %v1403, %v1399
        %v1405 = vmul.f32 %v1404, %v1403
        %v1406 = vmul.f32 0.5, %v1405
        %v1407 = vsub.f32 1.5, %v1406
        %v1408 = vmul.f32 %v1403, %v1407
        %vm1409 = vweird.f32 %v1399
        %vm1410 = vweird.f32 %v1403
        %vm1411 = vmor %vm1409, %vm1410
        %v1412 = vsel %vm1411, %v1403, %v1408
        %v1413 = vrsqrt.pop %v1400
        %v1414 = vmul.f32 %v1413, %v1400
        %v1415 = vmul.f32 %v1414, %v1413
        %v1416 = vmul.f32 0.5, %v1415
        %v1417 = vsub.f32 1.5, %v1416
        %v1418 = vmul.f32 %v1413, %v1417
        %vm1419 = vweird.f32 %v1400
        %vm1420 = vweird.f32 %v1413
        %vm1421 = vmor %vm1419, %vm1420
        %v1422 = vsel %vm1421, %v1413, %v1418
        %v1423 = vrsqrt.pop %v1401
        %v1424 = vmul.f32 %v1423, %v1401
        %v1425 = vmul.f32 %v1424, %v1423
        %v1426 = vmul.f32 0.5, %v1425
        %v1427 = vsub.f32 1.5, %v1426
        %v1428 = vmul.f32 %v1423, %v1427
        %vm1429 = vweird.f32 %v1401
        %vm1430 = vweird.f32 %v1423
        %vm1431 = vmor %vm1429, %vm1430
        %v1432 = vsel %vm1431, %v1423, %v1428
        %v1433 = vrsqrt.pop %v1402
        %v1434 = vmul.f32 %v1433, %v1402
        %v1435 = vmul.f32 %v1434, %v1433
        %v1436 = vmul.f32 0.5, %v1435
        %v1437 = vsub.f32 1.5, %v1436
        %v1438 = vmul.f32 %v1433, %v1437
        %vm1439 = vweird.f32 %v1402
        %vm1440 = vweird.f32 %v1433
        %vm1441 = vmor %vm1439, %vm1440
        %v1442 = vsel %vm1441, %v1433, %v1438
        %v1443 = vmul.f32 %v1111, %v1412
        %v1444 = vmul.f32 %v1112, %v1422
        %v1445 = vmul.f32 %v1113, %v1432
        %v1446 = vmul.f32 %v1114, %v1442
        %v1447 = vmul.f32 %v1143, %v1412
        %v1448 = vmul.f32 %v1144, %v1422
        %v1449 = vmul.f32 %v1145, %v1432
        %v1450 = vmul.f32 %v1146, %v1442
        %v1451 = vmul.f32 %v1175, %v1412
        %v1452 = vmul.f32 %v1176, %v1422
        %v1453 = vmul.f32 %v1177, %v1432
        %v1454 = vmul.f32 %v1178, %v1442
        %v1455 = vmul.f32 %v1207, %v1412
        %v1456 = vmul.f32 %v1208, %v1422
        %v1457 = vmul.f32 %v1209, %v1432
        %v1458 = vmul.f32 %v1210, %v1442
        %v1459 = vmul.f32 %v1239, %v1412
        %v1460 = vmul.f32 %v1240, %v1422
        %v1461 = vmul.f32 %v1241, %v1432
        %v1462 = vmul.f32 %v1242, %v1442
        %v1463 = vmul.f32 %v1271, %v1412
        %v1464 = vmul.f32 %v1272, %v1422
        %v1465 = vmul.f32 %v1273, %v1432
        %v1466 = vmul.f32 %v1274, %v1442
        %v1467 = vmul.f32 %v1303, %v1412
        %v1468 = vmul.f32 %v1304, %v1422
        %v1469 = vmul.f32 %v1305, %v1432
        %v1470 = vmul.f32 %v1306, %v1442
        %v1471 = vmul.f32 %v1335, %v1412
        %v1472 = vmul.f32 %v1336, %v1422
        %v1473 = vmul.f32 %v1337, %v1432
        %v1474 = vmul.f32 %v1338, %v1442
        %v1475 = vmul.f32 %v205, %v1443
        %v1476 = vmul.f32 %v206, %v1444
        %v1477 = vmul.f32 %v207, %v1445
        %v1478 = vmul.f32 %v208, %v1446
        %v1479 = vmul.f32 %v249, %v1447
        %v1480 = vmul.f32 %v250, %v1448
        %v1481 = vmul.f32 %v251, %v1449
        %v1482 = vmul.f32 %v252, %v1450
        %v1483 = vadd.f32 %v1475, %v1479
        %v1484 = vadd.f32 %v1476, %v1480
        %v1485 = vadd.f32 %v1477, %v1481
        %v1486 = vadd.f32 %v1478, %v1482
        %v1487 = vmul.f32 %v294, %v1451
        %v1488 = vmul.f32 %v295, %v1452
        %v1489 = vmul.f32 %v296, %v1453
        %v1490 = vmul.f32 %v297, %v1454
        %v1491 = vadd.f32 %v1483, %v1487
        %v1492 = vadd.f32 %v1484, %v1488
        %v1493 = vadd.f32 %v1485, %v1489
        %v1494 = vadd.f32 %v1486, %v1490
        %v1495 = vmul.f32 %v339, %v1455
        %v1496 = vmul.f32 %v340, %v1456
        %v1497 = vmul.f32 %v341, %v1457
        %v1498 = vmul.f32 %v342, %v1458
        %v1499 = vadd.f32 %v1491, %v1495
        %v1500 = vadd.f32 %v1492, %v1496
        %v1501 = vadd.f32 %v1493, %v1497
        %v1502 = vadd.f32 %v1494, %v1498
        %v1503 = vmul.f32 %v384, %v1459
        %v1504 = vmul.f32 %v385, %v1460
        %v1505 = vmul.f32 %v386, %v1461
        %v1506 = vmul.f32 %v387, %v1462
        %v1507 = vadd.f32 %v1499, %v1503
        %v1508 = vadd.f32 %v1500, %v1504
        %v1509 = vadd.f32 %v1501, %v1505
        %v1510 = vadd.f32 %v1502, %v1506
        %v1511 = vmul.f32 %v429, %v1463
        %v1512 = vmul.f32 %v430, %v1464
        %v1513 = vmul.f32 %v431, %v1465
        %v1514 = vmul.f32 %v432, %v1466
        %v1515 = vadd.f32 %v1507, %v1511
        %v1516 = vadd.f32 %v1508, %v1512
        %v1517 = vadd.f32 %v1509, %v1513
        %v1518 = vadd.f32 %v1510, %v1514
        %v1519 = vmul.f32 %v474, %v1467
        %v1520 = vmul.f32 %v475, %v1468
        %v1521 = vmul.f32 %v476, %v1469
        %v1522 = vmul.f32 %v477, %v1470
        %v1523 = vadd.f32 %v1515, %v1519
        %v1524 = vadd.f32 %v1516, %v1520
        %v1525 = vadd.f32 %v1517, %v1521
        %v1526 = vadd.f32 %v1518, %v1522
        %v1527 = vmul.f32 %v519, %v1471
        %v1528 = vmul.f32 %v520, %v1472
        %v1529 = vmul.f32 %v521, %v1473
        %v1530 = vmul.f32 %v522, %v1474
        %v1531 = vadd.f32 %v1523, %v1527
        %v1532 = vadd.f32 %v1524, %v1528
        %v1533 = vadd.f32 %v1525, %v1529
        %v1534 = vadd.f32 %v1526, %v1530
        %v1535 = vmax.f32 %v1531, %v1532
        %v1536 = vmax.f32 %v1533, %v1534
        %v1537 = vmax.f32 %v1535, %v1536
        %v1538 = vsub.f32 %v1531, %v1537
        %v1539 = vsub.f32 %v1532, %v1537
        %v1540 = vsub.f32 %v1533, %v1537
        %v1541 = vsub.f32 %v1534, %v1537
        %v1542 = vmul.f32 %v1538, 1.442695
        %v1543 = vpow.pop %v1542
        %v1544 = vmul.f32 %v1539, 1.442695
        %v1545 = vpow.pop %v1544
        %v1546 = vmul.f32 %v1540, 1.442695
        %v1547 = vpow.pop %v1546
        %v1548 = vmul.f32 %v1541, 1.442695
        %v1549 = vpow.pop %v1548
        %v1550 = vadd.f32 %v1543, %v1545
        %v1551 = vadd.f32 %v1550, %v1547
        %v1552 = vadd.f32 %v1551, %v1549
        %v1553 = vrcp.pop %v1552
        %v1554 = vmul.f32 %v1552, %v1553
        %v1555 = vsub.f32 1.0, %v1554
        %v1556 = vmul.f32 %v1553, %v1555
        %v1557 = vadd.f32 %v1553, %v1556
        %vm1558 = vweird.f32 %v1552
        %vm1559 = vweird.f32 %v1553
        %vm1560 = vmor %vm1558, %vm1559
        %v1561 = vsel %vm1560, %v1553, %v1557
        %v1562 = vand.u32 2147483647, %v1552
        %vm1563 = vcmp.eq.f32.partialorder %v1562, 8.507059e+37
        %v1564 = vand.u32 %v1552, 2147483648
        %v1565 = vor.u32 1.1754944e-38, %v1564
        %v1566 = vsel %vm1563, %v1565, %v1561
        %v1567 = vmul.f32 %v1543, %v1566
        %v1568 = vmul.f32 %v1545, %v1566
        %v1569 = vmul.f32 %v1547, %v1566
        %v1570 = vmul.f32 %v1549, %v1566
        %v1571 = vmul.f32 %v210, %v1443
        %v1572 = vmul.f32 %v211, %v1444
        %v1573 = vmul.f32 %v212, %v1445
        %v1574 = vmul.f32 %v213, %v1446
        %v1575 = vmul.f32 %v254, %v1447
        %v1576 = vmul.f32 %v255, %v1448
        %v1577 = vmul.f32 %v256, %v1449
        %v1578 = vmul.f32 %v257, %v1450
        %v1579 = vadd.f32 %v1571, %v1575
        %v1580 = vadd.f32 %v1572, %v1576
        %v1581 = vadd.f32 %v1573, %v1577
        %v1582 = vadd.f32 %v1574, %v1578
        %v1583 = vmul.f32 %v299, %v1451
        %v1584 = vmul.f32 %v300, %v1452
        %v1585 = vmul.f32 %v301, %v1453
        %v1586 = vmul.f32 %v302, %v1454
        %v1587 = vadd.f32 %v1579, %v1583
        %v1588 = vadd.f32 %v1580, %v1584
        %v1589 = vadd.f32 %v1581, %v1585
        %v1590 = vadd.f32 %v1582, %v1586
        %v1591 = vmul.f32 %v344, %v1455
        %v1592 = vmul.f32 %v345, %v1456
        %v1593 = vmul.f32 %v346, %v1457
        %v1594 = vmul.f32 %v347, %v1458
        %v1595 = vadd.f32 %v1587, %v1591
        %v1596 = vadd.f32 %v1588, %v1592
        %v1597 = vadd.f32 %v1589, %v1593
        %v1598 = vadd.f32 %v1590, %v1594
        %v1599 = vmul.f32 %v389, %v1459
        %v1600 = vmul.f32 %v390, %v1460
        %v1601 = vmul.f32 %v391, %v1461
        %v1602 = vmul.f32 %v392, %v1462
        %v1603 = vadd.f32 %v1595, %v1599
        %v1604 = vadd.f32 %v1596, %v1600
        %v1605 = vadd.f32 %v1597, %v1601
        %v1606 = vadd.f32 %v1598, %v1602
        %v1607 = vmul.f32 %v434, %v1463
        %v1608 = vmul.f32 %v435, %v1464
        %v1609 = vmul.f32 %v436, %v1465
        %v1610 = vmul.f32 %v437, %v1466
        %v1611 = vadd.f32 %v1603, %v1607
        %v1612 = vadd.f32 %v1604, %v1608
        %v1613 = vadd.f32 %v1605, %v1609
        %v1614 = vadd.f32 %v1606, %v1610
        %v1615 = vmul.f32 %v479, %v1467
        %v1616 = vmul.f32 %v480, %v1468
        %v1617 = vmul.f32 %v481, %v1469
        %v1618 = vmul.f32 %v482, %v1470
        %v1619 = vadd.f32 %v1611, %v1615
        %v1620 = vadd.f32 %v1612, %v1616
        %v1621 = vadd.f32 %v1613, %v1617
        %v1622 = vadd.f32 %v1614, %v1618
        %v1623 = vmul.f32 %v524, %v1471
        %v1624 = vmul.f32 %v525, %v1472
        %v1625 = vmul.f32 %v526, %v1473
        %v1626 = vmul.f32 %v527, %v1474
        %v1627 = vadd.f32 %v1619, %v1623
        %v1628 = vadd.f32 %v1620, %v1624
        %v1629 = vadd.f32 %v1621, %v1625
        %v1630 = vadd.f32 %v1622, %v1626
        %v1631 = vmax.f32 %v1627, %v1628
        %v1632 = vmax.f32 %v1629, %v1630
        %v1633 = vmax.f32 %v1631, %v1632
        %v1634 = vsub.f32 %v1627, %v1633
        %v1635 = vsub.f32 %v1628, %v1633
        %v1636 = vsub.f32 %v1629, %v1633
        %v1637 = vsub.f32 %v1630, %v1633
        %v1638 = vmul.f32 %v1634, 1.442695
        %v1639 = vpow.pop %v1638
        %v1640 = vmul.f32 %v1635, 1.442695
        %v1641 = vpow.pop %v1640
        %v1642 = vmul.f32 %v1636, 1.442695
        %v1643 = vpow.pop %v1642
        %v1644 = vmul.f32 %v1637, 1.442695
        %v1645 = vpow.pop %v1644
        %v1646 = vadd.f32 %v1639, %v1641
        %v1647 = vadd.f32 %v1646, %v1643
        %v1648 = vadd.f32 %v1647, %v1645
        %v1649 = vrcp.pop %v1648
        %v1650 = vmul.f32 %v1648, %v1649
        %v1651 = vsub.f32 1.0, %v1650
        %v1652 = vmul.f32 %v1649, %v1651
        %v1653 = vadd.f32 %v1649, %v1652
        %vm1654 = vweird.f32 %v1648
        %vm1655 = vweird.f32 %v1649
        %vm1656 = vmor %vm1654, %vm1655
        %v1657 = vsel %vm1656, %v1649, %v1653
        %v1658 = vand.u32 2147483647, %v1648
        %vm1659 = vcmp.eq.f32.partialorder %v1658, 8.507059e+37
        %v1660 = vand.u32 %v1648, 2147483648
        %v1661 = vor.u32 1.1754944e-38, %v1660
        %v1662 = vsel %vm1659, %v1661, %v1657
        %v1663 = vmul.f32 %v1639, %v1662
        %v1664 = vmul.f32 %v1641, %v1662
        %v1665 = vmul.f32 %v1643, %v1662
        %v1666 = vmul.f32 %v1645, %v1662
        %v1667 = vmul.f32 %v219, %v1443
        %v1668 = vmul.f32 %v220, %v1444
        %v1669 = vmul.f32 %v221, %v1445
        %v1670 = vmul.f32 %v222, %v1446
        %v1671 = vmul.f32 %v263, %v1447
        %v1672 = vmul.f32 %v264, %v1448
        %v1673 = vmul.f32 %v265, %v1449
        %v1674 = vmul.f32 %v266, %v1450
        %v1675 = vadd.f32 %v1667, %v1671
        %v1676 = vadd.f32 %v1668, %v1672
        %v1677 = vadd.f32 %v1669, %v1673
        %v1678 = vadd.f32 %v1670, %v1674
        %v1679 = vmul.f32 %v308, %v1451
        %v1680 = vmul.f32 %v309, %v1452
        %v1681 = vmul.f32 %v310, %v1453
        %v1682 = vmul.f32 %v311, %v1454
        %v1683 = vadd.f32 %v1675, %v1679
        %v1684 = vadd.f32 %v1676, %v1680
        %v1685 = vadd.f32 %v1677, %v1681
        %v1686 = vadd.f32 %v1678, %v1682
        %v1687 = vmul.f32 %v353, %v1455
        %v1688 = vmul.f32 %v354, %v1456
        %v1689 = vmul.f32 %v355, %v1457
        %v1690 = vmul.f32 %v356, %v1458
        %v1691 = vadd.f32 %v1683, %v1687
        %v1692 = vadd.f32 %v1684, %v1688
        %v1693 = vadd.f32 %v1685, %v1689
        %v1694 = vadd.f32 %v1686, %v1690
        %v1695 = vmul.f32 %v398, %v1459
        %v1696 = vmul.f32 %v399, %v1460
        %v1697 = vmul.f32 %v400, %v1461
        %v1698 = vmul.f32 %v401, %v1462
        %v1699 = vadd.f32 %v1691, %v1695
        %v1700 = vadd.f32 %v1692, %v1696
        %v1701 = vadd.f32 %v1693, %v1697
        %v1702 = vadd.f32 %v1694, %v1698
        %v1703 = vmul.f32 %v443, %v1463
        %v1704 = vmul.f32 %v444, %v1464
        %v1705 = vmul.f32 %v445, %v1465
        %v1706 = vmul.f32 %v446, %v1466
        %v1707 = vadd.f32 %v1699, %v1703
        %v1708 = vadd.f32 %v1700, %v1704
        %v1709 = vadd.f32 %v1701, %v1705
        %v1710 = vadd.f32 %v1702, %v1706
        %v1711 = vmul.f32 %v488, %v1467
        %v1712 = vmul.f32 %v489, %v1468
        %v1713 = vmul.f32 %v490, %v1469
        %v1714 = vmul.f32 %v491, %v1470
        %v1715 = vadd.f32 %v1707, %v1711
        %v1716 = vadd.f32 %v1708, %v1712
        %v1717 = vadd.f32 %v1709, %v1713
        %v1718 = vadd.f32 %v1710, %v1714
        %v1719 = vmul.f32 %v533, %v1471
        %v1720 = vmul.f32 %v534, %v1472
        %v1721 = vmul.f32 %v535, %v1473
        %v1722 = vmul.f32 %v536, %v1474
        %v1723 = vadd.f32 %v1715, %v1719
        %v1724 = vadd.f32 %v1716, %v1720
        %v1725 = vadd.f32 %v1717, %v1721
        %v1726 = vadd.f32 %v1718, %v1722
        %v1727 = vmax.f32 %v1723, %v1724
        %v1728 = vmax.f32 %v1725, %v1726
        %v1729 = vmax.f32 %v1727, %v1728
        %v1730 = vsub.f32 %v1723, %v1729
        %v1731 = vsub.f32 %v1724, %v1729
        %v1732 = vsub.f32 %v1725, %v1729
        %v1733 = vsub.f32 %v1726, %v1729
        %v1734 = vmul.f32 %v1730, 1.442695
        %v1735 = vpow.pop %v1734
        %v1736 = vmul.f32 %v1731, 1.442695
        %v1737 = vpow.pop %v1736
        %v1738 = vmul.f32 %v1732, 1.442695
        %v1739 = vpow.pop %v1738
        %v1740 = vmul.f32 %v1733, 1.442695
        %v1741 = vpow.pop %v1740
        %v1742 = vadd.f32 %v1735, %v1737
        %v1743 = vadd.f32 %v1742, %v1739
        %v1744 = vadd.f32 %v1743, %v1741
        %v1745 = vrcp.pop %v1744
        %v1746 = vmul.f32 %v1744, %v1745
        %v1747 = vsub.f32 1.0, %v1746
        %v1748 = vmul.f32 %v1745, %v1747
        %v1749 = vadd.f32 %v1745, %v1748
        %vm1750 = vweird.f32 %v1744
        %vm1751 = vweird.f32 %v1745
        %vm1752 = vmor %vm1750, %vm1751
        %v1753 = vsel %vm1752, %v1745, %v1749
        %v1754 = vand.u32 2147483647, %v1744
        %vm1755 = vcmp.eq.f32.partialorder %v1754, 8.507059e+37
        %v1756 = vand.u32 %v1744, 2147483648
        %v1757 = vor.u32 1.1754944e-38, %v1756
        %v1758 = vsel %vm1755, %v1757, %v1753
        %v1759 = vmul.f32 %v1735, %v1758
        %v1760 = vmul.f32 %v1737, %v1758
        %v1761 = vmul.f32 %v1739, %v1758
        %v1762 = vmul.f32 %v1741, %v1758
        %v1763 = vmul.f32 %v228, %v1443
        %v1764 = vmul.f32 %v229, %v1444
        %v1765 = vmul.f32 %v230, %v1445
        %v1766 = vmul.f32 %v231, %v1446
        %v1767 = vmul.f32 %v272, %v1447
        %v1768 = vmul.f32 %v273, %v1448
        %v1769 = vmul.f32 %v274, %v1449
        %v1770 = vmul.f32 %v275, %v1450
        %v1771 = vadd.f32 %v1763, %v1767
        %v1772 = vadd.f32 %v1764, %v1768
        %v1773 = vadd.f32 %v1765, %v1769
        %v1774 = vadd.f32 %v1766, %v1770
        %v1775 = vmul.f32 %v317, %v1451
        %v1776 = vmul.f32 %v318, %v1452
        %v1777 = vmul.f32 %v319, %v1453
        %v1778 = vmul.f32 %v320, %v1454
        %v1779 = vadd.f32 %v1771, %v1775
        %v1780 = vadd.f32 %v1772, %v1776
        %v1781 = vadd.f32 %v1773, %v1777
        %v1782 = vadd.f32 %v1774, %v1778
        %v1783 = vmul.f32 %v362, %v1455
        %v1784 = vmul.f32 %v363, %v1456
        %v1785 = vmul.f32 %v364, %v1457
        %v1786 = vmul.f32 %v365, %v1458
        %v1787 = vadd.f32 %v1779, %v1783
        %v1788 = vadd.f32 %v1780, %v1784
        %v1789 = vadd.f32 %v1781, %v1785
        %v1790 = vadd.f32 %v1782, %v1786
        %v1791 = vmul.f32 %v407, %v1459
        %v1792 = vmul.f32 %v408, %v1460
        %v1793 = vmul.f32 %v409, %v1461
        %v1794 = vmul.f32 %v410, %v1462
        %v1795 = vadd.f32 %v1787, %v1791
        %v1796 = vadd.f32 %v1788, %v1792
        %v1797 = vadd.f32 %v1789, %v1793
        %v1798 = vadd.f32 %v1790, %v1794
        %v1799 = vmul.f32 %v452, %v1463
        %v1800 = vmul.f32 %v453, %v1464
        %v1801 = vmul.f32 %v454, %v1465
        %v1802 = vmul.f32 %v455, %v1466
        %v1803 = vadd.f32 %v1795, %v1799
        %v1804 = vadd.f32 %v1796, %v1800
        %v1805 = vadd.f32 %v1797, %v1801
        %v1806 = vadd.f32 %v1798, %v1802
        %v1807 = vmul.f32 %v497, %v1467
        %v1808 = vmul.f32 %v498, %v1468
        %v1809 = vmul.f32 %v499, %v1469
        %v1810 = vmul.f32 %v500, %v1470
        %v1811 = vadd.f32 %v1803, %v1807
        %v1812 = vadd.f32 %v1804, %v1808
        %v1813 = vadd.f32 %v1805, %v1809
        %v1814 = vadd.f32 %v1806, %v1810
        %v1815 = vmul.f32 %v542, %v1471
        %v1816 = vmul.f32 %v543, %v1472
        %v1817 = vmul.f32 %v544, %v1473
        %v1818 = vmul.f32 %v545, %v1474
        %v1819 = vadd.f32 %v1811, %v1815
        %v1820 = vadd.f32 %v1812, %v1816
        %v1821 = vadd.f32 %v1813, %v1817
        %v1822 = vadd.f32 %v1814, %v1818
        %v1823 = vmax.f32 %v1819, %v1820
        %v1824 = vmax.f32 %v1821, %v1822
        %v1825 = vmax.f32 %v1823, %v1824
        %v1826 = vsub.f32 %v1819, %v1825
        %v1827 = vsub.f32 %v1820, %v1825
        %v1828 = vsub.f32 %v1821, %v1825
        %v1829 = vsub.f32 %v1822, %v1825
        %v1830 = vmul.f32 %v1826, 1.442695
        %v1831 = vpow.pop %v1830
        %v1832 = vmul.f32 %v1827, 1.442695
        %v1833 = vpow.pop %v1832
        %v1834 = vmul.f32 %v1828, 1.442695
        %v1835 = vpow.pop %v1834
        %v1836 = vmul.f32 %v1829, 1.442695
        %v1837 = vpow.pop %v1836
        %v1838 = vadd.f32 %v1831, %v1833
        %v1839 = vadd.f32 %v1838, %v1835
        %v1840 = vadd.f32 %v1839, %v1837
        %v1841 = vrcp.pop %v1840
        %v1842 = vmul.f32 %v1840, %v1841
        %v1843 = vsub.f32 1.0, %v1842
        %v1844 = vmul.f32 %v1841, %v1843
        %v1845 = vadd.f32 %v1841, %v1844
        %vm1846 = vweird.f32 %v1840
        %vm1847 = vweird.f32 %v1841
        %vm1848 = vmor %vm1846, %vm1847
        %v1849 = vsel %vm1848, %v1841, %v1845
        %v1850 = vand.u32 2147483647, %v1840
        %vm1851 = vcmp.eq.f32.partialorder %v1850, 8.507059e+37
        %v1852 = vand.u32 %v1840, 2147483648
        %v1853 = vor.u32 1.1754944e-38, %v1852
        %v1854 = vsel %vm1851, %v1853, %v1849
        %v1855 = vmul.f32 %v1831, %v1854
        %v1856 = vmul.f32 %v1833, %v1854
        %v1857 = vmul.f32 %v1835, %v1854
        %v1858 = vmul.f32 %v1837, %v1854
        %v1859 = vmul.f32 %v205, %v1567
        %v1860 = vmul.f32 %v206, %v1568
        %v1861 = vmul.f32 %v207, %v1569
        %v1862 = vmul.f32 %v208, %v1570
        %v1863 = vadd.f32 %v240, %v1859
        %v1864 = vadd.f32 %v241, %v1860
        %v1865 = vadd.f32 %v242, %v1861
        %v1866 = vadd.f32 %v243, %v1862
        %v1867 = vmul.f32 %v210, %v1663
        %v1868 = vmul.f32 %v211, %v1664
        %v1869 = vmul.f32 %v212, %v1665
        %v1870 = vmul.f32 %v213, %v1666
        %v1871 = vadd.f32 %v1863, %v1867
        %v1872 = vadd.f32 %v1864, %v1868
        %v1873 = vadd.f32 %v1865, %v1869
        %v1874 = vadd.f32 %v1866, %v1870
        %v1875 = vmul.f32 %v219, %v1759
        %v1876 = vmul.f32 %v220, %v1760
        %v1877 = vmul.f32 %v221, %v1761
        %v1878 = vmul.f32 %v222, %v1762
        %v1879 = vadd.f32 %v1871, %v1875
        %v1880 = vadd.f32 %v1872, %v1876
        %v1881 = vadd.f32 %v1873, %v1877
        %v1882 = vadd.f32 %v1874, %v1878
        %v1883 = vmul.f32 %v228, %v1855
        %v1884 = vmul.f32 %v229, %v1856
        %v1885 = vmul.f32 %v230, %v1857
        %v1886 = vmul.f32 %v231, %v1858
        %v1887 = vadd.f32 %v1879, %v1883
        %v1888 = vadd.f32 %v1880, %v1884
        %v1889 = vadd.f32 %v1881, %v1885
        %v1890 = vadd.f32 %v1882, %v1886
        %v1891 = vmul.f32 %v249, %v1567
        %v1892 = vmul.f32 %v250, %v1568
        %v1893 = vmul.f32 %v251, %v1569
        %v1894 = vmul.f32 %v252, %v1570
        %v1895 = vadd.f32 %v285, %v1891
        %v1896 = vadd.f32 %v286, %v1892
        %v1897 = vadd.f32 %v287, %v1893
        %v1898 = vadd.f32 %v288, %v1894
        %v1899 = vmul.f32 %v254, %v1663
        %v1900 = vmul.f32 %v255, %v1664
        %v1901 = vmul.f32 %v256, %v1665
        %v1902 = vmul.f32 %v257, %v1666
        %v1903 = vadd.f32 %v1895, %v1899
        %v1904 = vadd.f32 %v1896, %v1900
        %v1905 = vadd.f32 %v1897, %v1901
        %v1906 = vadd.f32 %v1898, %v1902
        %v1907 = vmul.f32 %v263, %v1759
        %v1908 = vmul.f32 %v264, %v1760
        %v1909 = vmul.f32 %v265, %v1761
        %v1910 = vmul.f32 %v266, %v1762
        %v1911 = vadd.f32 %v1903, %v1907
        %v1912 = vadd.f32 %v1904, %v1908
        %v1913 = vadd.f32 %v1905, %v1909
        %v1914 = vadd.f32 %v1906, %v1910
        %v1915 = vmul.f32 %v272, %v1855
        %v1916 = vmul.f32 %v273, %v1856
        %v1917 = vmul.f32 %v274, %v1857
        %v1918 = vmul.f32 %v275, %v1858
        %v1919 = vadd.f32 %v1911, %v1915
        %v1920 = vadd.f32 %v1912, %v1916
        %v1921 = vadd.f32 %v1913, %v1917
        %v1922 = vadd.f32 %v1914, %v1918
        %v1923 = vmul.f32 %v294, %v1567
        %v1924 = vmul.f32 %v295, %v1568
        %v1925 = vmul.f32 %v296, %v1569
        %v1926 = vmul.f32 %v297, %v1570
        %v1927 = vadd.f32 %v330, %v1923
        %v1928 = vadd.f32 %v331, %v1924
        %v1929 = vadd.f32 %v332, %v1925
        %v1930 = vadd.f32 %v333, %v1926
        %v1931 = vmul.f32 %v299, %v1663
        %v1932 = vmul.f32 %v300, %v1664
        %v1933 = vmul.f32 %v301, %v1665
        %v1934 = vmul.f32 %v302, %v1666
        %v1935 = vadd.f32 %v1927, %v1931
        %v1936 = vadd.f32 %v1928, %v1932
        %v1937 = vadd.f32 %v1929, %v1933
        %v1938 = vadd.f32 %v1930, %v1934
        %v1939 = vmul.f32 %v308, %v1759
        %v1940 = vmul.f32 %v309, %v1760
        %v1941 = vmul.f32 %v310, %v1761
        %v1942 = vmul.f32 %v311, %v1762
        %v1943 = vadd.f32 %v1935, %v1939
        %v1944 = vadd.f32 %v1936, %v1940
        %v1945 = vadd.f32 %v1937, %v1941
        %v1946 = vadd.f32 %v1938, %v1942
        %v1947 = vmul.f32 %v317, %v1855
        %v1948 = vmul.f32 %v318, %v1856
        %v1949 = vmul.f32 %v319, %v1857
        %v1950 = vmul.f32 %v320, %v1858
        %v1951 = vadd.f32 %v1943, %v1947
        %v1952 = vadd.f32 %v1944, %v1948
        %v1953 = vadd.f32 %v1945, %v1949
        %v1954 = vadd.f32 %v1946, %v1950
        %v1955 = vmul.f32 %v339, %v1567
        %v1956 = vmul.f32 %v340, %v1568
        %v1957 = vmul.f32 %v341, %v1569
        %v1958 = vmul.f32 %v342, %v1570
        %v1959 = vadd.f32 %v375, %v1955
        %v1960 = vadd.f32 %v376, %v1956
        %v1961 = vadd.f32 %v377, %v1957
        %v1962 = vadd.f32 %v378, %v1958
        %v1963 = vmul.f32 %v344, %v1663
        %v1964 = vmul.f32 %v345, %v1664
        %v1965 = vmul.f32 %v346, %v1665
        %v1966 = vmul.f32 %v347, %v1666
        %v1967 = vadd.f32 %v1959, %v1963
        %v1968 = vadd.f32 %v1960, %v1964
        %v1969 = vadd.f32 %v1961, %v1965
        %v1970 = vadd.f32 %v1962, %v1966
        %v1971 = vmul.f32 %v353, %v1759
        %v1972 = vmul.f32 %v354, %v1760
        %v1973 = vmul.f32 %v355, %v1761
        %v1974 = vmul.f32 %v356, %v1762
        %v1975 = vadd.f32 %v1967, %v1971
        %v1976 = vadd.f32 %v1968, %v1972
        %v1977 = vadd.f32 %v1969, %v1973
        %v1978 = vadd.f32 %v1970, %v1974
        %v1979 = vmul.f32 %v362, %v1855
        %v1980 = vmul.f32 %v363, %v1856
        %v1981 = vmul.f32 %v364, %v1857
        %v1982 = vmul.f32 %v365, %v1858
        %v1983 = vadd.f32 %v1975, %v1979
        %v1984 = vadd.f32 %v1976, %v1980
        %v1985 = vadd.f32 %v1977, %v1981
        %v1986 = vadd.f32 %v1978, %v1982
        %v1987 = vmul.f32 %v384, %v1567
        %v1988 = vmul.f32 %v385, %v1568
        %v1989 = vmul.f32 %v386, %v1569
        %v1990 = vmul.f32 %v387, %v1570
        %v1991 = vadd.f32 %v420, %v1987
        %v1992 = vadd.f32 %v421, %v1988
        %v1993 = vadd.f32 %v422, %v1989
        %v1994 = vadd.f32 %v423, %v1990
        %v1995 = vmul.f32 %v389, %v1663
        %v1996 = vmul.f32 %v390, %v1664
        %v1997 = vmul.f32 %v391, %v1665
        %v1998 = vmul.f32 %v392, %v1666
        %v1999 = vadd.f32 %v1991, %v1995
        %v2000 = vadd.f32 %v1992, %v1996
        %v2001 = vadd.f32 %v1993, %v1997
        %v2002 = vadd.f32 %v1994, %v1998
        %v2003 = vmul.f32 %v398, %v1759
        %v2004 = vmul.f32 %v399, %v1760
        %v2005 = vmul.f32 %v400, %v1761
        %v2006 = vmul.f32 %v401, %v1762
        %v2007 = vadd.f32 %v1999, %v2003
        %v2008 = vadd.f32 %v2000, %v2004
        %v2009 = vadd.f32 %v2001, %v2005
        %v2010 = vadd.f32 %v2002, %v2006
        %v2011 = vmul.f32 %v407, %v1855
        %v2012 = vmul.f32 %v408, %v1856
        %v2013 = vmul.f32 %v409, %v1857
        %v2014 = vmul.f32 %v410, %v1858
        %v2015 = vadd.f32 %v2007, %v2011
        %v2016 = vadd.f32 %v2008, %v2012
        %v2017 = vadd.f32 %v2009, %v2013
        %v2018 = vadd.f32 %v2010, %v2014
        %v2019 = vmul.f32 %v429, %v1567
        %v2020 = vmul.f32 %v430, %v1568
        %v2021 = vmul.f32 %v431, %v1569
        %v2022 = vmul.f32 %v432, %v1570
        %v2023 = vadd.f32 %v465, %v2019
        %v2024 = vadd.f32 %v466, %v2020
        %v2025 = vadd.f32 %v467, %v2021
        %v2026 = vadd.f32 %v468, %v2022
        %v2027 = vmul.f32 %v434, %v1663
        %v2028 = vmul.f32 %v435, %v1664
        %v2029 = vmul.f32 %v436, %v1665
        %v2030 = vmul.f32 %v437, %v1666
        %v2031 = vadd.f32 %v2023, %v2027
        %v2032 = vadd.f32 %v2024, %v2028
        %v2033 = vadd.f32 %v2025, %v2029
        %v2034 = vadd.f32 %v2026, %v2030
        %v2035 = vmul.f32 %v443, %v1759
        %v2036 = vmul.f32 %v444, %v1760
        %v2037 = vmul.f32 %v445, %v1761
        %v2038 = vmul.f32 %v446, %v1762
        %v2039 = vadd.f32 %v2031, %v2035
        %v2040 = vadd.f32 %v2032, %v2036
        %v2041 = vadd.f32 %v2033, %v2037
        %v2042 = vadd.f32 %v2034, %v2038
        %v2043 = vmul.f32 %v452, %v1855
        %v2044 = vmul.f32 %v453, %v1856
        %v2045 = vmul.f32 %v454, %v1857
        %v2046 = vmul.f32 %v455, %v1858
        %v2047 = vadd.f32 %v2039, %v2043
        %v2048 = vadd.f32 %v2040, %v2044
        %v2049 = vadd.f32 %v2041, %v2045
        %v2050 = vadd.f32 %v2042, %v2046
        %v2051 = vmul.f32 %v474, %v1567
        %v2052 = vmul.f32 %v475, %v1568
        %v2053 = vmul.f32 %v476, %v1569
        %v2054 = vmul.f32 %v477, %v1570
        %v2055 = vadd.f32 %v510, %v2051
        %v2056 = vadd.f32 %v511, %v2052
        %v2057 = vadd.f32 %v512, %v2053
        %v2058 = vadd.f32 %v513, %v2054
        %v2059 = vmul.f32 %v479, %v1663
        %v2060 = vmul.f32 %v480, %v1664
        %v2061 = vmul.f32 %v481, %v1665
        %v2062 = vmul.f32 %v482, %v1666
        %v2063 = vadd.f32 %v2055, %v2059
        %v2064 = vadd.f32 %v2056, %v2060
        %v2065 = vadd.f32 %v2057, %v2061
        %v2066 = vadd.f32 %v2058, %v2062
        %v2067 = vmul.f32 %v488, %v1759
        %v2068 = vmul.f32 %v489, %v1760
        %v2069 = vmul.f32 %v490, %v1761
        %v2070 = vmul.f32 %v491, %v1762
        %v2071 = vadd.f32 %v2063, %v2067
        %v2072 = vadd.f32 %v2064, %v2068
        %v2073 = vadd.f32 %v2065, %v2069
        %v2074 = vadd.f32 %v2066, %v2070
        %v2075 = vmul.f32 %v497, %v1855
        %v2076 = vmul.f32 %v498, %v1856
        %v2077 = vmul.f32 %v499, %v1857
        %v2078 = vmul.f32 %v500, %v1858
        %v2079 = vadd.f32 %v2071, %v2075
        %v2080 = vadd.f32 %v2072, %v2076
        %v2081 = vadd.f32 %v2073, %v2077
        %v2082 = vadd.f32 %v2074, %v2078
        %v2083 = vmul.f32 %v519, %v1567
        %v2084 = vmul.f32 %v520, %v1568
        %v2085 = vmul.f32 %v521, %v1569
        %v2086 = vmul.f32 %v522, %v1570
        %v2087 = vadd.f32 %v555, %v2083
        %v2088 = vadd.f32 %v556, %v2084
        %v2089 = vadd.f32 %v557, %v2085
        %v2090 = vadd.f32 %v558, %v2086
        %v2091 = vmul.f32 %v524, %v1663
        %v2092 = vmul.f32 %v525, %v1664
        %v2093 = vmul.f32 %v526, %v1665
        %v2094 = vmul.f32 %v527, %v1666
        %v2095 = vadd.f32 %v2087, %v2091
        %v2096 = vadd.f32 %v2088, %v2092
        %v2097 = vadd.f32 %v2089, %v2093
        %v2098 = vadd.f32 %v2090, %v2094
        %v2099 = vmul.f32 %v533, %v1759
        %v2100 = vmul.f32 %v534, %v1760
        %v2101 = vmul.f32 %v535, %v1761
        %v2102 = vmul.f32 %v536, %v1762
        %v2103 = vadd.f32 %v2095, %v2099
        %v2104 = vadd.f32 %v2096, %v2100
        %v2105 = vadd.f32 %v2097, %v2101
        %v2106 = vadd.f32 %v2098, %v2102
        %v2107 = vmul.f32 %v542, %v1855
        %v2108 = vmul.f32 %v543, %v1856
        %v2109 = vmul.f32 %v544, %v1857
        %v2110 = vmul.f32 %v545, %v1858
        %v2111 = vadd.f32 %v2103, %v2107
        %v2112 = vadd.f32 %v2104, %v2108
        %v2113 = vadd.f32 %v2105, %v2109
        %v2114 = vadd.f32 %v2106, %v2110
        %2115 = vst [vmem:[%s204] sm:$0xff] %v1887
        %2116 = vst [vmem:[%s204 + $0x8] sm:$0xff] %v1888
        %2117 = vst [vmem:[%s204 + $0x10] sm:$0xff] %v1889
        %2118 = vst [vmem:[%s204 + $0x18] sm:$0xff] %v1890
        %s2119 = scalar_lea.vmem %s204, 32 [#allocation7]
        %2120 = vst [vmem:[%s2119] sm:$0xff] %v1919
        %2121 = vst [vmem:[%s2119 + $0x8] sm:$0xff] %v1920
        %2122 = vst [vmem:[%s2119 + $0x10] sm:$0xff] %v1921
        %2123 = vst [vmem:[%s2119 + $0x18] sm:$0xff] %v1922
        %s2124 = scalar_lea.vmem %s204, 64 [#allocation7]
        %2125 = vst [vmem:[%s2124] sm:$0xff] %v1951
        %2126 = vst [vmem:[%s2124 + $0x8] sm:$0xff] %v1952
        %2127 = vst [vmem:[%s2124 + $0x10] sm:$0xff] %v1953
        %2128 = vst [vmem:[%s2124 + $0x18] sm:$0xff] %v1954
        %s2129 = scalar_lea.vmem %s204, 96 [#allocation7]
        %2130 = vst [vmem:[%s2129] sm:$0xff] %v1983
        %2131 = vst [vmem:[%s2129 + $0x8] sm:$0xff] %v1984
        %2132 = vst [vmem:[%s2129 + $0x10] sm:$0xff] %v1985
        %2133 = vst [vmem:[%s2129 + $0x18] sm:$0xff] %v1986
        %s2134 = scalar_lea.vmem %s204, 128 [#allocation7]
        %2135 = vst [vmem:[%s2134] sm:$0xff] %v2015
        %2136 = vst [vmem:[%s2134 + $0x8] sm:$0xff] %v2016
        %2137 = vst [vmem:[%s2134 + $0x10] sm:$0xff] %v2017
        %2138 = vst [vmem:[%s2134 + $0x18] sm:$0xff] %v2018
        %s2139 = scalar_lea.vmem %s204, 160 [#allocation7]
        %2140 = vst [vmem:[%s2139] sm:$0xff] %v2047
        %2141 = vst [vmem:[%s2139 + $0x8] sm:$0xff] %v2048
        %2142 = vst [vmem:[%s2139 + $0x10] sm:$0xff] %v2049
        %2143 = vst [vmem:[%s2139 + $0x18] sm:$0xff] %v2050
        %s2144 = scalar_lea.vmem %s204, 192 [#allocation7]
        %2145 = vst [vmem:[%s2144] sm:$0xff] %v2079
        %2146 = vst [vmem:[%s2144 + $0x8] sm:$0xff] %v2080
        %2147 = vst [vmem:[%s2144 + $0x10] sm:$0xff] %v2081
        %2148 = vst [vmem:[%s2144 + $0x18] sm:$0xff] %v2082
        %s2149 = scalar_lea.vmem %s204, 224 [#allocation7]
        %2150 = vst [vmem:[%s2149] sm:$0xff] %v2111
        %2151 = vst [vmem:[%s2149 + $0x8] sm:$0xff] %v2112
        %2152 = vst [vmem:[%s2149 + $0x10] sm:$0xff] %v2113
        %2153 = vst [vmem:[%s2149 + $0x18] sm:$0xff] %v2114
        %s2154 = sand.u32 %s82, 1
        %s2155 = scalar_lea.sflag [#allocation4], %s2154
        %s2156 = sand.u32 %s82, 1
        %s2157 = smul.addr %s2156, 256
        %s2158 = scalar_lea.vmem [#allocation7], %s2157
        // Predicated region
        $region37: #{tpu_custom_call.1} parent=27 // pred_check
          %p2159 = pneg %p92
        $region38: #{tpu_custom_call.1} parent=27 // pred_check_branch
          %2161 = sbr.rel (%p2159) target = $region40
        $region39: #{tpu_custom_call.1} parent=27 // pred_region
          %2163 = vsyncadd %s2155, 0
          %s2164 = smul.addr %s22, 32
          %s2165 = smul.addr %s2164, 8
          %s2166 = scalar_lea.hbm %s2, %s2165
          %s2167 = sshll.u32 %s2158, 4
          %s2168 = int_to_ptr.vmem [resolvable:$true] %s2167
          %s2169 = sshll.u32 %s2166, 4
          %s2170 = int_to_ptr.hbm [resolvable:$true] %s2169
          %2175 = dma.vmem_to_hbm [thread:$0]  %s2168, 4096, %s2170, %s2155, 128, 128, 8
        $region40: #{tpu_custom_call.1} parent=27 // pred_fallthru
          _
      $region28: #{tpu_custom_call.1} parent=5 // pred_fallthru
        _
      %p2176 = scmp.le.s32.totalorder 2, %s17
      // Predicated region
      $region41: #{tpu_custom_call.1} parent=5 // pred_check
        %p2177 = pneg %p2176
      $region42: #{tpu_custom_call.1} parent=5 // pred_check_branch
        %2179 = sbr.rel (%p2177) target = $region44
      $region43: #{tpu_custom_call.1} parent=5 // pred_region
        %s2180 = ssub.s32 %s17, 2
        // Predicated region
        $region45: #{tpu_custom_call.1} parent=43 // pred_check
          %p2181 = pneg %p98
        $region46: #{tpu_custom_call.1} parent=43 // pred_check_branch
          %2183 = sbr.rel (%p2181) target = $region48
        $region47: #{tpu_custom_call.1} parent=43 // pred_region
          %s2184 = sand.u32 %s83, 1
          %s2185 = scalar_lea.sflag [#allocation4], %s2184
          %s2186 = sand.u32 %s83, 1
          %s2187 = smul.addr %s2186, 256
          %s2188 = scalar_lea.vmem [#allocation7], %s2187
          %2190 = dma.done %s2185, 4096
        $region48: #{tpu_custom_call.1} parent=43 // pred_fallthru
          _
      $region44: #{tpu_custom_call.1} parent=5 // pred_fallthru
        _
    $region6: #{tpu_custom_call.1} parent=1 // loop_footer
      %s21 = sadd.s32 1, %s17
    $region7: #{tpu_custom_call.1} parent=1 // loop_footer_branch
      %16 = sbr.rel target = $region3
    $region8: #{tpu_custom_call.1} parent=1 // loop_exit
      _
    %2191 = vsyncpa [#allocation3], 1
    %s2192 = scalar_lea.sflag [#allocation3], 1
    %2193 = vsyncpa %s2192, 1
    %2194 = vsyncpa [#allocation6], 1
    %s2195 = scalar_lea.sflag [#allocation6], 1
    %2196 = vsyncpa %s2195, 1
    %2197 = vsyncpa [#allocation4], 1
    %s2198 = scalar_lea.sflag [#allocation4], 1
    %2199 = vsyncpa %s2198, 1

</llo_original>
